<compile_context>
chip_gen: v7x
topology: tpu7x:2x2x1
jax: 0.10.0
libtpu: 0.0.40
codegen_flags: <defaults>
</compile_context>

<pallas_src>
import functools
import math

import jax
import jax.numpy as jnp
from jax.experimental import pallas as pl
from jax.experimental.pallas import tpu as pltpu

# ----------------------------- configuration --------------------------------
BATCH = 2
SEQ_LEN = 32                   # 6 * BATCH * SEQ_LEN = 384 -> lane axis is 128-aligned
NUM_INPUTS = 4
NUM_CHANNELS = [8, 8]          # TCN channel sizes; C = NUM_CHANNELS[-1]
NUM_STATIC = 4
HIDDEN = 32                    # mlp_hidden_dim (down from 256)
QUEUE_K = 128                  # queue length (down from 24576, forward-unused)
KERNEL_SIZE = 2
DILATION_FACTOR = 2
BN_EVAL_SCALE = 1.0 / math.sqrt(1.0 + 1e-5)   # eval-mode BatchNorm1d, init stats


# --------------------------- packed-weight layout ----------------------------
def _build_pack_layout():
    """Row offsets of every weight inside the single packed f32 buffer."""
    layout = {}
    state = {"off": 0, "cols": 1}

    def add(name, rows, cols):
        layout[name] = (state["off"], (rows, cols))
        state["off"] += ((rows + 7) // 8) * 8          # 8-row (sublane) aligned
        state["cols"] = max(state["cols"], cols)

    K = KERNEL_SIZE
    in_ch = NUM_INPUTS
    for i, out_ch in enumerate(NUM_CHANNELS):
        use_down = (in_ch != out_ch) or (i == 0)
        add(f"blk{i}_w1cat", (K + (1 if use_down else 0)) * out_ch, in_ch)
        add(f"blk{i}_b1", out_ch, 1)
        add(f"blk{i}_w2cat", K * out_ch, out_ch)
        add(f"blk{i}_b2", out_ch, 1)
        if use_down:
            add(f"blk{i}_bd", out_ch, 1)
        in_ch = out_ch

    C = NUM_CHANNELS[-1]
    add("proj_w1", C, HIDDEN); add("proj_b1", 1, HIDDEN)
    add("proj_w2", HIDDEN, C); add("proj_b2", 1, C)
    add("disc_w1", C, HIDDEN); add("disc_b1", 1, HIDDEN)
    add("disc_w2", HIDDEN, HIDDEN); add("disc_b2", 1, HIDDEN)
    add("disc_w3", HIDDEN, 1); add("disc_b3", 1, 1)
    D = C + NUM_STATIC
    add("svdd_w1q", C, HIDDEN); add("svdd_w1s", NUM_STATIC, HIDDEN)
    add("svdd_b1", 1, HIDDEN)
    add("svdd_w2", HIDDEN, D); add("svdd_b2", 1, D)
    add("svdd_center", 1, D)
    return layout, state["off"], state["cols"]


PACK_LAYOUT, PACK_ROWS, PACK_COLS = _build_pack_layout()


def _full_spec(arr):
    """Whole-array BlockSpec for a grid=(1,) pallas_call."""
    nd = arr.ndim
    return pl.BlockSpec(arr.shape, lambda i, _nd=nd: (0,) * _nd)


# ------------------------------- Pallas kernel -------------------------------
def _dacad_fused_kernel(seq0_ref, seq1_ref, seq2_ref, seq3_ref, seq4_ref,
                        seq5_ref, static_ref, w_ref,
                        q_ref, p_ref, dom_ref, dist_ref,
                        *, layout, num_channels, num_inputs, kernel_size,
                        dilation_factor, batch, seq_len, use_roll):
    f32 = jnp.float32
    stream_refs = (seq0_ref, seq1_ref, seq2_ref, seq3_ref, seq4_ref, seq5_ref)
    n_seq = len(stream_refs) * batch
    R = n_seq * seq_len

    def W(name):
        off, (r, c) = layout[name]
        return w_ref[off:off + r, 0:c]              # static sub-view loads

    # -- gather the 6 streams into one (R, Cin) slab, rows = [stream, batch, t]
    x_rc = jnp.concatenate(
        [r[...].reshape(batch * seq_len, num_inputs) for r in stream_refs],
        axis=0).astype(f32)

    # per-column timestep index (time lives on lanes for all activations)
    t_lane = jax.lax.broadcasted_iota(jnp.int32, (1, R), 1) % seq_len

    def shift_time(a, s):
        # a: (rows, R); a'[., r] = a[., r - s], zeroing the first s timesteps
        # of every sequence (causal left-pad + chomp).
        if s == 0:
            return a
        if use_roll:
            rolled = pltpu.roll(a, s, axis=1)       # XLU lane rotation
        else:
            rolled = jnp.concatenate([a[:, R - s:], a[:, :R - s]], axis=1)
        return jnp.where(t_lane >= s, rolled, 0.0)

    def causal_conv(inp, wname, out_ch, dilation, inp_transposed):
        # One MXU matmul computes every tap (plus the 1x1 downsample for the
        # first block) stacked along output rows; taps are time-aligned with
        # cheap lane shifts afterwards (matmul and time-shift commute).
        wcat = W(wname)
        if inp_transposed:                          # inp: (R, Cin)
            cat = jax.lax.dot_general(wcat, inp, (((1,), (1,)), ((), ())),
                                      preferred_element_type=f32)
        else:                                       # inp: (Cin, R)
            cat = jnp.dot(wcat, inp, preferred_element_type=f32)
        acc = cat[0:out_ch, :]
        for j in range(1, kernel_size):
            acc = acc + shift_time(cat[j * out_ch:(j + 1) * out_ch, :],
                                   j * dilation)
        return acc, cat

    # ---------------- TCN encoder (channels-on-sublanes layout) --------------
    inp = x_rc
    inp_transposed = True
    in_ch = num_inputs
    for i, out_ch in enumerate(num_channels):
        d = dilation_factor ** i
        use_down = (in_ch != out_ch) or (i == 0)
        acc1, cat1 = causal_conv(inp, f"blk{i}_w1cat", out_ch, d, inp_transposed)
        out1 = jnp.maximum(acc1 + W(f"blk{i}_b1"), 0.0)     # dropout: eval id
        acc2, _ = causal_conv(out1, f"blk{i}_w2cat", out_ch, d, False)
        out2 = jnp.maximum(acc2 + W(f"blk{i}_b2"), 0.0)
        if use_down:
            res = cat1[kernel_size * out_ch:(kernel_size + 1) * out_ch, :]
            res = res + W(f"blk{i}_bd")
        else:
            res = inp                                        # (out_ch, R)
        inp = jnp.maximum(out2 + res, 0.0)
        inp_transposed = False
        in_ch = out_ch
    h = inp                                                  # (C, R)

    # ---- last timestep of every sequence; the selection matmul doubles as
    # ---- the (C, R) -> (n_seq, C) layout flip (like q @ k.T).
    row = jax.lax.broadcasted_iota(jnp.int32, (n_seq, R), 0)
    col = jax.lax.broadcasted_iota(jnp.int32, (n_seq, R), 1)
    sel = (col == row * seq_len + (seq_len - 1)).astype(f32)        # (n_seq, R)
    q = jax.lax.dot_general(sel, h, (((1,), (1,)), ((), ())),
                            preferred_element_type=f32)             # (n_seq, C)
    q = q * jax.lax.rsqrt(jnp.maximum(jnp.sum(q * q, axis=1, keepdims=True),
                                      1e-24))                       # F.normalize
    q_ref[...] = q.astype(q_ref.dtype)

    # ------------------------------ projector --------------------------------
    h1 = (jnp.dot(q, W("proj_w1"), preferred_element_type=f32)
          + W("proj_b1")) * BN_EVAL_SCALE
    h1 = jnp.maximum(h1, 0.0)
    p = jnp.dot(h1, W("proj_w2"), preferred_element_type=f32) + W("proj_b2")
    p = p * jax.lax.rsqrt(jnp.maximum(jnp.sum(p * p, axis=1, keepdims=True),
                                      1e-24))
    p_ref[...] = p.astype(p_ref.dtype)

    # -------------- discriminator (rows [0:2B] are [q_s ; q_t]) --------------
    hd = jnp.dot(q, W("disc_w1"), preferred_element_type=f32) + W("disc_b1")
    hd = jnp.where(hd >= 0.0, hd, 0.2 * hd)
    hd = jnp.dot(hd, W("disc_w2"), preferred_element_type=f32) + W("disc_b2")
    hd = jnp.where(hd >= 0.0, hd, 0.2 * hd)
    dall = jax.nn.sigmoid(
        jnp.dot(hd, W("disc_w3"), preferred_element_type=f32) + W("disc_b3"))
    dom_ref[...] = dall[0:2 * batch, :].astype(dom_ref.dtype)

    # -------------------- DeepSVDD head on q_s (rows [0:B]) ------------------
    qs = q[0:batch, :]
    st = static_ref[...].astype(f32)
    hs = (jnp.dot(qs, W("svdd_w1q"), preferred_element_type=f32)
          + jnp.dot(st, W("svdd_w1s"), preferred_element_type=f32)
          + W("svdd_b1")) * BN_EVAL_SCALE
    hs = jnp.maximum(hs, 0.0)
    rep = jnp.dot(hs, W("svdd_w2"), preferred_element_type=f32) + W("svdd_b2")
    diff = rep - W("svdd_center")
    dist_ref[...] = jnp.sum(diff * diff, axis=1,
                            keepdims=True).astype(dist_ref.dtype)


# ------------------------------ kernel wrapper -------------------------------
def fused_forward(wpack, streams, static_s, *, use_roll=True):
    B, L, Cin = streams[0].shape
    n_seq = len(streams) * B
    C = NUM_CHANNELS[-1]
    kern = functools.partial(
        _dacad_fused_kernel,
        layout=PACK_LAYOUT, num_channels=tuple(NUM_CHANNELS), num_inputs=Cin,
        kernel_size=KERNEL_SIZE, dilation_factor=DILATION_FACTOR,
        batch=B, seq_len=L, use_roll=use_roll)
    args = list(streams) + [static_s, wpack]
    q, p, dom, dist = pl.pallas_call(
        kern,
        out_shape=(jax.ShapeDtypeStruct((n_seq, C), jnp.float32),
                   jax.ShapeDtypeStruct((n_seq, C), jnp.float32),
                   jax.ShapeDtypeStruct((2 * B, 1), jnp.float32),
                   jax.ShapeDtypeStruct((B, 1), jnp.float32)),
        grid=(1,),
        in_specs=[_full_spec(a) for a in args],
        out_specs=(pl.BlockSpec((n_seq, C), lambda i: (0, 0)),
                   pl.BlockSpec((n_seq, C), lambda i: (0, 0)),
                   pl.BlockSpec((2 * B, 1), lambda i: (0, 0)),
                   pl.BlockSpec((B, 1), lambda i: (0, 0))),
        compiler_params=pltpu.CompilerParams(dimension_semantics=("arbitrary",)),
    )(*args)
    return q, p, dom, dist


# ------------------------------- forward pass --------------------------------
def dacad_forward(params, sequence_q_s, sequence_k_s, real_s, static_s,
                  sequence_q_t, sequence_k_t, static_t, alpha,
                  seq_src_positive, seq_src_negative,
                  seq_trg_positive, seq_trg_negative, *, use_roll=True):
    # encoder_k / momentum update / queue enqueue are training-only no-grad
    # paths; ReverseLayerF is identity in the forward pass.
    del sequence_k_s, sequence_k_t, static_t, alpha
    # TODO(synk): q_n_s = q_s[real_s == 0] has a data-dependent shape and is
    # not part of the returned tuple; skipped.
    del real_s

    B = sequence_q_s.shape[0]
    streams = (sequence_q_s, sequence_q_t, seq_src_positive, seq_src_negative,
               seq_trg_positive, seq_trg_negative)
    q_all, p_all, pred_domain, dist = fused_forward(
        params["wpack"], streams, static_s, use_roll=use_roll)

    q_s, q_t = q_all[0:B], q_all[B:2 * B]
    q_s_pos, q_s_neg = q_all[2 * B:3 * B], q_all[3 * B:4 * B]
    q_t_pos, q_t_neg = q_all[4 * B:5 * B], q_all[5 * B:6 * B]
    p_q_s, p_q_t = p_all[0:B], p_all[B:2 * B]
    p_q_s_pos, p_q_s_neg = p_all[2 * B:3 * B], p_all[3 * B:4 * B]
    p_q_t_pos, p_q_t_neg = p_all[4 * B:5 * B], p_all[5 * B:6 * B]

    labels_s = jnp.arange(B, dtype=jnp.int32)
    labels_t = jnp.arange(B, dtype=jnp.int32)

    # torch.mm(p_q_s, queue_s) / torch.mm(p_q_t, queue_t) are computed but
    # never returned by the reference forward (logits hard-coded to 0).
    labels_domain = jnp.concatenate(
        [jnp.ones((B, 1), jnp.float32), jnp.zeros((B, 1), jnp.float32)], axis=0)

    pred_s = dist[:, 0]
    center = params["pred"]["center"][0]
    squared_radius = params["pred"]["radius"] ** 2

    logits_s = logits_t = logits_ts = labels_ts = 0
    return (logits_s, labels_s, logits_t, labels_t, logits_ts, labels_ts,
            pred_domain, labels_domain, pred_s, center, squared_radius,
            q_s, q_s_pos, q_s_neg, p_q_s, p_q_s_pos, p_q_s_neg,
            q_t, q_t_pos, q_t_neg, p_q_t, p_q_t_pos, p_q_t_neg)


# ----------------------------- parameter packing -----------------------------
def pack_params(params):
    """Pack every forward-pass weight into one (PACK_ROWS, PACK_COLS) buffer."""
    buf = jnp.zeros((PACK_ROWS, PACK_COLS), jnp.float32)

    def put(b, name, val):
        off, shape = PACK_LAYOUT[name]
        val = jnp.asarray(val, jnp.float32).reshape(shape)
        return b.at[off:off + shape[0], 0:shape[1]].set(val)

    K = KERNEL_SIZE
    in_ch = NUM_INPUTS
    for i, (blk, out_ch) in enumerate(zip(params["tcn"], NUM_CHANNELS)):
        use_down = (in_ch != out_ch) or (i == 0)
        # output-stacked taps: chunk j is applied with a time shift of j*dilation
        taps1 = [blk["w1"][K - 1 - j].T for j in range(K)]      # (out_ch, in_ch)
        if use_down:
            if blk["down_w"] is not None:
                dw, db = blk["down_w"].T, blk["down_b"].reshape(out_ch, 1)
            else:
                dw = jnp.eye(out_ch, in_ch, dtype=jnp.float32)
                db = jnp.zeros((out_ch, 1), jnp.float32)
            taps1.append(dw)
            buf = put(buf, f"blk{i}_bd", db)
        buf = put(buf, f"blk{i}_w1cat", jnp.concatenate(taps1, axis=0))
        buf = put(buf, f"blk{i}_b1", blk["b1"])
        taps2 = [blk["w2"][K - 1 - j].T for j in range(K)]
        buf = put(buf, f"blk{i}_w2cat", jnp.concatenate(taps2, axis=0))
        buf = put(buf, f"blk{i}_b2", blk["b2"])
        in_ch = out_ch

    C = NUM_CHANNELS[-1]
    proj, disc, pred = params["proj"], params["disc"], params["pred"]
    buf = put(buf, "proj_w1", proj["w1"]); buf = put(buf, "proj_b1", proj["b1"])
    buf = put(buf, "proj_w2", proj["w2"]); buf = put(buf, "proj_b2", proj["b2"])
    buf = put(buf, "disc_w1", disc["w1"]); buf = put(buf, "disc_b1", disc["b1"])
    buf = put(buf, "disc_w2", disc["w2"]); buf = put(buf, "disc_b2", disc["b2"])
    buf = put(buf, "disc_w3", disc["w3"]); buf = put(buf, "disc_b3", disc["b3"])
    buf = put(buf, "svdd_w1q", pred["w1"][:C, :])
    buf = put(buf, "svdd_w1s", pred["w1"][C:, :])
    buf = put(buf, "svdd_b1", pred["b1"])
    buf = put(buf, "svdd_w2", pred["w2"]); buf = put(buf, "svdd_b2", pred["b2"])
    buf = put(buf, "svdd_center", pred["center"])
    return buf


# ----------------------------- parameter init --------------------------------
def init_params(key):
    keys = iter(jax.random.split(key, 64))

    def nrm(shape, scale=0.1):
        return scale * jax.random.normal(next(keys), shape, jnp.float32)

    C = NUM_CHANNELS[-1]
    tcn = []
    in_ch = NUM_INPUTS
    for out_ch in NUM_CHANNELS:
        blk = {"w1": nrm((KERNEL_SIZE, in_ch, out_ch)), "b1": nrm((1, out_ch)),
               "w2": nrm((KERNEL_SIZE, out_ch, out_ch)), "b2": nrm((1, out_ch)),
               "down_w": nrm((in_ch, out_ch)) if in_ch != out_ch else None,
               "down_b": nrm((1, out_ch)) if in_ch != out_ch else None}
        tcn.append(blk)
        in_ch = out_ch

    proj = {"w1": nrm((C, HIDDEN)), "b1": nrm((1, HIDDEN)),
            "w2": nrm((HIDDEN, C)), "b2": nrm((1, C))}
    D = C + NUM_STATIC
    pred = {"w1": nrm((D, HIDDEN)), "b1": nrm((1, HIDDEN)),
            "w2": nrm((HIDDEN, D)), "b2": nrm((1, D)),
            "center": nrm((1, D)), "radius": jnp.float32(0.5)}
    disc = {"w1": nrm((C, HIDDEN)), "b1": nrm((1, HIDDEN)),
            "w2": nrm((HIDDEN, HIDDEN)), "b2": nrm((1, HIDDEN)),
            "w3": nrm((HIDDEN, 1)), "b3": nrm((1, 1))}

    # queue buffers kept for module-state fidelity (unused by the forward)
    queue_s = jax.random.normal(next(keys), (C, QUEUE_K), jnp.float32)
    queue_s = queue_s / jnp.maximum(
        jnp.linalg.norm(queue_s, axis=0, keepdims=True), 1e-12)
    queue_t = jax.random.normal(next(keys), (C, QUEUE_K), jnp.float32)
    queue_t = queue_t / jnp.maximum(
        jnp.linalg.norm(queue_t, axis=0, keepdims=True), 1e-12)

    params = {"tcn": tcn, "proj": proj, "pred": pred, "disc": disc,
              "queue_s": queue_s, "queue_t": queue_t}
    params["wpack"] = pack_params(params)
    return params


# ----------------------------------- main ------------------------------------
if __name__ == "__main__":
    key = jax.random.PRNGKey(0)
    pkey, dkey = jax.random.split(key)
    params = init_params(pkey)

    ks = jax.random.split(dkey, 12)
    seq_shape = (BATCH, SEQ_LEN, NUM_INPUTS)
    sequence_q_s = jax.random.normal(ks[0], seq_shape, jnp.float32)
    sequence_k_s = jax.random.normal(ks[1], seq_shape, jnp.float32)
    sequence_q_t = jax.random.normal(ks[2], seq_shape, jnp.float32)
    sequence_k_t = jax.random.normal(ks[3], seq_shape, jnp.float32)
    seq_src_positive = jax.random.normal(ks[4], seq_shape, jnp.float32)
    seq_src_negative = jax.random.normal(ks[5], seq_shape, jnp.float32)
    seq_trg_positive = jax.random.normal(ks[6], seq_shape, jnp.float32)
    seq_trg_negative = jax.random.normal(ks[7], seq_shape, jnp.float32)
    real_s = (jax.random.uniform(ks[8], (BATCH, 1)) > 0.5).astype(jnp.float32)
    static_s = jax.random.normal(ks[9], (BATCH, NUM_STATIC), jnp.float32)
    static_t = jax.random.normal(ks[10], (BATCH, NUM_STATIC), jnp.float32)
    alpha = 0.5

    def run(use_roll):
        fwd = jax.jit(functools.partial(dacad_forward, params,
                                        use_roll=use_roll))
        out = fwd(sequence_q_s, sequence_k_s, real_s, static_s,
                  sequence_q_t, sequence_k_t, static_t, alpha,
                  seq_src_positive, seq_src_negative,
                  seq_trg_positive, seq_trg_negative)
        jax.block_until_ready(out)
        return out

    try:
        out = run(True)            # preferred: pltpu.roll (XLU) for causal shifts
    except Exception:              # fallback with identical semantics
        out = run(False)
    print("KERNEL_OK")
</pallas_src>

<mosaic_0001>
module attributes {stable_mosaic.version = 11 : i64} {
  func.func @_dacad_fused_kernel(%arg0: i32, %arg1: memref<2x32x4xf32, #tpu.memory_space<vmem>>, %arg2: memref<2x32x4xf32, #tpu.memory_space<vmem>>, %arg3: memref<2x32x4xf32, #tpu.memory_space<vmem>>, %arg4: memref<2x32x4xf32, #tpu.memory_space<vmem>>, %arg5: memref<2x32x4xf32, #tpu.memory_space<vmem>>, %arg6: memref<2x32x4xf32, #tpu.memory_space<vmem>>, %arg7: memref<2x4xf32, #tpu.memory_space<vmem>>, %arg8: memref<336x32xf32, #tpu.memory_space<vmem>>, %arg9: memref<12x8xf32, #tpu.memory_space<vmem>>, %arg10: memref<12x8xf32, #tpu.memory_space<vmem>>, %arg11: memref<4x1xf32, #tpu.memory_space<vmem>>, %arg12: memref<2x1xf32, #tpu.memory_space<vmem>>) attributes {dimension_semantics = [#tpu.dimension_semantics<arbitrary>], iteration_bounds = array<i64: 1>, scalar_prefetch = 0 : i64, scratch_operands = 0 : i64, tpu.core_type = #tpu.core_type<tc>, window_params = [{pipeline_mode = #tpu.pipeline_mode<synchronous>, transform_indices = @transform_0, window_bounds = array<i64: 2, 32, 4>}, {pipeline_mode = #tpu.pipeline_mode<synchronous>, transform_indices = @transform_1, window_bounds = array<i64: 2, 32, 4>}, {pipeline_mode = #tpu.pipeline_mode<synchronous>, transform_indices = @transform_2, window_bounds = array<i64: 2, 32, 4>}, {pipeline_mode = #tpu.pipeline_mode<synchronous>, transform_indices = @transform_3, window_bounds = array<i64: 2, 32, 4>}, {pipeline_mode = #tpu.pipeline_mode<synchronous>, transform_indices = @transform_4, window_bounds = array<i64: 2, 32, 4>}, {pipeline_mode = #tpu.pipeline_mode<synchronous>, transform_indices = @transform_5, window_bounds = array<i64: 2, 32, 4>}, {pipeline_mode = #tpu.pipeline_mode<synchronous>, transform_indices = @transform_6, window_bounds = array<i64: 2, 4>}, {pipeline_mode = #tpu.pipeline_mode<synchronous>, transform_indices = @transform_7, window_bounds = array<i64: 336, 32>}, {pipeline_mode = #tpu.pipeline_mode<synchronous>, transform_indices = @transform_8, window_bounds = array<i64: 12, 8>}, {pipeline_mode = #tpu.pipeline_mode<synchronous>, transform_indices = @transform_9, window_bounds = array<i64: 12, 8>}, {pipeline_mode = #tpu.pipeline_mode<synchronous>, transform_indices = @transform_10, window_bounds = array<i64: 4, 1>}, {pipeline_mode = #tpu.pipeline_mode<synchronous>, transform_indices = @transform_11, window_bounds = array<i64: 2, 1>}]} {
    %c0 = arith.constant 0 : index
    %c0_0 = arith.constant 0 : index
    %c0_1 = arith.constant 0 : index
    %0 = vector.load %arg1[%c0, %c0_0, %c0_1] : memref<2x32x4xf32, #tpu.memory_space<vmem>>, vector<2x32x4xf32>
    %1 = vector.shape_cast %0 : vector<2x32x4xf32> to vector<64x4xf32>
    %c0_2 = arith.constant 0 : index
    %c0_3 = arith.constant 0 : index
    %c0_4 = arith.constant 0 : index
    %2 = vector.load %arg2[%c0_2, %c0_3, %c0_4] : memref<2x32x4xf32, #tpu.memory_space<vmem>>, vector<2x32x4xf32>
    %3 = vector.shape_cast %2 : vector<2x32x4xf32> to vector<64x4xf32>
    %c0_5 = arith.constant 0 : index
    %c0_6 = arith.constant 0 : index
    %c0_7 = arith.constant 0 : index
    %4 = vector.load %arg3[%c0_5, %c0_6, %c0_7] : memref<2x32x4xf32, #tpu.memory_space<vmem>>, vector<2x32x4xf32>
    %5 = vector.shape_cast %4 : vector<2x32x4xf32> to vector<64x4xf32>
    %c0_8 = arith.constant 0 : index
    %c0_9 = arith.constant 0 : index
    %c0_10 = arith.constant 0 : index
    %6 = vector.load %arg4[%c0_8, %c0_9, %c0_10] : memref<2x32x4xf32, #tpu.memory_space<vmem>>, vector<2x32x4xf32>
    %7 = vector.shape_cast %6 : vector<2x32x4xf32> to vector<64x4xf32>
    %c0_11 = arith.constant 0 : index
    %c0_12 = arith.constant 0 : index
    %c0_13 = arith.constant 0 : index
    %8 = vector.load %arg5[%c0_11, %c0_12, %c0_13] : memref<2x32x4xf32, #tpu.memory_space<vmem>>, vector<2x32x4xf32>
    %9 = vector.shape_cast %8 : vector<2x32x4xf32> to vector<64x4xf32>
    %c0_14 = arith.constant 0 : index
    %c0_15 = arith.constant 0 : index
    %c0_16 = arith.constant 0 : index
    %10 = vector.load %arg6[%c0_14, %c0_15, %c0_16] : memref<2x32x4xf32, #tpu.memory_space<vmem>>, vector<2x32x4xf32>
    %11 = vector.shape_cast %10 : vector<2x32x4xf32> to vector<64x4xf32>
    %12 = tpu.concatenate %1, %3, %5, %7, %9, %11 in 0 : vector<64x4xf32>, vector<64x4xf32>, vector<64x4xf32>, vector<64x4xf32>, vector<64x4xf32>, vector<64x4xf32> -> vector<384x4xf32>
    %13 = tpu.iota {dimensions = array<i32: 1>} : vector<1x384xi32>
    %c32_i32 = arith.constant 32 : i32
    %c0_i32 = arith.constant 0 : i32
    %14 = arith.cmpi eq, %c32_i32, %c0_i32 : i32
    %c1_i32 = arith.constant 1 : i32
    %15 = arith.select %14, %c1_i32, %c32_i32 : i32
    %16 = vector.broadcast %15 : i32 to vector<1x384xi32>
    %17 = arith.remsi %13, %16 : vector<1x384xi32>
    %c0_i32_17 = arith.constant 0 : i32
    %18 = vector.broadcast %c0_i32_17 : i32 to vector<1x384xi32>
    %19 = arith.cmpi ne, %17, %18 : vector<1x384xi32>
    %c0_i32_18 = arith.constant 0 : i32
    %20 = vector.broadcast %c0_i32_18 : i32 to vector<1x384xi32>
    %21 = arith.cmpi slt, %17, %20 : vector<1x384xi32>
    %c0_i32_19 = arith.constant 0 : i32
    %22 = arith.cmpi slt, %15, %c0_i32_19 : i32
    %23 = vector.broadcast %22 : i1 to vector<1x384xi1>
    %24 = vector.broadcast %23 : vector<1x384xi1> to vector<1x384xi1>
    %25 = arith.xori %21, %24 : vector<1x384xi1>
    %26 = arith.andi %25, %19 : vector<1x384xi1>
    %27 = vector.broadcast %15 : i32 to vector<1x384xi32>
    %28 = arith.addi %17, %27 : vector<1x384xi32>
    %29 = arith.select %26, %28, %17 : vector<1x384xi1>, vector<1x384xi32>
    %c0_20 = arith.constant 0 : index
    %c0_21 = arith.constant 0 : index
    %30 = vector.load %arg8[%c0_20, %c0_21] : memref<336x32xf32, #tpu.memory_space<vmem>>, vector<24x4xf32>
    %cst = arith.constant dense<0.000000e+00> : vector<24x384xf32>
    %31 = tpu.matmul %30, %12, %cst {dimension_numbers = #tpu.dot_dimension_numbers<[1], [1], [0], [0], [0, 0, 1, 0], [], []>} : vector<24x4xf32>, vector<384x4xf32>, vector<24x384xf32> -> vector<24x384xf32>
    %32 = vector.extract_strided_slice %31 {offsets = [0, 0], sizes = [8, 384], strides = [1, 1]} : vector<24x384xf32> to vector<8x384xf32>
    %33 = vector.extract_strided_slice %31 {offsets = [8, 0], sizes = [8, 384], strides = [1, 1]} : vector<24x384xf32> to vector<8x384xf32>
    %c1_i32_22 = arith.constant 1 : i32
    %34 = tpu.dynamic_rotate %33 by %c1_i32_22 dim 1 : vector<8x384xf32>, i32 -> vector<8x384xf32>
    %c1_i32_23 = arith.constant 1 : i32
    %35 = vector.broadcast %c1_i32_23 : i32 to vector<1x384xi32>
    %36 = arith.cmpi sge, %29, %35 : vector<1x384xi32>
    %cst_24 = arith.constant 0.000000e+00 : f32
    %37 = vector.shape_cast %36 : vector<1x384xi1> to vector<1x384xi1>
    %38 = vector.broadcast %37 : vector<1x384xi1> to vector<8x384xi1>
    %39 = vector.broadcast %cst_24 : f32 to vector<8x384xf32>
    %40 = arith.select %38, %34, %39 : vector<8x384xi1>, vector<8x384xf32>
    %41 = arith.addf %32, %40 : vector<8x384xf32>
    %c24 = arith.constant 24 : index
    %c0_25 = arith.constant 0 : index
    %42 = vector.load %arg8[%c24, %c0_25] : memref<336x32xf32, #tpu.memory_space<vmem>>, vector<8x1xf32>
    %43 = vector.broadcast %42 : vector<8x1xf32> to vector<8x384xf32>
    %44 = arith.addf %41, %43 : vector<8x384xf32>
    %cst_26 = arith.constant 0.000000e+00 : f32
    %45 = vector.broadcast %cst_26 : f32 to vector<8x384xf32>
    %46 = arith.maximumf %44, %45 : vector<8x384xf32>
    %c32 = arith.constant 32 : index
    %c0_27 = arith.constant 0 : index
    %47 = vector.load %arg8[%c32, %c0_27] : memref<336x32xf32, #tpu.memory_space<vmem>>, vector<16x8xf32>
    %cst_28 = arith.constant dense<0.000000e+00> : vector<16x384xf32>
    %48 = tpu.matmul %47, %46, %cst_28 {dimension_numbers = #tpu.dot_dimension_numbers<[1], [0], [0], [1], [0, 0, 1, 1], [], []>} : vector<16x8xf32>, vector<8x384xf32>, vector<16x384xf32> -> vector<16x384xf32>
    %49 = vector.extract_strided_slice %48 {offsets = [0, 0], sizes = [8, 384], strides = [1, 1]} : vector<16x384xf32> to vector<8x384xf32>
    %50 = vector.extract_strided_slice %48 {offsets = [8, 0], sizes = [8, 384], strides = [1, 1]} : vector<16x384xf32> to vector<8x384xf32>
    %c1_i32_29 = arith.constant 1 : i32
    %51 = tpu.dynamic_rotate %50 by %c1_i32_29 dim 1 : vector<8x384xf32>, i32 -> vector<8x384xf32>
    %c1_i32_30 = arith.constant 1 : i32
    %52 = vector.broadcast %c1_i32_30 : i32 to vector<1x384xi32>
    %53 = arith.cmpi sge, %29, %52 : vector<1x384xi32>
    %cst_31 = arith.constant 0.000000e+00 : f32
    %54 = vector.shape_cast %53 : vector<1x384xi1> to vector<1x384xi1>
    %55 = vector.broadcast %54 : vector<1x384xi1> to vector<8x384xi1>
    %56 = vector.broadcast %cst_31 : f32 to vector<8x384xf32>
    %57 = arith.select %55, %51, %56 : vector<8x384xi1>, vector<8x384xf32>
    %58 = arith.addf %49, %57 : vector<8x384xf32>
    %c48 = arith.constant 48 : index
    %c0_32 = arith.constant 0 : index
    %59 = vector.load %arg8[%c48, %c0_32] : memref<336x32xf32, #tpu.memory_space<vmem>>, vector<8x1xf32>
    %60 = vector.broadcast %59 : vector<8x1xf32> to vector<8x384xf32>
    %61 = arith.addf %58, %60 : vector<8x384xf32>
    %cst_33 = arith.constant 0.000000e+00 : f32
    %62 = vector.broadcast %cst_33 : f32 to vector<8x384xf32>
    %63 = arith.maximumf %61, %62 : vector<8x384xf32>
    %64 = vector.extract_strided_slice %31 {offsets = [16, 0], sizes = [8, 384], strides = [1, 1]} : vector<24x384xf32> to vector<8x384xf32>
    %c56 = arith.constant 56 : index
    %c0_34 = arith.constant 0 : index
    %65 = vector.load %arg8[%c56, %c0_34] : memref<336x32xf32, #tpu.memory_space<vmem>>, vector<8x1xf32>
    %66 = vector.broadcast %65 : vector<8x1xf32> to vector<8x384xf32>
    %67 = arith.addf %64, %66 : vector<8x384xf32>
    %68 = arith.addf %63, %67 : vector<8x384xf32>
    %cst_35 = arith.constant 0.000000e+00 : f32
    %69 = vector.broadcast %cst_35 : f32 to vector<8x384xf32>
    %70 = arith.maximumf %68, %69 : vector<8x384xf32>
    %c64 = arith.constant 64 : index
    %c0_36 = arith.constant 0 : index
    %71 = vector.load %arg8[%c64, %c0_36] : memref<336x32xf32, #tpu.memory_space<vmem>>, vector<16x8xf32>
    %cst_37 = arith.constant dense<0.000000e+00> : vector<16x384xf32>
    %72 = tpu.matmul %71, %70, %cst_37 {dimension_numbers = #tpu.dot_dimension_numbers<[1], [0], [0], [1], [0, 0, 1, 1], [], []>} : vector<16x8xf32>, vector<8x384xf32>, vector<16x384xf32> -> vector<16x384xf32>
    %73 = vector.extract_strided_slice %72 {offsets = [0, 0], sizes = [8, 384], strides = [1, 1]} : vector<16x384xf32> to vector<8x384xf32>
    %74 = vector.extract_strided_slice %72 {offsets = [8, 0], sizes = [8, 384], strides = [1, 1]} : vector<16x384xf32> to vector<8x384xf32>
    %c2_i32 = arith.constant 2 : i32
    %75 = tpu.dynamic_rotate %74 by %c2_i32 dim 1 : vector<8x384xf32>, i32 -> vector<8x384xf32>
    %c2_i32_38 = arith.constant 2 : i32
    %76 = vector.broadcast %c2_i32_38 : i32 to vector<1x384xi32>
    %77 = arith.cmpi sge, %29, %76 : vector<1x384xi32>
    %cst_39 = arith.constant 0.000000e+00 : f32
    %78 = vector.shape_cast %77 : vector<1x384xi1> to vector<1x384xi1>
    %79 = vector.broadcast %78 : vector<1x384xi1> to vector<8x384xi1>
    %80 = vector.broadcast %cst_39 : f32 to vector<8x384xf32>
    %81 = arith.select %79, %75, %80 : vector<8x384xi1>, vector<8x384xf32>
    %82 = arith.addf %73, %81 : vector<8x384xf32>
    %c80 = arith.constant 80 : index
    %c0_40 = arith.constant 0 : index
    %83 = vector.load %arg8[%c80, %c0_40] : memref<336x32xf32, #tpu.memory_space<vmem>>, vector<8x1xf32>
    %84 = vector.broadcast %83 : vector<8x1xf32> to vector<8x384xf32>
    %85 = arith.addf %82, %84 : vector<8x384xf32>
    %cst_41 = arith.constant 0.000000e+00 : f32
    %86 = vector.broadcast %cst_41 : f32 to vector<8x384xf32>
    %87 = arith.maximumf %85, %86 : vector<8x384xf32>
    %c88 = arith.constant 88 : index
    %c0_42 = arith.constant 0 : index
    %88 = vector.load %arg8[%c88, %c0_42] : memref<336x32xf32, #tpu.memory_space<vmem>>, vector<16x8xf32>
    %cst_43 = arith.constant dense<0.000000e+00> : vector<16x384xf32>
    %89 = tpu.matmul %88, %87, %cst_43 {dimension_numbers = #tpu.dot_dimension_numbers<[1], [0], [0], [1], [0, 0, 1, 1], [], []>} : vector<16x8xf32>, vector<8x384xf32>, vector<16x384xf32> -> vector<16x384xf32>
    %90 = vector.extract_strided_slice %89 {offsets = [0, 0], sizes = [8, 384], strides = [1, 1]} : vector<16x384xf32> to vector<8x384xf32>
    %91 = vector.extract_strided_slice %89 {offsets = [8, 0], sizes = [8, 384], strides = [1, 1]} : vector<16x384xf32> to vector<8x384xf32>
    %c2_i32_44 = arith.constant 2 : i32
    %92 = tpu.dynamic_rotate %91 by %c2_i32_44 dim 1 : vector<8x384xf32>, i32 -> vector<8x384xf32>
    %c2_i32_45 = arith.constant 2 : i32
    %93 = vector.broadcast %c2_i32_45 : i32 to vector<1x384xi32>
    %94 = arith.cmpi sge, %29, %93 : vector<1x384xi32>
    %cst_46 = arith.constant 0.000000e+00 : f32
    %95 = vector.shape_cast %94 : vector<1x384xi1> to vector<1x384xi1>
    %96 = vector.broadcast %95 : vector<1x384xi1> to vector<8x384xi1>
    %97 = vector.broadcast %cst_46 : f32 to vector<8x384xf32>
    %98 = arith.select %96, %92, %97 : vector<8x384xi1>, vector<8x384xf32>
    %99 = arith.addf %90, %98 : vector<8x384xf32>
    %c104 = arith.constant 104 : index
    %c0_47 = arith.constant 0 : index
    %100 = vector.load %arg8[%c104, %c0_47] : memref<336x32xf32, #tpu.memory_space<vmem>>, vector<8x1xf32>
    %101 = vector.broadcast %100 : vector<8x1xf32> to vector<8x384xf32>
    %102 = arith.addf %99, %101 : vector<8x384xf32>
    %cst_48 = arith.constant 0.000000e+00 : f32
    %103 = vector.broadcast %cst_48 : f32 to vector<8x384xf32>
    %104 = arith.maximumf %102, %103 : vector<8x384xf32>
    %105 = arith.addf %104, %70 : vector<8x384xf32>
    %cst_49 = arith.constant 0.000000e+00 : f32
    %106 = vector.broadcast %cst_49 : f32 to vector<8x384xf32>
    %107 = arith.maximumf %105, %106 : vector<8x384xf32>
    %108 = tpu.iota {dimensions = array<i32: 0>} : vector<12x384xi32>
    %109 = tpu.iota {dimensions = array<i32: 1>} : vector<12x384xi32>
    %c32_i32_50 = arith.constant 32 : i32
    %110 = vector.broadcast %c32_i32_50 : i32 to vector<12x384xi32>
    %111 = arith.muli %108, %110 : vector<12x384xi32>
    %c31_i32 = arith.constant 31 : i32
    %112 = vector.broadcast %c31_i32 : i32 to vector<12x384xi32>
    %113 = arith.addi %111, %112 : vector<12x384xi32>
    %114 = arith.cmpi eq, %109, %113 : vector<12x384xi32>
    %115 = arith.extui %114 : vector<12x384xi1> to vector<12x384xi32>
    %116 = arith.sitofp %115 : vector<12x384xi32> to vector<12x384xf32>
    %cst_51 = arith.constant dense<0.000000e+00> : vector<12x8xf32>
    %117 = tpu.matmul %116, %107, %cst_51 {dimension_numbers = #tpu.dot_dimension_numbers<[1], [1], [0], [0], [0, 0, 1, 0], [], []>} : vector<12x384xf32>, vector<8x384xf32>, vector<12x8xf32> -> vector<12x8xf32>
    %118 = arith.mulf %117, %117 : vector<12x8xf32>
    %cst_52 = arith.constant dense<0.000000e+00> : vector<12xf32>
    %119 = vector.multi_reduction <add>, %118, %cst_52 [1] : vector<12x8xf32> to vector<12xf32>
    %120 = vector.shape_cast %119 : vector<12xf32> to vector<12x1xf32>
    %cst_53 = arith.constant 1.000000e-24 : f32
    %121 = vector.broadcast %cst_53 : f32 to vector<12x1xf32>
    %122 = arith.maximumf %120, %121 : vector<12x1xf32>
    %123 = math.rsqrt %122 : vector<12x1xf32>
    %124 = vector.broadcast %123 : vector<12x1xf32> to vector<12x8xf32>
    %125 = arith.mulf %117, %124 : vector<12x8xf32>
    %c0_54 = arith.constant 0 : index
    %c0_55 = arith.constant 0 : index
    %126 = vector.load %arg9[%c0_54, %c0_55] : memref<12x8xf32, #tpu.memory_space<vmem>>, vector<12x8xf32>
    tpu.vector_store %arg9[%c0_54, %c0_55], %125 {strides = array<i32>} : memref<12x8xf32, #tpu.memory_space<vmem>>, vector<12x8xf32>,
    %c112 = arith.constant 112 : index
    %c0_56 = arith.constant 0 : index
    %127 = vector.load %arg8[%c112, %c0_56] : memref<336x32xf32, #tpu.memory_space<vmem>>, vector<8x32xf32>
    %cst_57 = arith.constant dense<0.000000e+00> : vector<12x32xf32>
    %128 = tpu.matmul %125, %127, %cst_57 {dimension_numbers = #tpu.dot_dimension_numbers<[1], [0], [0], [1], [0, 0, 1, 1], [], []>} : vector<12x8xf32>, vector<8x32xf32>, vector<12x32xf32> -> vector<12x32xf32>
    %c120 = arith.constant 120 : index
    %c0_58 = arith.constant 0 : index
    %129 = vector.load %arg8[%c120, %c0_58] : memref<336x32xf32, #tpu.memory_space<vmem>>, vector<1x32xf32>
    %130 = vector.broadcast %129 : vector<1x32xf32> to vector<12x32xf32>
    %131 = arith.addf %128, %130 : vector<12x32xf32>
    %cst_59 = arith.constant 0.999994993 : f32
    %132 = vector.broadcast %cst_59 : f32 to vector<12x32xf32>
    %133 = arith.mulf %131, %132 : vector<12x32xf32>
    %cst_60 = arith.constant 0.000000e+00 : f32
    %134 = vector.broadcast %cst_60 : f32 to vector<12x32xf32>
    %135 = arith.maximumf %133, %134 : vector<12x32xf32>
    %c128 = arith.constant 128 : index
    %c0_61 = arith.constant 0 : index
    %136 = vector.load %arg8[%c128, %c0_61] : memref<336x32xf32, #tpu.memory_space<vmem>>, vector<32x8xf32>
    %cst_62 = arith.constant dense<0.000000e+00> : vector<12x8xf32>
    %137 = tpu.matmul %135, %136, %cst_62 {dimension_numbers = #tpu.dot_dimension_numbers<[1], [0], [0], [1], [0, 0, 1, 1], [], []>} : vector<12x32xf32>, vector<32x8xf32>, vector<12x8xf32> -> vector<12x8xf32>
    %c160 = arith.constant 160 : index
    %c0_63 = arith.constant 0 : index
    %138 = vector.load %arg8[%c160, %c0_63] : memref<336x32xf32, #tpu.memory_space<vmem>>, vector<1x8xf32>
    %139 = vector.broadcast %138 : vector<1x8xf32> to vector<12x8xf32>
    %140 = arith.addf %137, %139 : vector<12x8xf32>
    %141 = arith.mulf %140, %140 : vector<12x8xf32>
    %cst_64 = arith.constant dense<0.000000e+00> : vector<12xf32>
    %142 = vector.multi_reduction <add>, %141, %cst_64 [1] : vector<12x8xf32> to vector<12xf32>
    %143 = vector.shape_cast %142 : vector<12xf32> to vector<12x1xf32>
    %cst_65 = arith.constant 1.000000e-24 : f32
    %144 = vector.broadcast %cst_65 : f32 to vector<12x1xf32>
    %145 = arith.maximumf %143, %144 : vector<12x1xf32>
    %146 = math.rsqrt %145 : vector<12x1xf32>
    %147 = vector.broadcast %146 : vector<12x1xf32> to vector<12x8xf32>
    %148 = arith.mulf %140, %147 : vector<12x8xf32>
    %c0_66 = arith.constant 0 : index
    %c0_67 = arith.constant 0 : index
    %149 = vector.load %arg10[%c0_66, %c0_67] : memref<12x8xf32, #tpu.memory_space<vmem>>, vector<12x8xf32>
    tpu.vector_store %arg10[%c0_66, %c0_67], %148 {strides = array<i32>} : memref<12x8xf32, #tpu.memory_space<vmem>>, vector<12x8xf32>,
    %c168 = arith.constant 168 : index
    %c0_68 = arith.constant 0 : index
    %150 = vector.load %arg8[%c168, %c0_68] : memref<336x32xf32, #tpu.memory_space<vmem>>, vector<8x32xf32>
    %cst_69 = arith.constant dense<0.000000e+00> : vector<12x32xf32>
    %151 = tpu.matmul %125, %150, %cst_69 {dimension_numbers = #tpu.dot_dimension_numbers<[1], [0], [0], [1], [0, 0, 1, 1], [], []>} : vector<12x8xf32>, vector<8x32xf32>, vector<12x32xf32> -> vector<12x32xf32>
    %c176 = arith.constant 176 : index
    %c0_70 = arith.constant 0 : index
    %152 = vector.load %arg8[%c176, %c0_70] : memref<336x32xf32, #tpu.memory_space<vmem>>, vector<1x32xf32>
    %153 = vector.broadcast %152 : vector<1x32xf32> to vector<12x32xf32>
    %154 = arith.addf %151, %153 : vector<12x32xf32>
    %cst_71 = arith.constant 0.000000e+00 : f32
    %155 = vector.broadcast %cst_71 : f32 to vector<12x32xf32>
    %156 = arith.cmpf oge, %154, %155 : vector<12x32xf32>
    %cst_72 = arith.constant 2.000000e-01 : f32
    %157 = vector.broadcast %cst_72 : f32 to vector<12x32xf32>
    %158 = arith.mulf %157, %154 : vector<12x32xf32>
    %159 = arith.select %156, %154, %158 : vector<12x32xi1>, vector<12x32xf32>
    %c184 = arith.constant 184 : index
    %c0_73 = arith.constant 0 : index
    %160 = vector.load %arg8[%c184, %c0_73] : memref<336x32xf32, #tpu.memory_space<vmem>>, vector<32x32xf32>
    %cst_74 = arith.constant dense<0.000000e+00> : vector<12x32xf32>
    %161 = tpu.matmul %159, %160, %cst_74 {dimension_numbers = #tpu.dot_dimension_numbers<[1], [0], [0], [1], [0, 0, 1, 1], [], []>} : vector<12x32xf32>, vector<32x32xf32>, vector<12x32xf32> -> vector<12x32xf32>
    %c216 = arith.constant 216 : index
    %c0_75 = arith.constant 0 : index
    %162 = vector.load %arg8[%c216, %c0_75] : memref<336x32xf32, #tpu.memory_space<vmem>>, vector<1x32xf32>
    %163 = vector.broadcast %162 : vector<1x32xf32> to vector<12x32xf32>
    %164 = arith.addf %161, %163 : vector<12x32xf32>
    %cst_76 = arith.constant 0.000000e+00 : f32
    %165 = vector.broadcast %cst_76 : f32 to vector<12x32xf32>
    %166 = arith.cmpf oge, %164, %165 : vector<12x32xf32>
    %cst_77 = arith.constant 2.000000e-01 : f32
    %167 = vector.broadcast %cst_77 : f32 to vector<12x32xf32>
    %168 = arith.mulf %167, %164 : vector<12x32xf32>
    %169 = arith.select %166, %164, %168 : vector<12x32xi1>, vector<12x32xf32>
    %c224 = arith.constant 224 : index
    %c0_78 = arith.constant 0 : index
    %170 = vector.load %arg8[%c224, %c0_78] : memref<336x32xf32, #tpu.memory_space<vmem>>, vector<32x1xf32>
    %cst_79 = arith.constant dense<0.000000e+00> : vector<12x1xf32>
    %171 = tpu.matmul %169, %170, %cst_79 {dimension_numbers = #tpu.dot_dimension_numbers<[1], [0], [0], [1], [0, 0, 1, 1], [], []>} : vector<12x32xf32>, vector<32x1xf32>, vector<12x1xf32> -> vector<12x1xf32>
    %c256 = arith.constant 256 : index
    %c0_80 = arith.constant 0 : index
    %172 = vector.load %arg8[%c256, %c0_80] : memref<336x32xf32, #tpu.memory_space<vmem>>, vector<1x1xf32>
    %173 = vector.broadcast %172 : vector<1x1xf32> to vector<12x1xf32>
    %174 = arith.addf %171, %173 : vector<12x1xf32>
    %175 = arith.negf %174 : vector<12x1xf32>
    %176 = math.exp %175 : vector<12x1xf32>
    %cst_81 = arith.constant 1.000000e+00 : f32
    %177 = vector.broadcast %cst_81 : f32 to vector<12x1xf32>
    %178 = arith.addf %177, %176 : vector<12x1xf32>
    %179 = arith.divf %177, %178 : vector<12x1xf32>
    %180 = vector.extract_strided_slice %179 {offsets = [0, 0], sizes = [4, 1], strides = [1, 1]} : vector<12x1xf32> to vector<4x1xf32>
    %c0_82 = arith.constant 0 : index
    %c0_83 = arith.constant 0 : index
    %181 = vector.load %arg11[%c0_82, %c0_83] : memref<4x1xf32, #tpu.memory_space<vmem>>, vector<4x1xf32>
    tpu.vector_store %arg11[%c0_82, %c0_83], %180 {strides = array<i32>} : memref<4x1xf32, #tpu.memory_space<vmem>>, vector<4x1xf32>,
    %182 = vector.extract_strided_slice %125 {offsets = [0, 0], sizes = [2, 8], strides = [1, 1]} : vector<12x8xf32> to vector<2x8xf32>
    %c0_84 = arith.constant 0 : index
    %c0_85 = arith.constant 0 : index
    %183 = vector.load %arg7[%c0_84, %c0_85] : memref<2x4xf32, #tpu.memory_space<vmem>>, vector<2x4xf32>
    %c264 = arith.constant 264 : index
    %c0_86 = arith.constant 0 : index
    %184 = vector.load %arg8[%c264, %c0_86] : memref<336x32xf32, #tpu.memory_space<vmem>>, vector<8x32xf32>
    %cst_87 = arith.constant dense<0.000000e+00> : vector<2x32xf32>
    %185 = tpu.matmul %182, %184, %cst_87 {dimension_numbers = #tpu.dot_dimension_numbers<[1], [0], [0], [1], [0, 0, 1, 1], [], []>} : vector<2x8xf32>, vector<8x32xf32>, vector<2x32xf32> -> vector<2x32xf32>
    %c272 = arith.constant 272 : index
    %c0_88 = arith.constant 0 : index
    %186 = vector.load %arg8[%c272, %c0_88] : memref<336x32xf32, #tpu.memory_space<vmem>>, vector<4x32xf32>
    %cst_89 = arith.constant dense<0.000000e+00> : vector<2x32xf32>
    %187 = tpu.matmul %183, %186, %cst_89 {dimension_numbers = #tpu.dot_dimension_numbers<[1], [0], [0], [1], [0, 0, 1, 1], [], []>} : vector<2x4xf32>, vector<4x32xf32>, vector<2x32xf32> -> vector<2x32xf32>
    %188 = arith.addf %185, %187 : vector<2x32xf32>
    %c280 = arith.constant 280 : index
    %c0_90 = arith.constant 0 : index
    %189 = vector.load %arg8[%c280, %c0_90] : memref<336x32xf32, #tpu.memory_space<vmem>>, vector<1x32xf32>
    %190 = vector.broadcast %189 : vector<1x32xf32> to vector<2x32xf32>
    %191 = arith.addf %188, %190 : vector<2x32xf32>
    %cst_91 = arith.constant 0.999994993 : f32
    %192 = vector.broadcast %cst_91 : f32 to vector<2x32xf32>
    %193 = arith.mulf %191, %192 : vector<2x32xf32>
    %cst_92 = arith.constant 0.000000e+00 : f32
    %194 = vector.broadcast %cst_92 : f32 to vector<2x32xf32>
    %195 = arith.maximumf %193, %194 : vector<2x32xf32>
    %c288 = arith.constant 288 : index
    %c0_93 = arith.constant 0 : index
    %196 = vector.load %arg8[%c288, %c0_93] : memref<336x32xf32, #tpu.memory_space<vmem>>, vector<32x12xf32>
    %cst_94 = arith.constant dense<0.000000e+00> : vector<2x12xf32>
    %197 = tpu.matmul %195, %196, %cst_94 {dimension_numbers = #tpu.dot_dimension_numbers<[1], [0], [0], [1], [0, 0, 1, 1], [], []>} : vector<2x32xf32>, vector<32x12xf32>, vector<2x12xf32> -> vector<2x12xf32>
    %c320 = arith.constant 320 : index
    %c0_95 = arith.constant 0 : index
    %198 = vector.load %arg8[%c320, %c0_95] : memref<336x32xf32, #tpu.memory_space<vmem>>, vector<1x12xf32>
    %199 = vector.broadcast %198 : vector<1x12xf32> to vector<2x12xf32>
    %200 = arith.addf %197, %199 : vector<2x12xf32>
    %c328 = arith.constant 328 : index
    %c0_96 = arith.constant 0 : index
    %201 = vector.load %arg8[%c328, %c0_96] : memref<336x32xf32, #tpu.memory_space<vmem>>, vector<1x12xf32>
    %202 = vector.broadcast %201 : vector<1x12xf32> to vector<2x12xf32>
    %203 = arith.subf %200, %202 : vector<2x12xf32>
    %204 = arith.mulf %203, %203 : vector<2x12xf32>
    %cst_97 = arith.constant dense<0.000000e+00> : vector<2xf32>
    %205 = vector.multi_reduction <add>, %204, %cst_97 [1] : vector<2x12xf32> to vector<2xf32>
    %206 = vector.shape_cast %205 : vector<2xf32> to vector<2x1xf32>
    %c0_98 = arith.constant 0 : index
    %c0_99 = arith.constant 0 : index
    %207 = vector.load %arg12[%c0_98, %c0_99] : memref<2x1xf32, #tpu.memory_space<vmem>>, vector<2x1xf32>
    tpu.vector_store %arg12[%c0_98, %c0_99], %206 {strides = array<i32>} : memref<2x1xf32, #tpu.memory_space<vmem>>, vector<2x1xf32>,
    return
  }
  func.func @transform_0(%arg0: i32) -> (i32, i32, i32) {
    %c0_i32 = arith.constant 0 : i32
    %c0_i32_0 = arith.constant 0 : i32
    %c0_i32_1 = arith.constant 0 : i32
    %c0_i32_2 = arith.constant 0 : i32
    return %c0_i32, %c0_i32_0, %c0_i32_1 : i32, i32, i32
  }
  func.func @transform_1(%arg0: i32) -> (i32, i32, i32) {
    %c0_i32 = arith.constant 0 : i32
    %c0_i32_0 = arith.constant 0 : i32
    %c0_i32_1 = arith.constant 0 : i32
    %c0_i32_2 = arith.constant 0 : i32
    return %c0_i32, %c0_i32_0, %c0_i32_1 : i32, i32, i32
  }
  func.func @transform_2(%arg0: i32) -> (i32, i32, i32) {
    %c0_i32 = arith.constant 0 : i32
    %c0_i32_0 = arith.constant 0 : i32
    %c0_i32_1 = arith.constant 0 : i32
    %c0_i32_2 = arith.constant 0 : i32
    return %c0_i32, %c0_i32_0, %c0_i32_1 : i32, i32, i32
  }
  func.func @transform_3(%arg0: i32) -> (i32, i32, i32) {
    %c0_i32 = arith.constant 0 : i32
    %c0_i32_0 = arith.constant 0 : i32
    %c0_i32_1 = arith.constant 0 : i32
    %c0_i32_2 = arith.constant 0 : i32
    return %c0_i32, %c0_i32_0, %c0_i32_1 : i32, i32, i32
  }
  func.func @transform_4(%arg0: i32) -> (i32, i32, i32) {
    %c0_i32 = arith.constant 0 : i32
    %c0_i32_0 = arith.constant 0 : i32
    %c0_i32_1 = arith.constant 0 : i32
    %c0_i32_2 = arith.constant 0 : i32
    return %c0_i32, %c0_i32_0, %c0_i32_1 : i32, i32, i32
  }
  func.func @transform_5(%arg0: i32) -> (i32, i32, i32) {
    %c0_i32 = arith.constant 0 : i32
    %c0_i32_0 = arith.constant 0 : i32
    %c0_i32_1 = arith.constant 0 : i32
    %c0_i32_2 = arith.constant 0 : i32
    return %c0_i32, %c0_i32_0, %c0_i32_1 : i32, i32, i32
  }
  func.func @transform_6(%arg0: i32) -> (i32, i32) {
    %c0_i32 = arith.constant 0 : i32
    %c0_i32_0 = arith.constant 0 : i32
    %c0_i32_1 = arith.constant 0 : i32
    return %c0_i32, %c0_i32_0 : i32, i32
  }
  func.func @transform_7(%arg0: i32) -> (i32, i32) {
    %c0_i32 = arith.constant 0 : i32
    %c0_i32_0 = arith.constant 0 : i32
    %c0_i32_1 = arith.constant 0 : i32
    return %c0_i32, %c0_i32_0 : i32, i32
  }
  func.func @transform_8(%arg0: i32) -> (i32, i32) {
    %c0_i32 = arith.constant 0 : i32
    %c0_i32_0 = arith.constant 0 : i32
    %c0_i32_1 = arith.constant 0 : i32
    return %c0_i32, %c0_i32_0 : i32, i32
  }
  func.func @transform_9(%arg0: i32) -> (i32, i32) {
    %c0_i32 = arith.constant 0 : i32
    %c0_i32_0 = arith.constant 0 : i32
    %c0_i32_1 = arith.constant 0 : i32
    return %c0_i32, %c0_i32_0 : i32, i32
  }
  func.func @transform_10(%arg0: i32) -> (i32, i32) {
    %c0_i32 = arith.constant 0 : i32
    %c0_i32_0 = arith.constant 0 : i32
    %c0_i32_1 = arith.constant 0 : i32
    return %c0_i32, %c0_i32_0 : i32, i32
  }
  func.func @transform_11(%arg0: i32) -> (i32, i32) {
    %c0_i32 = arith.constant 0 : i32
    %c0_i32_0 = arith.constant 0 : i32
    %c0_i32_1 = arith.constant 0 : i32
    return %c0_i32, %c0_i32_0 : i32, i32
  }
}

module attributes {stable_mosaic.version = 11 : i64} {
  func.func @_dacad_fused_kernel(%arg0: i32, %arg1: memref<2x32x4xf32, #tpu.memory_space<vmem>>, %arg2: memref<2x32x4xf32, #tpu.memory_space<vmem>>, %arg3: memref<2x32x4xf32, #tpu.memory_space<vmem>>, %arg4: memref<2x32x4xf32, #tpu.memory_space<vmem>>, %arg5: memref<2x32x4xf32, #tpu.memory_space<vmem>>, %arg6: memref<2x32x4xf32, #tpu.memory_space<vmem>>, %arg7: memref<2x4xf32, #tpu.memory_space<vmem>>, %arg8: memref<336x32xf32, #tpu.memory_space<vmem>>, %arg9: memref<12x8xf32, #tpu.memory_space<vmem>>, %arg10: memref<12x8xf32, #tpu.memory_space<vmem>>, %arg11: memref<4x1xf32, #tpu.memory_space<vmem>>, %arg12: memref<2x1xf32, #tpu.memory_space<vmem>>) attributes {dimension_semantics = [#tpu.dimension_semantics<arbitrary>], iteration_bounds = array<i64: 1>, scalar_prefetch = 0 : i64, scratch_operands = 0 : i64, tpu.core_type = #tpu.core_type<tc>, window_params = [{pipeline_mode = #tpu.pipeline_mode<synchronous>, transform_indices = @transform_0, window_bounds = array<i64: 2, 32, 4>}, {pipeline_mode = #tpu.pipeline_mode<synchronous>, transform_indices = @transform_1, window_bounds = array<i64: 2, 32, 4>}, {pipeline_mode = #tpu.pipeline_mode<synchronous>, transform_indices = @transform_2, window_bounds = array<i64: 2, 32, 4>}, {pipeline_mode = #tpu.pipeline_mode<synchronous>, transform_indices = @transform_3, window_bounds = array<i64: 2, 32, 4>}, {pipeline_mode = #tpu.pipeline_mode<synchronous>, transform_indices = @transform_4, window_bounds = array<i64: 2, 32, 4>}, {pipeline_mode = #tpu.pipeline_mode<synchronous>, transform_indices = @transform_5, window_bounds = array<i64: 2, 32, 4>}, {pipeline_mode = #tpu.pipeline_mode<synchronous>, transform_indices = @transform_6, window_bounds = array<i64: 2, 4>}, {pipeline_mode = #tpu.pipeline_mode<synchronous>, transform_indices = @transform_7, window_bounds = array<i64: 336, 32>}, {pipeline_mode = #tpu.pipeline_mode<synchronous>, transform_indices = @transform_8, window_bounds = array<i64: 12, 8>}, {pipeline_mode = #tpu.pipeline_mode<synchronous>, transform_indices = @transform_9, window_bounds = array<i64: 12, 8>}, {pipeline_mode = #tpu.pipeline_mode<synchronous>, transform_indices = @transform_10, window_bounds = array<i64: 4, 1>}, {pipeline_mode = #tpu.pipeline_mode<synchronous>, transform_indices = @transform_11, window_bounds = array<i64: 2, 1>}]} {
    %c0 = arith.constant 0 : index
    %c0_0 = arith.constant 0 : index
    %c0_1 = arith.constant 0 : index
    %0 = vector.load %arg1[%c0, %c0_0, %c0_1] : memref<2x32x4xf32, #tpu.memory_space<vmem>>, vector<2x32x4xf32>
    %1 = vector.shape_cast %0 : vector<2x32x4xf32> to vector<64x4xf32>
    %c0_2 = arith.constant 0 : index
    %c0_3 = arith.constant 0 : index
    %c0_4 = arith.constant 0 : index
    %2 = vector.load %arg2[%c0_2, %c0_3, %c0_4] : memref<2x32x4xf32, #tpu.memory_space<vmem>>, vector<2x32x4xf32>
    %3 = vector.shape_cast %2 : vector<2x32x4xf32> to vector<64x4xf32>
    %c0_5 = arith.constant 0 : index
    %c0_6 = arith.constant 0 : index
    %c0_7 = arith.constant 0 : index
    %4 = vector.load %arg3[%c0_5, %c0_6, %c0_7] : memref<2x32x4xf32, #tpu.memory_space<vmem>>, vector<2x32x4xf32>
    %5 = vector.shape_cast %4 : vector<2x32x4xf32> to vector<64x4xf32>
    %c0_8 = arith.constant 0 : index
    %c0_9 = arith.constant 0 : index
    %c0_10 = arith.constant 0 : index
    %6 = vector.load %arg4[%c0_8, %c0_9, %c0_10] : memref<2x32x4xf32, #tpu.memory_space<vmem>>, vector<2x32x4xf32>
    %7 = vector.shape_cast %6 : vector<2x32x4xf32> to vector<64x4xf32>
    %c0_11 = arith.constant 0 : index
    %c0_12 = arith.constant 0 : index
    %c0_13 = arith.constant 0 : index
    %8 = vector.load %arg5[%c0_11, %c0_12, %c0_13] : memref<2x32x4xf32, #tpu.memory_space<vmem>>, vector<2x32x4xf32>
    %9 = vector.shape_cast %8 : vector<2x32x4xf32> to vector<64x4xf32>
    %c0_14 = arith.constant 0 : index
    %c0_15 = arith.constant 0 : index
    %c0_16 = arith.constant 0 : index
    %10 = vector.load %arg6[%c0_14, %c0_15, %c0_16] : memref<2x32x4xf32, #tpu.memory_space<vmem>>, vector<2x32x4xf32>
    %11 = vector.shape_cast %10 : vector<2x32x4xf32> to vector<64x4xf32>
    %12 = tpu.concatenate %1, %3, %5, %7, %9, %11 in 0 : vector<64x4xf32>, vector<64x4xf32>, vector<64x4xf32>, vector<64x4xf32>, vector<64x4xf32>, vector<64x4xf32> -> vector<384x4xf32>
    %13 = tpu.iota {dimensions = array<i32: 1>} : vector<1x384xi32>
    %c32_i32 = arith.constant 32 : i32
    %c0_i32 = arith.constant 0 : i32
    %14 = arith.cmpi eq, %c32_i32, %c0_i32 : i32
    %c1_i32 = arith.constant 1 : i32
    %15 = arith.select %14, %c1_i32, %c32_i32 : i32
    %16 = vector.broadcast %15 : i32 to vector<1x384xi32>
    %17 = arith.remsi %13, %16 : vector<1x384xi32>
    %c0_i32_17 = arith.constant 0 : i32
    %18 = vector.broadcast %c0_i32_17 : i32 to vector<1x384xi32>
    %19 = arith.cmpi ne, %17, %18 : vector<1x384xi32>
    %c0_i32_18 = arith.constant 0 : i32
    %20 = vector.broadcast %c0_i32_18 : i32 to vector<1x384xi32>
    %21 = arith.cmpi slt, %17, %20 : vector<1x384xi32>
    %c0_i32_19 = arith.constant 0 : i32
    %22 = arith.cmpi slt, %15, %c0_i32_19 : i32
    %23 = vector.broadcast %22 : i1 to vector<1x384xi1>
    %24 = vector.broadcast %23 : vector<1x384xi1> to vector<1x384xi1>
    %25 = arith.xori %21, %24 : vector<1x384xi1>
    %26 = arith.andi %25, %19 : vector<1x384xi1>
    %27 = vector.broadcast %15 : i32 to vector<1x384xi32>
    %28 = arith.addi %17, %27 : vector<1x384xi32>
    %29 = arith.select %26, %28, %17 : vector<1x384xi1>, vector<1x384xi32>
    %c0_20 = arith.constant 0 : index
    %c0_21 = arith.constant 0 : index
    %30 = vector.load %arg8[%c0_20, %c0_21] : memref<336x32xf32, #tpu.memory_space<vmem>>, vector<24x4xf32>
    %cst = arith.constant dense<0.000000e+00> : vector<24x384xf32>
    %31 = tpu.matmul %30, %12, %cst {dimension_numbers = #tpu.dot_dimension_numbers<[1], [1], [0], [0], [0, 0, 1, 0], [], []>} : vector<24x4xf32>, vector<384x4xf32>, vector<24x384xf32> -> vector<24x384xf32>
    %32 = vector.extract_strided_slice %31 {offsets = [0, 0], sizes = [8, 384], strides = [1, 1]} : vector<24x384xf32> to vector<8x384xf32>
    %33 = vector.extract_strided_slice %31 {offsets = [8, 0], sizes = [8, 384], strides = [1, 1]} : vector<24x384xf32> to vector<8x384xf32>
    %34 = vector.extract_strided_slice %33 {offsets = [0, 383], sizes = [8, 1], strides = [1, 1]} : vector<8x384xf32> to vector<8x1xf32>
    %35 = vector.extract_strided_slice %33 {offsets = [0, 0], sizes = [8, 383], strides = [1, 1]} : vector<8x384xf32> to vector<8x383xf32>
    %36 = tpu.concatenate %34, %35 in 1 : vector<8x1xf32>, vector<8x383xf32> -> vector<8x384xf32>
    %c1_i32_22 = arith.constant 1 : i32
    %37 = vector.broadcast %c1_i32_22 : i32 to vector<1x384xi32>
    %38 = arith.cmpi sge, %29, %37 : vector<1x384xi32>
    %cst_23 = arith.constant 0.000000e+00 : f32
    %39 = vector.shape_cast %38 : vector<1x384xi1> to vector<1x384xi1>
    %40 = vector.broadcast %39 : vector<1x384xi1> to vector<8x384xi1>
    %41 = vector.broadcast %cst_23 : f32 to vector<8x384xf32>
    %42 = arith.select %40, %36, %41 : vector<8x384xi1>, vector<8x384xf32>
    %43 = arith.addf %32, %42 : vector<8x384xf32>
    %c24 = arith.constant 24 : index
    %c0_24 = arith.constant 0 : index
    %44 = vector.load %arg8[%c24, %c0_24] : memref<336x32xf32, #tpu.memory_space<vmem>>, vector<8x1xf32>
    %45 = vector.broadcast %44 : vector<8x1xf32> to vector<8x384xf32>
    %46 = arith.addf %43, %45 : vector<8x384xf32>
    %cst_25 = arith.constant 0.000000e+00 : f32
    %47 = vector.broadcast %cst_25 : f32 to vector<8x384xf32>
    %48 = arith.maximumf %46, %47 : vector<8x384xf32>
    %c32 = arith.constant 32 : index
    %c0_26 = arith.constant 0 : index
    %49 = vector.load %arg8[%c32, %c0_26] : memref<336x32xf32, #tpu.memory_space<vmem>>, vector<16x8xf32>
    %cst_27 = arith.constant dense<0.000000e+00> : vector<16x384xf32>
    %50 = tpu.matmul %49, %48, %cst_27 {dimension_numbers = #tpu.dot_dimension_numbers<[1], [0], [0], [1], [0, 0, 1, 1], [], []>} : vector<16x8xf32>, vector<8x384xf32>, vector<16x384xf32> -> vector<16x384xf32>
    %51 = vector.extract_strided_slice %50 {offsets = [0, 0], sizes = [8, 384], strides = [1, 1]} : vector<16x384xf32> to vector<8x384xf32>
    %52 = vector.extract_strided_slice %50 {offsets = [8, 0], sizes = [8, 384], strides = [1, 1]} : vector<16x384xf32> to vector<8x384xf32>
    %53 = vector.extract_strided_slice %52 {offsets = [0, 383], sizes = [8, 1], strides = [1, 1]} : vector<8x384xf32> to vector<8x1xf32>
    %54 = vector.extract_strided_slice %52 {offsets = [0, 0], sizes = [8, 383], strides = [1, 1]} : vector<8x384xf32> to vector<8x383xf32>
    %55 = tpu.concatenate %53, %54 in 1 : vector<8x1xf32>, vector<8x383xf32> -> vector<8x384xf32>
    %c1_i32_28 = arith.constant 1 : i32
    %56 = vector.broadcast %c1_i32_28 : i32 to vector<1x384xi32>
    %57 = arith.cmpi sge, %29, %56 : vector<1x384xi32>
    %cst_29 = arith.constant 0.000000e+00 : f32
    %58 = vector.shape_cast %57 : vector<1x384xi1> to vector<1x384xi1>
    %59 = vector.broadcast %58 : vector<1x384xi1> to vector<8x384xi1>
    %60 = vector.broadcast %cst_29 : f32 to vector<8x384xf32>
    %61 = arith.select %59, %55, %60 : vector<8x384xi1>, vector<8x384xf32>
    %62 = arith.addf %51, %61 : vector<8x384xf32>
    %c48 = arith.constant 48 : index
    %c0_30 = arith.constant 0 : index
    %63 = vector.load %arg8[%c48, %c0_30] : memref<336x32xf32, #tpu.memory_space<vmem>>, vector<8x1xf32>
    %64 = vector.broadcast %63 : vector<8x1xf32> to vector<8x384xf32>
    %65 = arith.addf %62, %64 : vector<8x384xf32>
    %cst_31 = arith.constant 0.000000e+00 : f32
    %66 = vector.broadcast %cst_31 : f32 to vector<8x384xf32>
    %67 = arith.maximumf %65, %66 : vector<8x384xf32>
    %68 = vector.extract_strided_slice %31 {offsets = [16, 0], sizes = [8, 384], strides = [1, 1]} : vector<24x384xf32> to vector<8x384xf32>
    %c56 = arith.constant 56 : index
    %c0_32 = arith.constant 0 : index
    %69 = vector.load %arg8[%c56, %c0_32] : memref<336x32xf32, #tpu.memory_space<vmem>>, vector<8x1xf32>
    %70 = vector.broadcast %69 : vector<8x1xf32> to vector<8x384xf32>
    %71 = arith.addf %68, %70 : vector<8x384xf32>
    %72 = arith.addf %67, %71 : vector<8x384xf32>
    %cst_33 = arith.constant 0.000000e+00 : f32
    %73 = vector.broadcast %cst_33 : f32 to vector<8x384xf32>
    %74 = arith.maximumf %72, %73 : vector<8x384xf32>
    %c64 = arith.constant 64 : index
    %c0_34 = arith.constant 0 : index
    %75 = vector.load %arg8[%c64, %c0_34] : memref<336x32xf32, #tpu.memory_space<vmem>>, vector<16x8xf32>
    %cst_35 = arith.constant dense<0.000000e+00> : vector<16x384xf32>
    %76 = tpu.matmul %75, %74, %cst_35 {dimension_numbers = #tpu.dot_dimension_numbers<[1], [0], [0], [1], [0, 0, 1, 1], [], []>} : vector<16x8xf32>, vector<8x384xf32>, vector<16x384xf32> -> vector<16x384xf32>
    %77 = vector.extract_strided_slice %76 {offsets = [0, 0], sizes = [8, 384], strides = [1, 1]} : vector<16x384xf32> to vector<8x384xf32>
    %78 = vector.extract_strided_slice %76 {offsets = [8, 0], sizes = [8, 384], strides = [1, 1]} : vector<16x384xf32> to vector<8x384xf32>
    %79 = vector.extract_strided_slice %78 {offsets = [0, 382], sizes = [8, 2], strides = [1, 1]} : vector<8x384xf32> to vector<8x2xf32>
    %80 = vector.extract_strided_slice %78 {offsets = [0, 0], sizes = [8, 382], strides = [1, 1]} : vector<8x384xf32> to vector<8x382xf32>
    %81 = tpu.concatenate %79, %80 in 1 : vector<8x2xf32>, vector<8x382xf32> -> vector<8x384xf32>
    %c2_i32 = arith.constant 2 : i32
    %82 = vector.broadcast %c2_i32 : i32 to vector<1x384xi32>
    %83 = arith.cmpi sge, %29, %82 : vector<1x384xi32>
    %cst_36 = arith.constant 0.000000e+00 : f32
    %84 = vector.shape_cast %83 : vector<1x384xi1> to vector<1x384xi1>
    %85 = vector.broadcast %84 : vector<1x384xi1> to vector<8x384xi1>
    %86 = vector.broadcast %cst_36 : f32 to vector<8x384xf32>
    %87 = arith.select %85, %81, %86 : vector<8x384xi1>, vector<8x384xf32>
    %88 = arith.addf %77, %87 : vector<8x384xf32>
    %c80 = arith.constant 80 : index
    %c0_37 = arith.constant 0 : index
    %89 = vector.load %arg8[%c80, %c0_37] : memref<336x32xf32, #tpu.memory_space<vmem>>, vector<8x1xf32>
    %90 = vector.broadcast %89 : vector<8x1xf32> to vector<8x384xf32>
    %91 = arith.addf %88, %90 : vector<8x384xf32>
    %cst_38 = arith.constant 0.000000e+00 : f32
    %92 = vector.broadcast %cst_38 : f32 to vector<8x384xf32>
    %93 = arith.maximumf %91, %92 : vector<8x384xf32>
    %c88 = arith.constant 88 : index
    %c0_39 = arith.constant 0 : index
    %94 = vector.load %arg8[%c88, %c0_39] : memref<336x32xf32, #tpu.memory_space<vmem>>, vector<16x8xf32>
    %cst_40 = arith.constant dense<0.000000e+00> : vector<16x384xf32>
    %95 = tpu.matmul %94, %93, %cst_40 {dimension_numbers = #tpu.dot_dimension_numbers<[1], [0], [0], [1], [0, 0, 1, 1], [], []>} : vector<16x8xf32>, vector<8x384xf32>, vector<16x384xf32> -> vector<16x384xf32>
    %96 = vector.extract_strided_slice %95 {offsets = [0, 0], sizes = [8, 384], strides = [1, 1]} : vector<16x384xf32> to vector<8x384xf32>
    %97 = vector.extract_strided_slice %95 {offsets = [8, 0], sizes = [8, 384], strides = [1, 1]} : vector<16x384xf32> to vector<8x384xf32>
    %98 = vector.extract_strided_slice %97 {offsets = [0, 382], sizes = [8, 2], strides = [1, 1]} : vector<8x384xf32> to vector<8x2xf32>
    %99 = vector.extract_strided_slice %97 {offsets = [0, 0], sizes = [8, 382], strides = [1, 1]} : vector<8x384xf32> to vector<8x382xf32>
    %100 = tpu.concatenate %98, %99 in 1 : vector<8x2xf32>, vector<8x382xf32> -> vector<8x384xf32>
    %c2_i32_41 = arith.constant 2 : i32
    %101 = vector.broadcast %c2_i32_41 : i32 to vector<1x384xi32>
    %102 = arith.cmpi sge, %29, %101 : vector<1x384xi32>
    %cst_42 = arith.constant 0.000000e+00 : f32
    %103 = vector.shape_cast %102 : vector<1x384xi1> to vector<1x384xi1>
    %104 = vector.broadcast %103 : vector<1x384xi1> to vector<8x384xi1>
    %105 = vector.broadcast %cst_42 : f32 to vector<8x384xf32>
    %106 = arith.select %104, %100, %105 : vector<8x384xi1>, vector<8x384xf32>
    %107 = arith.addf %96, %106 : vector<8x384xf32>
    %c104 = arith.constant 104 : index
    %c0_43 = arith.constant 0 : index
    %108 = vector.load %arg8[%c104, %c0_43] : memref<336x32xf32, #tpu.memory_space<vmem>>, vector<8x1xf32>
    %109 = vector.broadcast %108 : vector<8x1xf32> to vector<8x384xf32>
    %110 = arith.addf %107, %109 : vector<8x384xf32>
    %cst_44 = arith.constant 0.000000e+00 : f32
    %111 = vector.broadcast %cst_44 : f32 to vector<8x384xf32>
    %112 = arith.maximumf %110, %111 : vector<8x384xf32>
    %113 = arith.addf %112, %74 : vector<8x384xf32>
    %cst_45 = arith.constant 0.000000e+00 : f32
    %114 = vector.broadcast %cst_45 : f32 to vector<8x384xf32>
    %115 = arith.maximumf %113, %114 : vector<8x384xf32>
    %116 = tpu.iota {dimensions = array<i32: 0>} : vector<12x384xi32>
    %117 = tpu.iota {dimensions = array<i32: 1>} : vector<12x384xi32>
    %c32_i32_46 = arith.constant 32 : i32
    %118 = vector.broadcast %c32_i32_46 : i32 to vector<12x384xi32>
    %119 = arith.muli %116, %118 : vector<12x384xi32>
    %c31_i32 = arith.constant 31 : i32
    %120 = vector.broadcast %c31_i32 : i32 to vector<12x384xi32>
    %121 = arith.addi %119, %120 : vector<12x384xi32>
    %122 = arith.cmpi eq, %117, %121 : vector<12x384xi32>
    %123 = arith.extui %122 : vector<12x384xi1> to vector<12x384xi32>
    %124 = arith.sitofp %123 : vector<12x384xi32> to vector<12x384xf32>
    %cst_47 = arith.constant dense<0.000000e+00> : vector<12x8xf32>
    %125 = tpu.matmul %124, %115, %cst_47 {dimension_numbers = #tpu.dot_dimension_numbers<[1], [1], [0], [0], [0, 0, 1, 0], [], []>} : vector<12x384xf32>, vector<8x384xf32>, vector<12x8xf32> -> vector<12x8xf32>
    %126 = arith.mulf %125, %125 : vector<12x8xf32>
    %cst_48 = arith.constant dense<0.000000e+00> : vector<12xf32>
    %127 = vector.multi_reduction <add>, %126, %cst_48 [1] : vector<12x8xf32> to vector<12xf32>
    %128 = vector.shape_cast %127 : vector<12xf32> to vector<12x1xf32>
    %cst_49 = arith.constant 1.000000e-24 : f32
    %129 = vector.broadcast %cst_49 : f32 to vector<12x1xf32>
    %130 = arith.maximumf %128, %129 : vector<12x1xf32>
    %131 = math.rsqrt %130 : vector<12x1xf32>
    %132 = vector.broadcast %131 : vector<12x1xf32> to vector<12x8xf32>
    %133 = arith.mulf %125, %132 : vector<12x8xf32>
    %c0_50 = arith.constant 0 : index
    %c0_51 = arith.constant 0 : index
    %134 = vector.load %arg9[%c0_50, %c0_51] : memref<12x8xf32, #tpu.memory_space<vmem>>, vector<12x8xf32>
    tpu.vector_store %arg9[%c0_50, %c0_51], %133 {strides = array<i32>} : memref<12x8xf32, #tpu.memory_space<vmem>>, vector<12x8xf32>,
    %c112 = arith.constant 112 : index
    %c0_52 = arith.constant 0 : index
    %135 = vector.load %arg8[%c112, %c0_52] : memref<336x32xf32, #tpu.memory_space<vmem>>, vector<8x32xf32>
    %cst_53 = arith.constant dense<0.000000e+00> : vector<12x32xf32>
    %136 = tpu.matmul %133, %135, %cst_53 {dimension_numbers = #tpu.dot_dimension_numbers<[1], [0], [0], [1], [0, 0, 1, 1], [], []>} : vector<12x8xf32>, vector<8x32xf32>, vector<12x32xf32> -> vector<12x32xf32>
    %c120 = arith.constant 120 : index
    %c0_54 = arith.constant 0 : index
    %137 = vector.load %arg8[%c120, %c0_54] : memref<336x32xf32, #tpu.memory_space<vmem>>, vector<1x32xf32>
    %138 = vector.broadcast %137 : vector<1x32xf32> to vector<12x32xf32>
    %139 = arith.addf %136, %138 : vector<12x32xf32>
    %cst_55 = arith.constant 0.999994993 : f32
    %140 = vector.broadcast %cst_55 : f32 to vector<12x32xf32>
    %141 = arith.mulf %139, %140 : vector<12x32xf32>
    %cst_56 = arith.constant 0.000000e+00 : f32
    %142 = vector.broadcast %cst_56 : f32 to vector<12x32xf32>
    %143 = arith.maximumf %141, %142 : vector<12x32xf32>
    %c128 = arith.constant 128 : index
    %c0_57 = arith.constant 0 : index
    %144 = vector.load %arg8[%c128, %c0_57] : memref<336x32xf32, #tpu.memory_space<vmem>>, vector<32x8xf32>
    %cst_58 = arith.constant dense<0.000000e+00> : vector<12x8xf32>
    %145 = tpu.matmul %143, %144, %cst_58 {dimension_numbers = #tpu.dot_dimension_numbers<[1], [0], [0], [1], [0, 0, 1, 1], [], []>} : vector<12x32xf32>, vector<32x8xf32>, vector<12x8xf32> -> vector<12x8xf32>
    %c160 = arith.constant 160 : index
    %c0_59 = arith.constant 0 : index
    %146 = vector.load %arg8[%c160, %c0_59] : memref<336x32xf32, #tpu.memory_space<vmem>>, vector<1x8xf32>
    %147 = vector.broadcast %146 : vector<1x8xf32> to vector<12x8xf32>
    %148 = arith.addf %145, %147 : vector<12x8xf32>
    %149 = arith.mulf %148, %148 : vector<12x8xf32>
    %cst_60 = arith.constant dense<0.000000e+00> : vector<12xf32>
    %150 = vector.multi_reduction <add>, %149, %cst_60 [1] : vector<12x8xf32> to vector<12xf32>
    %151 = vector.shape_cast %150 : vector<12xf32> to vector<12x1xf32>
    %cst_61 = arith.constant 1.000000e-24 : f32
    %152 = vector.broadcast %cst_61 : f32 to vector<12x1xf32>
    %153 = arith.maximumf %151, %152 : vector<12x1xf32>
    %154 = math.rsqrt %153 : vector<12x1xf32>
    %155 = vector.broadcast %154 : vector<12x1xf32> to vector<12x8xf32>
    %156 = arith.mulf %148, %155 : vector<12x8xf32>
    %c0_62 = arith.constant 0 : index
    %c0_63 = arith.constant 0 : index
    %157 = vector.load %arg10[%c0_62, %c0_63] : memref<12x8xf32, #tpu.memory_space<vmem>>, vector<12x8xf32>
    tpu.vector_store %arg10[%c0_62, %c0_63], %156 {strides = array<i32>} : memref<12x8xf32, #tpu.memory_space<vmem>>, vector<12x8xf32>,
    %c168 = arith.constant 168 : index
    %c0_64 = arith.constant 0 : index
    %158 = vector.load %arg8[%c168, %c0_64] : memref<336x32xf32, #tpu.memory_space<vmem>>, vector<8x32xf32>
    %cst_65 = arith.constant dense<0.000000e+00> : vector<12x32xf32>
    %159 = tpu.matmul %133, %158, %cst_65 {dimension_numbers = #tpu.dot_dimension_numbers<[1], [0], [0], [1], [0, 0, 1, 1], [], []>} : vector<12x8xf32>, vector<8x32xf32>, vector<12x32xf32> -> vector<12x32xf32>
    %c176 = arith.constant 176 : index
    %c0_66 = arith.constant 0 : index
    %160 = vector.load %arg8[%c176, %c0_66] : memref<336x32xf32, #tpu.memory_space<vmem>>, vector<1x32xf32>
    %161 = vector.broadcast %160 : vector<1x32xf32> to vector<12x32xf32>
    %162 = arith.addf %159, %161 : vector<12x32xf32>
    %cst_67 = arith.constant 0.000000e+00 : f32
    %163 = vector.broadcast %cst_67 : f32 to vector<12x32xf32>
    %164 = arith.cmpf oge, %162, %163 : vector<12x32xf32>
    %cst_68 = arith.constant 2.000000e-01 : f32
    %165 = vector.broadcast %cst_68 : f32 to vector<12x32xf32>
    %166 = arith.mulf %165, %162 : vector<12x32xf32>
    %167 = arith.select %164, %162, %166 : vector<12x32xi1>, vector<12x32xf32>
    %c184 = arith.constant 184 : index
    %c0_69 = arith.constant 0 : index
    %168 = vector.load %arg8[%c184, %c0_69] : memref<336x32xf32, #tpu.memory_space<vmem>>, vector<32x32xf32>
    %cst_70 = arith.constant dense<0.000000e+00> : vector<12x32xf32>
    %169 = tpu.matmul %167, %168, %cst_70 {dimension_numbers = #tpu.dot_dimension_numbers<[1], [0], [0], [1], [0, 0, 1, 1], [], []>} : vector<12x32xf32>, vector<32x32xf32>, vector<12x32xf32> -> vector<12x32xf32>
    %c216 = arith.constant 216 : index
    %c0_71 = arith.constant 0 : index
    %170 = vector.load %arg8[%c216, %c0_71] : memref<336x32xf32, #tpu.memory_space<vmem>>, vector<1x32xf32>
    %171 = vector.broadcast %170 : vector<1x32xf32> to vector<12x32xf32>
    %172 = arith.addf %169, %171 : vector<12x32xf32>
    %cst_72 = arith.constant 0.000000e+00 : f32
    %173 = vector.broadcast %cst_72 : f32 to vector<12x32xf32>
    %174 = arith.cmpf oge, %172, %173 : vector<12x32xf32>
    %cst_73 = arith.constant 2.000000e-01 : f32
    %175 = vector.broadcast %cst_73 : f32 to vector<12x32xf32>
    %176 = arith.mulf %175, %172 : vector<12x32xf32>
    %177 = arith.select %174, %172, %176 : vector<12x32xi1>, vector<12x32xf32>
    %c224 = arith.constant 224 : index
    %c0_74 = arith.constant 0 : index
    %178 = vector.load %arg8[%c224, %c0_74] : memref<336x32xf32, #tpu.memory_space<vmem>>, vector<32x1xf32>
    %cst_75 = arith.constant dense<0.000000e+00> : vector<12x1xf32>
    %179 = tpu.matmul %177, %178, %cst_75 {dimension_numbers = #tpu.dot_dimension_numbers<[1], [0], [0], [1], [0, 0, 1, 1], [], []>} : vector<12x32xf32>, vector<32x1xf32>, vector<12x1xf32> -> vector<12x1xf32>
    %c256 = arith.constant 256 : index
    %c0_76 = arith.constant 0 : index
    %180 = vector.load %arg8[%c256, %c0_76] : memref<336x32xf32, #tpu.memory_space<vmem>>, vector<1x1xf32>
    %181 = vector.broadcast %180 : vector<1x1xf32> to vector<12x1xf32>
    %182 = arith.addf %179, %181 : vector<12x1xf32>
    %183 = arith.negf %182 : vector<12x1xf32>
    %184 = math.exp %183 : vector<12x1xf32>
    %cst_77 = arith.constant 1.000000e+00 : f32
    %185 = vector.broadcast %cst_77 : f32 to vector<12x1xf32>
    %186 = arith.addf %185, %184 : vector<12x1xf32>
    %187 = arith.divf %185, %186 : vector<12x1xf32>
    %188 = vector.extract_strided_slice %187 {offsets = [0, 0], sizes = [4, 1], strides = [1, 1]} : vector<12x1xf32> to vector<4x1xf32>
    %c0_78 = arith.constant 0 : index
    %c0_79 = arith.constant 0 : index
    %189 = vector.load %arg11[%c0_78, %c0_79] : memref<4x1xf32, #tpu.memory_space<vmem>>, vector<4x1xf32>
    tpu.vector_store %arg11[%c0_78, %c0_79], %188 {strides = array<i32>} : memref<4x1xf32, #tpu.memory_space<vmem>>, vector<4x1xf32>,
    %190 = vector.extract_strided_slice %133 {offsets = [0, 0], sizes = [2, 8], strides = [1, 1]} : vector<12x8xf32> to vector<2x8xf32>
    %c0_80 = arith.constant 0 : index
    %c0_81 = arith.constant 0 : index
    %191 = vector.load %arg7[%c0_80, %c0_81] : memref<2x4xf32, #tpu.memory_space<vmem>>, vector<2x4xf32>
    %c264 = arith.constant 264 : index
    %c0_82 = arith.constant 0 : index
    %192 = vector.load %arg8[%c264, %c0_82] : memref<336x32xf32, #tpu.memory_space<vmem>>, vector<8x32xf32>
    %cst_83 = arith.constant dense<0.000000e+00> : vector<2x32xf32>
    %193 = tpu.matmul %190, %192, %cst_83 {dimension_numbers = #tpu.dot_dimension_numbers<[1], [0], [0], [1], [0, 0, 1, 1], [], []>} : vector<2x8xf32>, vector<8x32xf32>, vector<2x32xf32> -> vector<2x32xf32>
    %c272 = arith.constant 272 : index
    %c0_84 = arith.constant 0 : index
    %194 = vector.load %arg8[%c272, %c0_84] : memref<336x32xf32, #tpu.memory_space<vmem>>, vector<4x32xf32>
    %cst_85 = arith.constant dense<0.000000e+00> : vector<2x32xf32>
    %195 = tpu.matmul %191, %194, %cst_85 {dimension_numbers = #tpu.dot_dimension_numbers<[1], [0], [0], [1], [0, 0, 1, 1], [], []>} : vector<2x4xf32>, vector<4x32xf32>, vector<2x32xf32> -> vector<2x32xf32>
    %196 = arith.addf %193, %195 : vector<2x32xf32>
    %c280 = arith.constant 280 : index
    %c0_86 = arith.constant 0 : index
    %197 = vector.load %arg8[%c280, %c0_86] : memref<336x32xf32, #tpu.memory_space<vmem>>, vector<1x32xf32>
    %198 = vector.broadcast %197 : vector<1x32xf32> to vector<2x32xf32>
    %199 = arith.addf %196, %198 : vector<2x32xf32>
    %cst_87 = arith.constant 0.999994993 : f32
    %200 = vector.broadcast %cst_87 : f32 to vector<2x32xf32>
    %201 = arith.mulf %199, %200 : vector<2x32xf32>
    %cst_88 = arith.constant 0.000000e+00 : f32
    %202 = vector.broadcast %cst_88 : f32 to vector<2x32xf32>
    %203 = arith.maximumf %201, %202 : vector<2x32xf32>
    %c288 = arith.constant 288 : index
    %c0_89 = arith.constant 0 : index
    %204 = vector.load %arg8[%c288, %c0_89] : memref<336x32xf32, #tpu.memory_space<vmem>>, vector<32x12xf32>
    %cst_90 = arith.constant dense<0.000000e+00> : vector<2x12xf32>
    %205 = tpu.matmul %203, %204, %cst_90 {dimension_numbers = #tpu.dot_dimension_numbers<[1], [0], [0], [1], [0, 0, 1, 1], [], []>} : vector<2x32xf32>, vector<32x12xf32>, vector<2x12xf32> -> vector<2x12xf32>
    %c320 = arith.constant 320 : index
    %c0_91 = arith.constant 0 : index
    %206 = vector.load %arg8[%c320, %c0_91] : memref<336x32xf32, #tpu.memory_space<vmem>>, vector<1x12xf32>
    %207 = vector.broadcast %206 : vector<1x12xf32> to vector<2x12xf32>
    %208 = arith.addf %205, %207 : vector<2x12xf32>
    %c328 = arith.constant 328 : index
    %c0_92 = arith.constant 0 : index
    %209 = vector.load %arg8[%c328, %c0_92] : memref<336x32xf32, #tpu.memory_space<vmem>>, vector<1x12xf32>
    %210 = vector.broadcast %209 : vector<1x12xf32> to vector<2x12xf32>
    %211 = arith.subf %208, %210 : vector<2x12xf32>
    %212 = arith.mulf %211, %211 : vector<2x12xf32>
    %cst_93 = arith.constant dense<0.000000e+00> : vector<2xf32>
    %213 = vector.multi_reduction <add>, %212, %cst_93 [1] : vector<2x12xf32> to vector<2xf32>
    %214 = vector.shape_cast %213 : vector<2xf32> to vector<2x1xf32>
    %c0_94 = arith.constant 0 : index
    %c0_95 = arith.constant 0 : index
    %215 = vector.load %arg12[%c0_94, %c0_95] : memref<2x1xf32, #tpu.memory_space<vmem>>, vector<2x1xf32>
    tpu.vector_store %arg12[%c0_94, %c0_95], %214 {strides = array<i32>} : memref<2x1xf32, #tpu.memory_space<vmem>>, vector<2x1xf32>,
    return
  }
  func.func @transform_0(%arg0: i32) -> (i32, i32, i32) {
    %c0_i32 = arith.constant 0 : i32
    %c0_i32_0 = arith.constant 0 : i32
    %c0_i32_1 = arith.constant 0 : i32
    %c0_i32_2 = arith.constant 0 : i32
    return %c0_i32, %c0_i32_0, %c0_i32_1 : i32, i32, i32
  }
  func.func @transform_1(%arg0: i32) -> (i32, i32, i32) {
    %c0_i32 = arith.constant 0 : i32
    %c0_i32_0 = arith.constant 0 : i32
    %c0_i32_1 = arith.constant 0 : i32
    %c0_i32_2 = arith.constant 0 : i32
    return %c0_i32, %c0_i32_0, %c0_i32_1 : i32, i32, i32
  }
  func.func @transform_2(%arg0: i32) -> (i32, i32, i32) {
    %c0_i32 = arith.constant 0 : i32
    %c0_i32_0 = arith.constant 0 : i32
    %c0_i32_1 = arith.constant 0 : i32
    %c0_i32_2 = arith.constant 0 : i32
    return %c0_i32, %c0_i32_0, %c0_i32_1 : i32, i32, i32
  }
  func.func @transform_3(%arg0: i32) -> (i32, i32, i32) {
    %c0_i32 = arith.constant 0 : i32
    %c0_i32_0 = arith.constant 0 : i32
    %c0_i32_1 = arith.constant 0 : i32
    %c0_i32_2 = arith.constant 0 : i32
    return %c0_i32, %c0_i32_0, %c0_i32_1 : i32, i32, i32
  }
  func.func @transform_4(%arg0: i32) -> (i32, i32, i32) {
    %c0_i32 = arith.constant 0 : i32
    %c0_i32_0 = arith.constant 0 : i32
    %c0_i32_1 = arith.constant 0 : i32
    %c0_i32_2 = arith.constant 0 : i32
    return %c0_i32, %c0_i32_0, %c0_i32_1 : i32, i32, i32
  }
  func.func @transform_5(%arg0: i32) -> (i32, i32, i32) {
    %c0_i32 = arith.constant 0 : i32
    %c0_i32_0 = arith.constant 0 : i32
    %c0_i32_1 = arith.constant 0 : i32
    %c0_i32_2 = arith.constant 0 : i32
    return %c0_i32, %c0_i32_0, %c0_i32_1 : i32, i32, i32
  }
  func.func @transform_6(%arg0: i32) -> (i32, i32) {
    %c0_i32 = arith.constant 0 : i32
    %c0_i32_0 = arith.constant 0 : i32
    %c0_i32_1 = arith.constant 0 : i32
    return %c0_i32, %c0_i32_0 : i32, i32
  }
  func.func @transform_7(%arg0: i32) -> (i32, i32) {
    %c0_i32 = arith.constant 0 : i32
    %c0_i32_0 = arith.constant 0 : i32
    %c0_i32_1 = arith.constant 0 : i32
    return %c0_i32, %c0_i32_0 : i32, i32
  }
  func.func @transform_8(%arg0: i32) -> (i32, i32) {
    %c0_i32 = arith.constant 0 : i32
    %c0_i32_0 = arith.constant 0 : i32
    %c0_i32_1 = arith.constant 0 : i32
    return %c0_i32, %c0_i32_0 : i32, i32
  }
  func.func @transform_9(%arg0: i32) -> (i32, i32) {
    %c0_i32 = arith.constant 0 : i32
    %c0_i32_0 = arith.constant 0 : i32
    %c0_i32_1 = arith.constant 0 : i32
    return %c0_i32, %c0_i32_0 : i32, i32
  }
  func.func @transform_10(%arg0: i32) -> (i32, i32) {
    %c0_i32 = arith.constant 0 : i32
    %c0_i32_0 = arith.constant 0 : i32
    %c0_i32_1 = arith.constant 0 : i32
    return %c0_i32, %c0_i32_0 : i32, i32
  }
  func.func @transform_11(%arg0: i32) -> (i32, i32) {
    %c0_i32 = arith.constant 0 : i32
    %c0_i32_0 = arith.constant 0 : i32
    %c0_i32_1 = arith.constant 0 : i32
    return %c0_i32, %c0_i32_0 : i32, i32
  }
}

</mosaic_0001>

<llo_original>
// kernel: dacad_forward.1
$region0: #{dacad_forward.1}
  #allocation0 [shape = 'u32[]', space=smem, size = 0x4, offset = 0x4, fixed_abs, tag = 'smem constant byte address 0x4 - core index']
  #allocation1 [shape = 'u32[144,128]{1,0:T(1,128)}', space=vmem, size = 0x12000, scoped, tag = 'internal scratch']
  %s0 = inlined_call_operand.vmem [shape: f32[2,32,4], index: 0, kind: input, shape index: {}]
  %s1 = inlined_call_operand.vmem [shape: f32[2,32,4], index: 1, kind: input, shape index: {}]
  %s2 = inlined_call_operand.vmem [shape: f32[2,32,4], index: 2, kind: input, shape index: {}]
  %s3 = inlined_call_operand.vmem [shape: f32[2,32,4], index: 3, kind: input, shape index: {}]
  %s4 = inlined_call_operand.vmem [shape: f32[2,32,4], index: 4, kind: input, shape index: {}]
  %s5 = inlined_call_operand.vmem [shape: f32[2,32,4], index: 5, kind: input, shape index: {}]
  %s6 = inlined_call_operand.vmem [shape: f32[2,4], index: 6, kind: input, shape index: {}]
  %s7 = inlined_call_operand.vmem [shape: f32[336,32], index: 7, kind: input, shape index: {}]
  %s8 = inlined_call_operand.vmem [shape: f32[12,8], index: 8, kind: output, shape index: {0}]
  %s9 = inlined_call_operand.vmem [shape: f32[12,8], index: 9, kind: output, shape index: {1}]
  %s10 = inlined_call_operand.vmem [shape: f32[4,1], index: 10, kind: output, shape index: {2}]
  %s11 = inlined_call_operand.vmem [shape: f32[2,1], index: 11, kind: output, shape index: {3}]
  %12 = xla_tuple %s8, %s9, %s10, %s11
  %s13 = sld [smem:[#allocation0]]
  $region66: #{dacad_forward.1} parent=0
    _
  %s15 = ssub.s32 1, %s13
  %s16 = scalar_select 0, %s15, %s13
  // Predicated region
  $region2: #{dacad_forward.1} parent=0 // pred_check
    _
  $region3: #{dacad_forward.1} parent=0 // pred_check_branch
    %18 = sbr.rel (0) target = $region5
  $region4: #{dacad_forward.1} parent=0 // pred_region
    _
  $region5: #{dacad_forward.1} parent=0 // pred_fallthru
    _
  // Predicated region
  $region6: #{dacad_forward.1} parent=0 // pred_check
    _
  $region7: #{dacad_forward.1} parent=0 // pred_check_branch
    %20 = sbr.rel (0) target = $region9
  $region8: #{dacad_forward.1} parent=0 // pred_region
    _
  $region9: #{dacad_forward.1} parent=0 // pred_fallthru
    _
  // Predicated region
  $region10: #{dacad_forward.1} parent=0 // pred_check
    _
  $region11: #{dacad_forward.1} parent=0 // pred_check_branch
    %22 = sbr.rel (0) target = $region13
  $region12: #{dacad_forward.1} parent=0 // pred_region
    _
  $region13: #{dacad_forward.1} parent=0 // pred_fallthru
    _
  // Predicated region
  $region14: #{dacad_forward.1} parent=0 // pred_check
    _
  $region15: #{dacad_forward.1} parent=0 // pred_check_branch
    %24 = sbr.rel (0) target = $region17
  $region16: #{dacad_forward.1} parent=0 // pred_region
    _
  $region17: #{dacad_forward.1} parent=0 // pred_fallthru
    _
  // Predicated region
  $region18: #{dacad_forward.1} parent=0 // pred_check
    _
  $region19: #{dacad_forward.1} parent=0 // pred_check_branch
    %26 = sbr.rel (0) target = $region21
  $region20: #{dacad_forward.1} parent=0 // pred_region
    _
  $region21: #{dacad_forward.1} parent=0 // pred_fallthru
    _
  // Predicated region
  $region22: #{dacad_forward.1} parent=0 // pred_check
    _
  $region23: #{dacad_forward.1} parent=0 // pred_check_branch
    %28 = sbr.rel (0) target = $region25
  $region24: #{dacad_forward.1} parent=0 // pred_region
    _
  $region25: #{dacad_forward.1} parent=0 // pred_fallthru
    _
  // Predicated region
  $region26: #{dacad_forward.1} parent=0 // pred_check
    _
  $region27: #{dacad_forward.1} parent=0 // pred_check_branch
    %30 = sbr.rel (0) target = $region29
  $region28: #{dacad_forward.1} parent=0 // pred_region
    _
  $region29: #{dacad_forward.1} parent=0 // pred_fallthru
    _
  // Predicated region
  $region30: #{dacad_forward.1} parent=0 // pred_check
    _
  $region31: #{dacad_forward.1} parent=0 // pred_check_branch
    %32 = sbr.rel (0) target = $region33
  $region32: #{dacad_forward.1} parent=0 // pred_region
    _
  $region33: #{dacad_forward.1} parent=0 // pred_fallthru
    _
  %v33 = vld [vmem:[%s0] sm:$0xff]
  %v34 = vld [vmem:[%s0 + $0x8] sm:$0xff]
  %v35 = vld [vmem:[%s0 + $0x10] sm:$0xff]
  %v36 = vld [vmem:[%s0 + $0x18] sm:$0xff]
  %v37 = vld [vmem:[%s0 + $0x20] sm:$0xff]
  %v38 = vld [vmem:[%s0 + $0x28] sm:$0xff]
  %v39 = vld [vmem:[%s0 + $0x30] sm:$0xff]
  %v40 = vld [vmem:[%s0 + $0x38] sm:$0xff]
  %v41 = vld [vmem:[%s1] sm:$0xff]
  %v42 = vld [vmem:[%s1 + $0x8] sm:$0xff]
  %v43 = vld [vmem:[%s1 + $0x10] sm:$0xff]
  %v44 = vld [vmem:[%s1 + $0x18] sm:$0xff]
  %v45 = vld [vmem:[%s1 + $0x20] sm:$0xff]
  %v46 = vld [vmem:[%s1 + $0x28] sm:$0xff]
  %v47 = vld [vmem:[%s1 + $0x30] sm:$0xff]
  %v48 = vld [vmem:[%s1 + $0x38] sm:$0xff]
  %v49 = vld [vmem:[%s2] sm:$0xff]
  %v50 = vld [vmem:[%s2 + $0x8] sm:$0xff]
  %v51 = vld [vmem:[%s2 + $0x10] sm:$0xff]
  %v52 = vld [vmem:[%s2 + $0x18] sm:$0xff]
  %v53 = vld [vmem:[%s2 + $0x20] sm:$0xff]
  %v54 = vld [vmem:[%s2 + $0x28] sm:$0xff]
  %v55 = vld [vmem:[%s2 + $0x30] sm:$0xff]
  %v56 = vld [vmem:[%s2 + $0x38] sm:$0xff]
  %v57 = vld [vmem:[%s3] sm:$0xff]
  %v58 = vld [vmem:[%s3 + $0x8] sm:$0xff]
  %v59 = vld [vmem:[%s3 + $0x10] sm:$0xff]
  %v60 = vld [vmem:[%s3 + $0x18] sm:$0xff]
  %v61 = vld [vmem:[%s3 + $0x20] sm:$0xff]
  %v62 = vld [vmem:[%s3 + $0x28] sm:$0xff]
  %v63 = vld [vmem:[%s3 + $0x30] sm:$0xff]
  %v64 = vld [vmem:[%s3 + $0x38] sm:$0xff]
  %v65 = vld [vmem:[%s4] sm:$0xff]
  %v66 = vld [vmem:[%s4 + $0x8] sm:$0xff]
  %v67 = vld [vmem:[%s4 + $0x10] sm:$0xff]
  %v68 = vld [vmem:[%s4 + $0x18] sm:$0xff]
  %v69 = vld [vmem:[%s4 + $0x20] sm:$0xff]
  %v70 = vld [vmem:[%s4 + $0x28] sm:$0xff]
  %v71 = vld [vmem:[%s4 + $0x30] sm:$0xff]
  %v72 = vld [vmem:[%s4 + $0x38] sm:$0xff]
  %v73 = vld [vmem:[%s5] sm:$0xff]
  %v74 = vld [vmem:[%s5 + $0x8] sm:$0xff]
  %v75 = vld [vmem:[%s5 + $0x10] sm:$0xff]
  %v76 = vld [vmem:[%s5 + $0x18] sm:$0xff]
  %v77 = vld [vmem:[%s5 + $0x20] sm:$0xff]
  %v78 = vld [vmem:[%s5 + $0x28] sm:$0xff]
  %v79 = vld [vmem:[%s5 + $0x30] sm:$0xff]
  %v80 = vld [vmem:[%s5 + $0x38] sm:$0xff]
  %v81 = vlaneseq
  %v82 = vand.u32 %v81, 127
  %v83 = vadd.s32 %v82, 128
  %v84 = vadd.s32 %v82, 256
  %vm85 = vcmp.lt.s32.totalorder %v82, 0
  %v86 = vsub.s32 0, %v82
  %v87 = vsel %vm85, %v86, %v82
  %v88 = vshrl.u32 %v87, 5
  %v89 = vand.u32 %v87, 31
  %v90 = vsub.s32 0, %v89
  %v91 = vsel %vm85, %v90, %v89
  %vm92 = vcmp.lt.s32.totalorder %v83, 0
  %v93 = vsub.s32 0, %v83
  %v94 = vsel %vm92, %v93, %v83
  %v95 = vshrl.u32 %v94, 5
  %v96 = vand.u32 %v94, 31
  %v97 = vsub.s32 0, %v96
  %v98 = vsel %vm92, %v97, %v96
  %vm99 = vcmp.lt.s32.totalorder %v84, 0
  %v100 = vsub.s32 0, %v84
  %v101 = vsel %vm99, %v100, %v84
  %v102 = vshrl.u32 %v101, 5
  %v103 = vand.u32 %v101, 31
  %v104 = vsub.s32 0, %v103
  %v105 = vsel %vm99, %v104, %v103
  %vm106 = vcmp.ne.s32.totalorder %v91, 0
  %vm107 = vcmp.ne.s32.totalorder %v98, 0
  %vm108 = vcmp.ne.s32.totalorder %v105, 0
  %vm109 = vcmp.lt.s32.totalorder %v91, 0
  %vm110 = vcmp.lt.s32.totalorder %v98, 0
  %vm111 = vcmp.lt.s32.totalorder %v105, 0
  %vm112 = vmand %vm109, %vm106
  %vm113 = vmand %vm110, %vm107
  %vm114 = vmand %vm111, %vm108
  %v115 = vadd.s32 %v91, 32
  %v116 = vadd.s32 %v98, 32
  %v117 = vadd.s32 %v105, 32
  %v118 = vsel %vm112, %v115, %v91
  %v119 = vsel %vm113, %v116, %v98
  %v120 = vsel %vm114, %v117, %v105
  %v121 = vld [vmem:[%s7] sm:$0xff]
  %v122 = vld [vmem:[%s7 + $0x8] sm:$0xff]
  %v123 = vld [vmem:[%s7 + $0x10] sm:$0xff]
  %vm124 = vcmask 31744
  %v126 = vsel %vm124, %v121, 0
  %v129 = vsel %vm124, %v122, 0
  %v132 = vsel %vm124, %v123, 0
  %v135 = vsel %vm124, %v33, 0
  %v138 = vsel %vm124, %v34, 0
  %v141 = vsel %vm124, %v35, 0
  %v144 = vsel %vm124, %v36, 0
  %v147 = vsel %vm124, %v37, 0
  %v150 = vsel %vm124, %v38, 0
  %v153 = vsel %vm124, %v39, 0
  %v156 = vsel %vm124, %v40, 0
  %v159 = vsel %vm124, %v41, 0
  %v162 = vsel %vm124, %v42, 0
  %v165 = vsel %vm124, %v43, 0
  %v168 = vsel %vm124, %v44, 0
  %v171 = vsel %vm124, %v45, 0
  %v174 = vsel %vm124, %v46, 0
  %v177 = vsel %vm124, %v47, 0
  %v180 = vsel %vm124, %v48, 0
  %v183 = vsel %vm124, %v49, 0
  %v186 = vsel %vm124, %v50, 0
  %v189 = vsel %vm124, %v51, 0
  %v192 = vsel %vm124, %v52, 0
  %v195 = vsel %vm124, %v53, 0
  %v198 = vsel %vm124, %v54, 0
  %v201 = vsel %vm124, %v55, 0
  %v204 = vsel %vm124, %v56, 0
  %v207 = vsel %vm124, %v57, 0
  %v210 = vsel %vm124, %v58, 0
  %v213 = vsel %vm124, %v59, 0
  %v216 = vsel %vm124, %v60, 0
  %v219 = vsel %vm124, %v61, 0
  %v222 = vsel %vm124, %v62, 0
  %v225 = vsel %vm124, %v63, 0
  %v228 = vsel %vm124, %v64, 0
  %v231 = vsel %vm124, %v65, 0
  %v234 = vsel %vm124, %v66, 0
  %v237 = vsel %vm124, %v67, 0
  %v240 = vsel %vm124, %v68, 0
  %v243 = vsel %vm124, %v69, 0
  %v246 = vsel %vm124, %v70, 0
  %v249 = vsel %vm124, %v71, 0
  %v252 = vsel %vm124, %v72, 0
  %v255 = vsel %vm124, %v73, 0
  %v258 = vsel %vm124, %v74, 0
  %v261 = vsel %vm124, %v75, 0
  %v264 = vsel %vm124, %v76, 0
  %v267 = vsel %vm124, %v77, 0
  %v270 = vsel %vm124, %v78, 0
  %v273 = vsel %vm124, %v79, 0
  %v276 = vsel %vm124, %v80, 0
  %278 = vmatprep.subr.mxu0 0.0
  %279 = vmatpush1.xpose.msra.mxu0 %v135
  %280 = vmatprep.subr.mxu0 0.0
  %281 = vmatpush1.xpose.msra.mxu0 %v138
  %282 = vmatprep.subr.mxu0 0.0
  %283 = vmatpush1.xpose.msra.mxu0 %v141
  %284 = vmatprep.subr.mxu0 0.0
  %285 = vmatpush1.xpose.msra.mxu0 %v144
  %286 = vmatprep.subr.mxu0 0.0
  %287 = vmatpush1.xpose.msra.mxu0 %v147
  %288 = vmatprep.subr.mxu0 0.0
  %289 = vmatpush1.xpose.msra.mxu0 %v150
  %290 = vmatprep.subr.mxu0 0.0
  %291 = vmatpush1.xpose.msra.mxu0 %v153
  %292 = vmatprep.subr.mxu0 0.0
  %293 = vmatpush1.xpose.msra.mxu0 %v156
  %294 = vmatprep.subr.mxu0 0.0
  %295 = vmatpush1.xpose.msra.mxu0 %v159
  %296 = vmatprep.subr.mxu0 0.0
  %297 = vmatpush1.xpose.msra.mxu0 %v162
  %298 = vmatprep.subr.mxu0 0.0
  %299 = vmatpush1.xpose.msra.mxu0 %v165
  %300 = vmatprep.subr.mxu0 0.0
  %301 = vmatpush1.xpose.msra.mxu0 %v168
  %302 = vmatprep.subr.mxu0 0.0
  %303 = vmatpush1.xpose.msra.mxu0 %v171
  %304 = vmatprep.subr.mxu0 0.0
  %305 = vmatpush1.xpose.msra.mxu0 %v174
  %306 = vmatprep.subr.mxu0 0.0
  %307 = vmatpush1.xpose.msra.mxu0 %v177
  %308 = vmatprep.subr.mxu0 0.0
  %309 = vmatpush1.xpose.msra.mxu0 %v180
  %310 = vmatprep.subr.mxu0 0.0
  %311 = vmatpush1.xpose.msra.mxu0 %v183
  %312 = vmatprep.subr.mxu0 0.0
  %313 = vmatpush1.xpose.msra.mxu0 %v186
  %314 = vmatprep.subr.mxu0 0.0
  %315 = vmatpush1.xpose.msra.mxu0 %v189
  %316 = vmatprep.subr.mxu0 0.0
  %317 = vmatpush1.xpose.msra.mxu0 %v192
  %318 = vmatprep.subr.mxu0 0.0
  %319 = vmatpush1.xpose.msra.mxu0 %v195
  %320 = vmatprep.subr.mxu0 0.0
  %321 = vmatpush1.xpose.msra.mxu0 %v198
  %322 = vmatprep.subr.mxu0 0.0
  %323 = vmatpush1.xpose.msra.mxu0 %v201
  %324 = vmatprep.subr.mxu0 0.0
  %325 = vmatpush1.xpose.msra.mxu0 %v204
  %326 = vmatprep.subr.mxu0 0.0
  %327 = vmatpush1.xpose.msra.mxu0 %v207
  %328 = vmatprep.subr.mxu0 0.0
  %329 = vmatpush1.xpose.msra.mxu0 %v210
  %330 = vmatprep.subr.mxu0 0.0
  %331 = vmatpush1.xpose.msra.mxu0 %v213
  %332 = vmatprep.subr.mxu0 0.0
  %333 = vmatpush1.xpose.msra.mxu0 %v216
  %334 = vmatprep.subr.mxu0 0.0
  %335 = vmatpush1.xpose.msra.mxu0 %v219
  %336 = vmatprep.subr.mxu0 0.0
  %337 = vmatpush1.xpose.msra.mxu0 %v222
  %338 = vmatprep.subr.mxu0 0.0
  %339 = vmatpush1.xpose.msra.mxu0 %v225
  %340 = vmatprep.subr.mxu0 0.0
  %341 = vmatpush1.xpose.msra.mxu0 %v228
  %342 = vmatprep.mubr.f32.mxu0 0.0
  %343 = vmatmul.mubr.f32.gmra.mrb[0].mxu0 %v126
  %v344 = vpop.f32.mrb[0].mxu0
  %v345 = vadd.f32 0.0, %v344
  %v346 = vpop.f32.mrb[0].mxu0
  %v347 = vadd.f32 0.0, %v346
  %348 = vmatprep.mubr.f32.mxu0 0.0
  %349 = vmatmul.mubr.f32.gmra.mrb[0].mxu0 %v129
  %v350 = vpop.f32.mrb[0].mxu0
  %v351 = vadd.f32 0.0, %v350
  %v352 = vpop.f32.mrb[0].mxu0
  %v353 = vadd.f32 0.0, %v352
  %354 = vmatprep.mubr.f32.mxu0 0.0
  %355 = vmatmul.mubr.f32.gmra.mrb[0].mxu0 %v132
  %v356 = vpop.f32.mrb[0].mxu0
  %v357 = vadd.f32 0.0, %v356
  %v358 = vpop.f32.mrb[0].mxu0
  %v359 = vadd.f32 0.0, %v358
  %360 = vdwg.mxu0
  %361 = vmatprep.subr.mxu0 0.0
  %362 = vmatpush1.xpose.msra.mxu0 %v231
  %363 = vmatprep.subr.mxu0 0.0
  %364 = vmatpush1.xpose.msra.mxu0 %v234
  %365 = vmatprep.subr.mxu0 0.0
  %366 = vmatpush1.xpose.msra.mxu0 %v237
  %367 = vmatprep.subr.mxu0 0.0
  %368 = vmatpush1.xpose.msra.mxu0 %v240
  %369 = vmatprep.subr.mxu0 0.0
  %370 = vmatpush1.xpose.msra.mxu0 %v243
  %371 = vmatprep.subr.mxu0 0.0
  %372 = vmatpush1.xpose.msra.mxu0 %v246
  %373 = vmatprep.subr.mxu0 0.0
  %374 = vmatpush1.xpose.msra.mxu0 %v249
  %375 = vmatprep.subr.mxu0 0.0
  %376 = vmatpush1.xpose.msra.mxu0 %v252
  %377 = vmatprep.subr.mxu0 0.0
  %378 = vmatpush1.xpose.msra.mxu0 %v255
  %379 = vmatprep.subr.mxu0 0.0
  %380 = vmatpush1.xpose.msra.mxu0 %v258
  %381 = vmatprep.subr.mxu0 0.0
  %382 = vmatpush1.xpose.msra.mxu0 %v261
  %383 = vmatprep.subr.mxu0 0.0
  %384 = vmatpush1.xpose.msra.mxu0 %v264
  %385 = vmatprep.subr.mxu0 0.0
  %386 = vmatpush1.xpose.msra.mxu0 %v267
  %387 = vmatprep.subr.mxu0 0.0
  %388 = vmatpush1.xpose.msra.mxu0 %v270
  %389 = vmatprep.subr.mxu0 0.0
  %390 = vmatpush1.xpose.msra.mxu0 %v273
  %391 = vmatprep.subr.mxu0 0.0
  %392 = vmatpush1.xpose.msra.mxu0 %v276
  %393 = vmatprep.subr.mxu0 0.0
  %394 = vmatpush1.xpose.msra.mxu0 0.0
  %395 = vmatprep.subr.mxu0 0.0
  %396 = vmatpush1.xpose.msra.mxu0 0.0
  %397 = vmatprep.subr.mxu0 0.0
  %398 = vmatpush1.xpose.msra.mxu0 0.0
  %399 = vmatprep.subr.mxu0 0.0
  %400 = vmatpush1.xpose.msra.mxu0 0.0
  %401 = vmatprep.subr.mxu0 0.0
  %402 = vmatpush1.xpose.msra.mxu0 0.0
  %403 = vmatprep.subr.mxu0 0.0
  %404 = vmatpush1.xpose.msra.mxu0 0.0
  %405 = vmatprep.subr.mxu0 0.0
  %406 = vmatpush1.xpose.msra.mxu0 0.0
  %407 = vmatprep.subr.mxu0 0.0
  %408 = vmatpush1.xpose.msra.mxu0 0.0
  %409 = vmatprep.subr.mxu0 0.0
  %410 = vmatpush1.xpose.msra.mxu0 0.0
  %411 = vmatprep.subr.mxu0 0.0
  %412 = vmatpush1.xpose.msra.mxu0 0.0
  %413 = vmatprep.subr.mxu0 0.0
  %414 = vmatpush1.xpose.msra.mxu0 0.0
  %415 = vmatprep.subr.mxu0 0.0
  %416 = vmatpush1.xpose.msra.mxu0 0.0
  %417 = vmatprep.subr.mxu0 0.0
  %418 = vmatpush1.xpose.msra.mxu0 0.0
  %419 = vmatprep.subr.mxu0 0.0
  %420 = vmatpush1.xpose.msra.mxu0 0.0
  %421 = vmatprep.subr.mxu0 0.0
  %422 = vmatpush1.xpose.msra.mxu0 0.0
  %423 = vmatprep.subr.mxu0 0.0
  %424 = vmatpush1.xpose.msra.mxu0 0.0
  %425 = vmatprep.mubr.f32.mxu0 0.0
  %426 = vmatmul.mubr.f32.gmra.mrb[0].mxu0 %v126
  %v427 = vpop.f32.mrb[0].mxu0
  %v428 = vadd.f32 0.0, %v427
  %v429 = vpop.f32.mrb[0].mxu0
  %430 = vmatprep.mubr.f32.mxu0 0.0
  %431 = vmatmul.mubr.f32.gmra.mrb[0].mxu0 %v129
  %v432 = vpop.f32.mrb[0].mxu0
  %v433 = vadd.f32 0.0, %v432
  %v434 = vpop.f32.mrb[0].mxu0
  %435 = vmatprep.mubr.f32.mxu0 0.0
  %436 = vmatmul.mubr.f32.gmra.mrb[0].mxu0 %v132
  %v437 = vpop.f32.mrb[0].mxu0
  %v438 = vadd.f32 0.0, %v437
  %v439 = vpop.f32.mrb[0].mxu0
  %440 = vdwg.mxu0
  %441 = vrot.lane.b32.xlu0 %v351, 1
  %v442 = vpop.permute.xlu0 %441
  %443 = vrot.lane.b32.xlu0 %v353, 1
  %v444 = vpop.permute.xlu0 %443
  %445 = vrot.lane.b32.xlu0 %v433, 1
  %v446 = vpop.permute.xlu0 %445
  %vm447 = vcmp.lt.s32.totalorder %v82, 1
  %v448 = vsel %vm447, %v444, %v446
  %v449 = vsel %vm447, %v442, %v444
  %v450 = vsel %vm447, %v446, %v442
  %vm451 = vcmp.ge.s32.totalorder %v118, 1
  %vm452 = vcmp.ge.s32.totalorder %v119, 1
  %vm453 = vcmp.ge.s32.totalorder %v120, 1
  %v454 = vsel %vm451, 1, 0
  %v455 = vsel %vm452, 1, 0
  %v456 = vsel %vm453, 1, 0
  %vm457 = vcmp.eq.s32.totalorder %v454, 1
  %vm458 = vcmp.eq.s32.totalorder %v455, 1
  %vm459 = vcmp.eq.s32.totalorder %v456, 1
  %v460 = vsel %vm457, %v450, 0.0
  %v461 = vsel %vm458, %v449, 0.0
  %v462 = vsel %vm459, %v448, 0.0
  %v463 = vadd.f32 %v345, %v460
  %v464 = vadd.f32 %v347, %v461
  %v465 = vadd.f32 %v428, %v462
  %v466 = vld [vmem:[%s7 + $0x18] sm:$0xff]
  %468 = vset.pattern.permute.xlu0 0
  %469 = vperm.xlu0 %468, %v466
  %v470 = vpop.permute.xlu0 %469
  %v472 = vadd.f32 %v463, %v470
  %v473 = vadd.f32 %v464, %v470
  %v474 = vadd.f32 %v465, %v470
  %v475 = vmax.f32 %v472, 0.0
  %v476 = vmax.f32 %v473, 0.0
  %v477 = vmax.f32 %v474, 0.0
  %v478 = vld [vmem:[%s7 + $0x20] sm:$0xff]
  %v479 = vld [vmem:[%s7 + $0x28] sm:$0xff]
  %vm480 = vcmask 64512
  %v482 = vsel %vm480, %v478, 0
  %v485 = vsel %vm480, %v479, 0
  %487 = vmatprep.subr.mxu0 %v476
  %488 = vmatpush1.msra.mxu0 %v475
  %489 = vmatprep.subr.mxu0 0.0
  %490 = vmatpush1.msra.mxu0 0.0
  %491 = vmatprep.subr.mxu0 0.0
  %492 = vmatpush1.msra.mxu0 0.0
  %493 = vmatprep.subr.mxu0 0.0
  %494 = vmatpush1.msra.mxu0 0.0
  %495 = vmatprep.subr.mxu0 0.0
  %496 = vmatpush1.msra.mxu0 0.0
  %497 = vmatprep.subr.mxu0 0.0
  %498 = vmatpush1.msra.mxu0 0.0
  %499 = vmatprep.subr.mxu0 0.0
  %500 = vmatpush1.msra.mxu0 0.0
  %501 = vmatprep.subr.mxu0 0.0
  %502 = vmatpush1.msra.mxu0 0.0
  %503 = vmatprep.subr.mxu0 0.0
  %504 = vmatpush1.msra.mxu0 0.0
  %505 = vmatprep.subr.mxu0 0.0
  %506 = vmatpush1.msra.mxu0 0.0
  %507 = vmatprep.subr.mxu0 0.0
  %508 = vmatpush1.msra.mxu0 0.0
  %509 = vmatprep.subr.mxu0 0.0
  %510 = vmatpush1.msra.mxu0 0.0
  %511 = vmatprep.subr.mxu0 0.0
  %512 = vmatpush1.msra.mxu0 0.0
  %513 = vmatprep.subr.mxu0 0.0
  %514 = vmatpush1.msra.mxu0 0.0
  %515 = vmatprep.subr.mxu0 0.0
  %516 = vmatpush1.msra.mxu0 0.0
  %517 = vmatprep.subr.mxu0 0.0
  %518 = vmatpush1.msra.mxu0 0.0
  %519 = vmatprep.subr.mxu0 0.0
  %520 = vmatpush1.msra.mxu0 0.0
  %521 = vmatprep.subr.mxu0 0.0
  %522 = vmatpush1.msra.mxu0 0.0
  %523 = vmatprep.subr.mxu0 0.0
  %524 = vmatpush1.msra.mxu0 0.0
  %525 = vmatprep.subr.mxu0 0.0
  %526 = vmatpush1.msra.mxu0 0.0
  %527 = vmatprep.subr.mxu0 0.0
  %528 = vmatpush1.msra.mxu0 0.0
  %529 = vmatprep.subr.mxu0 0.0
  %530 = vmatpush1.msra.mxu0 0.0
  %531 = vmatprep.subr.mxu0 0.0
  %532 = vmatpush1.msra.mxu0 0.0
  %533 = vmatprep.subr.mxu0 0.0
  %534 = vmatpush1.msra.mxu0 0.0
  %535 = vmatprep.subr.mxu0 0.0
  %536 = vmatpush1.msra.mxu0 0.0
  %537 = vmatprep.subr.mxu0 0.0
  %538 = vmatpush1.msra.mxu0 0.0
  %539 = vmatprep.subr.mxu0 0.0
  %540 = vmatpush1.msra.mxu0 0.0
  %541 = vmatprep.subr.mxu0 0.0
  %542 = vmatpush1.msra.mxu0 0.0
  %543 = vmatprep.subr.mxu0 0.0
  %544 = vmatpush1.msra.mxu0 0.0
  %545 = vmatprep.subr.mxu0 0.0
  %546 = vmatpush1.msra.mxu0 0.0
  %547 = vmatprep.subr.mxu0 0.0
  %548 = vmatpush1.msra.mxu0 0.0
  %549 = vmatprep.subr.mxu0 0.0
  %550 = vmatpush1.msra.mxu0 0.0
  %551 = vmatprep.mubr.f32.mxu0 0.0
  %552 = vmatmul.mubr.f32.gmra.mrb[0].mxu0 %v482
  %v553 = vpop.f32.mrb[0].mxu0
  %v554 = vadd.f32 0.0, %v553
  %v555 = vpop.f32.mrb[0].mxu0
  %v556 = vadd.f32 0.0, %v555
  %557 = vmatprep.mubr.f32.mxu0 0.0
  %558 = vmatmul.mubr.f32.gmra.mrb[0].mxu0 %v485
  %v559 = vpop.f32.mrb[0].mxu0
  %v560 = vadd.f32 0.0, %v559
  %v561 = vpop.f32.mrb[0].mxu0
  %v562 = vadd.f32 0.0, %v561
  %563 = vdwg.mxu0
  %564 = vmatprep.subr.mxu0 0.0
  %565 = vmatpush1.msra.mxu0 %v477
  %566 = vmatprep.subr.mxu0 0.0
  %567 = vmatpush1.msra.mxu0 0.0
  %568 = vmatprep.subr.mxu0 0.0
  %569 = vmatpush1.msra.mxu0 0.0
  %570 = vmatprep.subr.mxu0 0.0
  %571 = vmatpush1.msra.mxu0 0.0
  %572 = vmatprep.subr.mxu0 0.0
  %573 = vmatpush1.msra.mxu0 0.0
  %574 = vmatprep.subr.mxu0 0.0
  %575 = vmatpush1.msra.mxu0 0.0
  %576 = vmatprep.subr.mxu0 0.0
  %577 = vmatpush1.msra.mxu0 0.0
  %578 = vmatprep.subr.mxu0 0.0
  %579 = vmatpush1.msra.mxu0 0.0
  %580 = vmatprep.subr.mxu0 0.0
  %581 = vmatpush1.msra.mxu0 0.0
  %582 = vmatprep.subr.mxu0 0.0
  %583 = vmatpush1.msra.mxu0 0.0
  %584 = vmatprep.subr.mxu0 0.0
  %585 = vmatpush1.msra.mxu0 0.0
  %586 = vmatprep.subr.mxu0 0.0
  %587 = vmatpush1.msra.mxu0 0.0
  %588 = vmatprep.subr.mxu0 0.0
  %589 = vmatpush1.msra.mxu0 0.0
  %590 = vmatprep.subr.mxu0 0.0
  %591 = vmatpush1.msra.mxu0 0.0
  %592 = vmatprep.subr.mxu0 0.0
  %593 = vmatpush1.msra.mxu0 0.0
  %594 = vmatprep.subr.mxu0 0.0
  %595 = vmatpush1.msra.mxu0 0.0
  %596 = vmatprep.subr.mxu0 0.0
  %597 = vmatpush1.msra.mxu0 0.0
  %598 = vmatprep.subr.mxu0 0.0
  %599 = vmatpush1.msra.mxu0 0.0
  %600 = vmatprep.subr.mxu0 0.0
  %601 = vmatpush1.msra.mxu0 0.0
  %602 = vmatprep.subr.mxu0 0.0
  %603 = vmatpush1.msra.mxu0 0.0
  %604 = vmatprep.subr.mxu0 0.0
  %605 = vmatpush1.msra.mxu0 0.0
  %606 = vmatprep.subr.mxu0 0.0
  %607 = vmatpush1.msra.mxu0 0.0
  %608 = vmatprep.subr.mxu0 0.0
  %609 = vmatpush1.msra.mxu0 0.0
  %610 = vmatprep.subr.mxu0 0.0
  %611 = vmatpush1.msra.mxu0 0.0
  %612 = vmatprep.subr.mxu0 0.0
  %613 = vmatpush1.msra.mxu0 0.0
  %614 = vmatprep.subr.mxu0 0.0
  %615 = vmatpush1.msra.mxu0 0.0
  %616 = vmatprep.subr.mxu0 0.0
  %617 = vmatpush1.msra.mxu0 0.0
  %618 = vmatprep.subr.mxu0 0.0
  %619 = vmatpush1.msra.mxu0 0.0
  %620 = vmatprep.subr.mxu0 0.0
  %621 = vmatpush1.msra.mxu0 0.0
  %622 = vmatprep.subr.mxu0 0.0
  %623 = vmatpush1.msra.mxu0 0.0
  %624 = vmatprep.subr.mxu0 0.0
  %625 = vmatpush1.msra.mxu0 0.0
  %626 = vmatprep.subr.mxu0 0.0
  %627 = vmatpush1.msra.mxu0 0.0
  %628 = vmatprep.mubr.f32.mxu0 0.0
  %629 = vmatmul.mubr.f32.gmra.mrb[0].mxu0 %v482
  %v630 = vpop.f32.mrb[0].mxu0
  %v631 = vadd.f32 0.0, %v630
  %v632 = vpop.f32.mrb[0].mxu0
  %633 = vmatprep.mubr.f32.mxu0 0.0
  %634 = vmatmul.mubr.f32.gmra.mrb[0].mxu0 %v485
  %v635 = vpop.f32.mrb[0].mxu0
  %v636 = vadd.f32 0.0, %v635
  %v637 = vpop.f32.mrb[0].mxu0
  %638 = vdwg.mxu0
  %639 = vrot.lane.b32.xlu0 %v560, 1
  %v640 = vpop.permute.xlu0 %639
  %641 = vrot.lane.b32.xlu0 %v562, 1
  %v642 = vpop.permute.xlu0 %641
  %643 = vrot.lane.b32.xlu0 %v636, 1
  %v644 = vpop.permute.xlu0 %643
  %v645 = vsel %vm447, %v642, %v644
  %v646 = vsel %vm447, %v640, %v642
  %v647 = vsel %vm447, %v644, %v640
  %v648 = vsel %vm457, %v647, 0.0
  %v649 = vsel %vm458, %v646, 0.0
  %v650 = vsel %vm459, %v645, 0.0
  %v651 = vadd.f32 %v554, %v648
  %v652 = vadd.f32 %v556, %v649
  %v653 = vadd.f32 %v631, %v650
  %v654 = vld [vmem:[%s7 + $0x30] sm:$0xff]
  %656 = vset.pattern.permute.xlu0 0
  %657 = vperm.xlu0 %656, %v654
  %v658 = vpop.permute.xlu0 %657
  %v660 = vadd.f32 %v651, %v658
  %v661 = vadd.f32 %v652, %v658
  %v662 = vadd.f32 %v653, %v658
  %v663 = vmax.f32 %v660, 0.0
  %v664 = vmax.f32 %v661, 0.0
  %v665 = vmax.f32 %v662, 0.0
  %v666 = vld [vmem:[%s7 + $0x38] sm:$0xff]
  %668 = vset.pattern.permute.xlu0 0
  %669 = vperm.xlu0 %668, %v666
  %v670 = vpop.permute.xlu0 %669
  %v672 = vadd.f32 %v357, %v670
  %v673 = vadd.f32 %v359, %v670
  %v674 = vadd.f32 %v438, %v670
  %v675 = vadd.f32 %v663, %v672
  %v676 = vadd.f32 %v664, %v673
  %v677 = vadd.f32 %v665, %v674
  %v678 = vmax.f32 %v675, 0.0
  %v679 = vmax.f32 %v676, 0.0
  %v680 = vmax.f32 %v677, 0.0
  %v681 = vld [vmem:[%s7 + $0x40] sm:$0xff]
  %v682 = vld [vmem:[%s7 + $0x48] sm:$0xff]
  %v684 = vsel %vm480, %v681, 0
  %v687 = vsel %vm480, %v682, 0
  %689 = vmatprep.subr.mxu0 %v679
  %690 = vmatpush1.msra.mxu0 %v678
  %691 = vmatprep.subr.mxu0 0.0
  %692 = vmatpush1.msra.mxu0 0.0
  %693 = vmatprep.subr.mxu0 0.0
  %694 = vmatpush1.msra.mxu0 0.0
  %695 = vmatprep.subr.mxu0 0.0
  %696 = vmatpush1.msra.mxu0 0.0
  %697 = vmatprep.subr.mxu0 0.0
  %698 = vmatpush1.msra.mxu0 0.0
  %699 = vmatprep.subr.mxu0 0.0
  %700 = vmatpush1.msra.mxu0 0.0
  %701 = vmatprep.subr.mxu0 0.0
  %702 = vmatpush1.msra.mxu0 0.0
  %703 = vmatprep.subr.mxu0 0.0
  %704 = vmatpush1.msra.mxu0 0.0
  %705 = vmatprep.subr.mxu0 0.0
  %706 = vmatpush1.msra.mxu0 0.0
  %707 = vmatprep.subr.mxu0 0.0
  %708 = vmatpush1.msra.mxu0 0.0
  %709 = vmatprep.subr.mxu0 0.0
  %710 = vmatpush1.msra.mxu0 0.0
  %711 = vmatprep.subr.mxu0 0.0
  %712 = vmatpush1.msra.mxu0 0.0
  %713 = vmatprep.subr.mxu0 0.0
  %714 = vmatpush1.msra.mxu0 0.0
  %715 = vmatprep.subr.mxu0 0.0
  %716 = vmatpush1.msra.mxu0 0.0
  %717 = vmatprep.subr.mxu0 0.0
  %718 = vmatpush1.msra.mxu0 0.0
  %719 = vmatprep.subr.mxu0 0.0
  %720 = vmatpush1.msra.mxu0 0.0
  %721 = vmatprep.subr.mxu0 0.0
  %722 = vmatpush1.msra.mxu0 0.0
  %723 = vmatprep.subr.mxu0 0.0
  %724 = vmatpush1.msra.mxu0 0.0
  %725 = vmatprep.subr.mxu0 0.0
  %726 = vmatpush1.msra.mxu0 0.0
  %727 = vmatprep.subr.mxu0 0.0
  %728 = vmatpush1.msra.mxu0 0.0
  %729 = vmatprep.subr.mxu0 0.0
  %730 = vmatpush1.msra.mxu0 0.0
  %731 = vmatprep.subr.mxu0 0.0
  %732 = vmatpush1.msra.mxu0 0.0
  %733 = vmatprep.subr.mxu0 0.0
  %734 = vmatpush1.msra.mxu0 0.0
  %735 = vmatprep.subr.mxu0 0.0
  %736 = vmatpush1.msra.mxu0 0.0
  %737 = vmatprep.subr.mxu0 0.0
  %738 = vmatpush1.msra.mxu0 0.0
  %739 = vmatprep.subr.mxu0 0.0
  %740 = vmatpush1.msra.mxu0 0.0
  %741 = vmatprep.subr.mxu0 0.0
  %742 = vmatpush1.msra.mxu0 0.0
  %743 = vmatprep.subr.mxu0 0.0
  %744 = vmatpush1.msra.mxu0 0.0
  %745 = vmatprep.subr.mxu0 0.0
  %746 = vmatpush1.msra.mxu0 0.0
  %747 = vmatprep.subr.mxu0 0.0
  %748 = vmatpush1.msra.mxu0 0.0
  %749 = vmatprep.subr.mxu0 0.0
  %750 = vmatpush1.msra.mxu0 0.0
  %751 = vmatprep.subr.mxu0 0.0
  %752 = vmatpush1.msra.mxu0 0.0
  %753 = vmatprep.mubr.f32.mxu0 0.0
  %754 = vmatmul.mubr.f32.gmra.mrb[0].mxu0 %v684
  %v755 = vpop.f32.mrb[0].mxu0
  %v756 = vadd.f32 0.0, %v755
  %v757 = vpop.f32.mrb[0].mxu0
  %v758 = vadd.f32 0.0, %v757
  %759 = vmatprep.mubr.f32.mxu0 0.0
  %760 = vmatmul.mubr.f32.gmra.mrb[0].mxu0 %v687
  %v761 = vpop.f32.mrb[0].mxu0
  %v762 = vadd.f32 0.0, %v761
  %v763 = vpop.f32.mrb[0].mxu0
  %v764 = vadd.f32 0.0, %v763
  %765 = vdwg.mxu0
  %766 = vmatprep.subr.mxu0 0.0
  %767 = vmatpush1.msra.mxu0 %v680
  %768 = vmatprep.subr.mxu0 0.0
  %769 = vmatpush1.msra.mxu0 0.0
  %770 = vmatprep.subr.mxu0 0.0
  %771 = vmatpush1.msra.mxu0 0.0
  %772 = vmatprep.subr.mxu0 0.0
  %773 = vmatpush1.msra.mxu0 0.0
  %774 = vmatprep.subr.mxu0 0.0
  %775 = vmatpush1.msra.mxu0 0.0
  %776 = vmatprep.subr.mxu0 0.0
  %777 = vmatpush1.msra.mxu0 0.0
  %778 = vmatprep.subr.mxu0 0.0
  %779 = vmatpush1.msra.mxu0 0.0
  %780 = vmatprep.subr.mxu0 0.0
  %781 = vmatpush1.msra.mxu0 0.0
  %782 = vmatprep.subr.mxu0 0.0
  %783 = vmatpush1.msra.mxu0 0.0
  %784 = vmatprep.subr.mxu0 0.0
  %785 = vmatpush1.msra.mxu0 0.0
  %786 = vmatprep.subr.mxu0 0.0
  %787 = vmatpush1.msra.mxu0 0.0
  %788 = vmatprep.subr.mxu0 0.0
  %789 = vmatpush1.msra.mxu0 0.0
  %790 = vmatprep.subr.mxu0 0.0
  %791 = vmatpush1.msra.mxu0 0.0
  %792 = vmatprep.subr.mxu0 0.0
  %793 = vmatpush1.msra.mxu0 0.0
  %794 = vmatprep.subr.mxu0 0.0
  %795 = vmatpush1.msra.mxu0 0.0
  %796 = vmatprep.subr.mxu0 0.0
  %797 = vmatpush1.msra.mxu0 0.0
  %798 = vmatprep.subr.mxu0 0.0
  %799 = vmatpush1.msra.mxu0 0.0
  %800 = vmatprep.subr.mxu0 0.0
  %801 = vmatpush1.msra.mxu0 0.0
  %802 = vmatprep.subr.mxu0 0.0
  %803 = vmatpush1.msra.mxu0 0.0
  %804 = vmatprep.subr.mxu0 0.0
  %805 = vmatpush1.msra.mxu0 0.0
  %806 = vmatprep.subr.mxu0 0.0
  %807 = vmatpush1.msra.mxu0 0.0
  %808 = vmatprep.subr.mxu0 0.0
  %809 = vmatpush1.msra.mxu0 0.0
  %810 = vmatprep.subr.mxu0 0.0
  %811 = vmatpush1.msra.mxu0 0.0
  %812 = vmatprep.subr.mxu0 0.0
  %813 = vmatpush1.msra.mxu0 0.0
  %814 = vmatprep.subr.mxu0 0.0
  %815 = vmatpush1.msra.mxu0 0.0
  %816 = vmatprep.subr.mxu0 0.0
  %817 = vmatpush1.msra.mxu0 0.0
  %818 = vmatprep.subr.mxu0 0.0
  %819 = vmatpush1.msra.mxu0 0.0
  %820 = vmatprep.subr.mxu0 0.0
  %821 = vmatpush1.msra.mxu0 0.0
  %822 = vmatprep.subr.mxu0 0.0
  %823 = vmatpush1.msra.mxu0 0.0
  %824 = vmatprep.subr.mxu0 0.0
  %825 = vmatpush1.msra.mxu0 0.0
  %826 = vmatprep.subr.mxu0 0.0
  %827 = vmatpush1.msra.mxu0 0.0
  %828 = vmatprep.subr.mxu0 0.0
  %829 = vmatpush1.msra.mxu0 0.0
  %830 = vmatprep.mubr.f32.mxu0 0.0
  %831 = vmatmul.mubr.f32.gmra.mrb[0].mxu0 %v684
  %v832 = vpop.f32.mrb[0].mxu0
  %v833 = vadd.f32 0.0, %v832
  %v834 = vpop.f32.mrb[0].mxu0
  %835 = vmatprep.mubr.f32.mxu0 0.0
  %836 = vmatmul.mubr.f32.gmra.mrb[0].mxu0 %v687
  %v837 = vpop.f32.mrb[0].mxu0
  %v838 = vadd.f32 0.0, %v837
  %v839 = vpop.f32.mrb[0].mxu0
  %840 = vdwg.mxu0
  %841 = vrot.lane.b32.xlu0 %v762, 2
  %v842 = vpop.permute.xlu0 %841
  %843 = vrot.lane.b32.xlu0 %v764, 2
  %v844 = vpop.permute.xlu0 %843
  %845 = vrot.lane.b32.xlu0 %v838, 2
  %v846 = vpop.permute.xlu0 %845
  %vm847 = vcmp.lt.s32.totalorder %v82, 2
  %v848 = vsel %vm847, %v844, %v846
  %v849 = vsel %vm847, %v842, %v844
  %v850 = vsel %vm847, %v846, %v842
  %vm851 = vcmp.ge.s32.totalorder %v118, 2
  %vm852 = vcmp.ge.s32.totalorder %v119, 2
  %vm853 = vcmp.ge.s32.totalorder %v120, 2
  %v854 = vsel %vm851, 1, 0
  %v855 = vsel %vm852, 1, 0
  %v856 = vsel %vm853, 1, 0
  %vm857 = vcmp.eq.s32.totalorder %v854, 1
  %vm858 = vcmp.eq.s32.totalorder %v855, 1
  %vm859 = vcmp.eq.s32.totalorder %v856, 1
  %v860 = vsel %vm857, %v850, 0.0
  %v861 = vsel %vm858, %v849, 0.0
  %v862 = vsel %vm859, %v848, 0.0
  %v863 = vadd.f32 %v756, %v860
  %v864 = vadd.f32 %v758, %v861
  %v865 = vadd.f32 %v833, %v862
  %v866 = vld [vmem:[%s7 + $0x50] sm:$0xff]
  %868 = vset.pattern.permute.xlu0 0
  %869 = vperm.xlu0 %868, %v866
  %v870 = vpop.permute.xlu0 %869
  %v872 = vadd.f32 %v863, %v870
  %v873 = vadd.f32 %v864, %v870
  %v874 = vadd.f32 %v865, %v870
  %v875 = vmax.f32 %v872, 0.0
  %v876 = vmax.f32 %v873, 0.0
  %v877 = vmax.f32 %v874, 0.0
  %v878 = vld [vmem:[%s7 + $0x58] sm:$0xff]
  %v879 = vld [vmem:[%s7 + $0x60] sm:$0xff]
  %v881 = vsel %vm480, %v878, 0
  %v884 = vsel %vm480, %v879, 0
  %886 = vmatprep.subr.mxu0 %v876
  %887 = vmatpush1.msra.mxu0 %v875
  %888 = vmatprep.subr.mxu0 0.0
  %889 = vmatpush1.msra.mxu0 0.0
  %890 = vmatprep.subr.mxu0 0.0
  %891 = vmatpush1.msra.mxu0 0.0
  %892 = vmatprep.subr.mxu0 0.0
  %893 = vmatpush1.msra.mxu0 0.0
  %894 = vmatprep.subr.mxu0 0.0
  %895 = vmatpush1.msra.mxu0 0.0
  %896 = vmatprep.subr.mxu0 0.0
  %897 = vmatpush1.msra.mxu0 0.0
  %898 = vmatprep.subr.mxu0 0.0
  %899 = vmatpush1.msra.mxu0 0.0
  %900 = vmatprep.subr.mxu0 0.0
  %901 = vmatpush1.msra.mxu0 0.0
  %902 = vmatprep.subr.mxu0 0.0
  %903 = vmatpush1.msra.mxu0 0.0
  %904 = vmatprep.subr.mxu0 0.0
  %905 = vmatpush1.msra.mxu0 0.0
  %906 = vmatprep.subr.mxu0 0.0
  %907 = vmatpush1.msra.mxu0 0.0
  %908 = vmatprep.subr.mxu0 0.0
  %909 = vmatpush1.msra.mxu0 0.0
  %910 = vmatprep.subr.mxu0 0.0
  %911 = vmatpush1.msra.mxu0 0.0
  %912 = vmatprep.subr.mxu0 0.0
  %913 = vmatpush1.msra.mxu0 0.0
  %914 = vmatprep.subr.mxu0 0.0
  %915 = vmatpush1.msra.mxu0 0.0
  %916 = vmatprep.subr.mxu0 0.0
  %917 = vmatpush1.msra.mxu0 0.0
  %918 = vmatprep.subr.mxu0 0.0
  %919 = vmatpush1.msra.mxu0 0.0
  %920 = vmatprep.subr.mxu0 0.0
  %921 = vmatpush1.msra.mxu0 0.0
  %922 = vmatprep.subr.mxu0 0.0
  %923 = vmatpush1.msra.mxu0 0.0
  %924 = vmatprep.subr.mxu0 0.0
  %925 = vmatpush1.msra.mxu0 0.0
  %926 = vmatprep.subr.mxu0 0.0
  %927 = vmatpush1.msra.mxu0 0.0
  %928 = vmatprep.subr.mxu0 0.0
  %929 = vmatpush1.msra.mxu0 0.0
  %930 = vmatprep.subr.mxu0 0.0
  %931 = vmatpush1.msra.mxu0 0.0
  %932 = vmatprep.subr.mxu0 0.0
  %933 = vmatpush1.msra.mxu0 0.0
  %934 = vmatprep.subr.mxu0 0.0
  %935 = vmatpush1.msra.mxu0 0.0
  %936 = vmatprep.subr.mxu0 0.0
  %937 = vmatpush1.msra.mxu0 0.0
  %938 = vmatprep.subr.mxu0 0.0
  %939 = vmatpush1.msra.mxu0 0.0
  %940 = vmatprep.subr.mxu0 0.0
  %941 = vmatpush1.msra.mxu0 0.0
  %942 = vmatprep.subr.mxu0 0.0
  %943 = vmatpush1.msra.mxu0 0.0
  %944 = vmatprep.subr.mxu0 0.0
  %945 = vmatpush1.msra.mxu0 0.0
  %946 = vmatprep.subr.mxu0 0.0
  %947 = vmatpush1.msra.mxu0 0.0
  %948 = vmatprep.subr.mxu0 0.0
  %949 = vmatpush1.msra.mxu0 0.0
  %950 = vmatprep.mubr.f32.mxu0 0.0
  %951 = vmatmul.mubr.f32.gmra.mrb[0].mxu0 %v881
  %v952 = vpop.f32.mrb[0].mxu0
  %v953 = vadd.f32 0.0, %v952
  %v954 = vpop.f32.mrb[0].mxu0
  %v955 = vadd.f32 0.0, %v954
  %956 = vmatprep.mubr.f32.mxu0 0.0
  %957 = vmatmul.mubr.f32.gmra.mrb[0].mxu0 %v884
  %v958 = vpop.f32.mrb[0].mxu0
  %v959 = vadd.f32 0.0, %v958
  %v960 = vpop.f32.mrb[0].mxu0
  %v961 = vadd.f32 0.0, %v960
  %962 = vdwg.mxu0
  %963 = vmatprep.subr.mxu0 0.0
  %964 = vmatpush1.msra.mxu0 %v877
  %965 = vmatprep.subr.mxu0 0.0
  %966 = vmatpush1.msra.mxu0 0.0
  %967 = vmatprep.subr.mxu0 0.0
  %968 = vmatpush1.msra.mxu0 0.0
  %969 = vmatprep.subr.mxu0 0.0
  %970 = vmatpush1.msra.mxu0 0.0
  %971 = vmatprep.subr.mxu0 0.0
  %972 = vmatpush1.msra.mxu0 0.0
  %973 = vmatprep.subr.mxu0 0.0
  %974 = vmatpush1.msra.mxu0 0.0
  %975 = vmatprep.subr.mxu0 0.0
  %976 = vmatpush1.msra.mxu0 0.0
  %977 = vmatprep.subr.mxu0 0.0
  %978 = vmatpush1.msra.mxu0 0.0
  %979 = vmatprep.subr.mxu0 0.0
  %980 = vmatpush1.msra.mxu0 0.0
  %981 = vmatprep.subr.mxu0 0.0
  %982 = vmatpush1.msra.mxu0 0.0
  %983 = vmatprep.subr.mxu0 0.0
  %984 = vmatpush1.msra.mxu0 0.0
  %985 = vmatprep.subr.mxu0 0.0
  %986 = vmatpush1.msra.mxu0 0.0
  %987 = vmatprep.subr.mxu0 0.0
  %988 = vmatpush1.msra.mxu0 0.0
  %989 = vmatprep.subr.mxu0 0.0
  %990 = vmatpush1.msra.mxu0 0.0
  %991 = vmatprep.subr.mxu0 0.0
  %992 = vmatpush1.msra.mxu0 0.0
  %993 = vmatprep.subr.mxu0 0.0
  %994 = vmatpush1.msra.mxu0 0.0
  %995 = vmatprep.subr.mxu0 0.0
  %996 = vmatpush1.msra.mxu0 0.0
  %997 = vmatprep.subr.mxu0 0.0
  %998 = vmatpush1.msra.mxu0 0.0
  %999 = vmatprep.subr.mxu0 0.0
  %1000 = vmatpush1.msra.mxu0 0.0
  %1001 = vmatprep.subr.mxu0 0.0
  %1002 = vmatpush1.msra.mxu0 0.0
  %1003 = vmatprep.subr.mxu0 0.0
  %1004 = vmatpush1.msra.mxu0 0.0
  %1005 = vmatprep.subr.mxu0 0.0
  %1006 = vmatpush1.msra.mxu0 0.0
  %1007 = vmatprep.subr.mxu0 0.0
  %1008 = vmatpush1.msra.mxu0 0.0
  %1009 = vmatprep.subr.mxu0 0.0
  %1010 = vmatpush1.msra.mxu0 0.0
  %1011 = vmatprep.subr.mxu0 0.0
  %1012 = vmatpush1.msra.mxu0 0.0
  %1013 = vmatprep.subr.mxu0 0.0
  %1014 = vmatpush1.msra.mxu0 0.0
  %1015 = vmatprep.subr.mxu0 0.0
  %1016 = vmatpush1.msra.mxu0 0.0
  %1017 = vmatprep.subr.mxu0 0.0
  %1018 = vmatpush1.msra.mxu0 0.0
  %1019 = vmatprep.subr.mxu0 0.0
  %1020 = vmatpush1.msra.mxu0 0.0
  %1021 = vmatprep.subr.mxu0 0.0
  %1022 = vmatpush1.msra.mxu0 0.0
  %1023 = vmatprep.subr.mxu0 0.0
  %1024 = vmatpush1.msra.mxu0 0.0
  %1025 = vmatprep.subr.mxu0 0.0
  %1026 = vmatpush1.msra.mxu0 0.0
  %1027 = vmatprep.mubr.f32.mxu0 0.0
  %1028 = vmatmul.mubr.f32.gmra.mrb[0].mxu0 %v881
  %v1029 = vpop.f32.mrb[0].mxu0
  %v1030 = vadd.f32 0.0, %v1029
  %v1031 = vpop.f32.mrb[0].mxu0
  %1032 = vmatprep.mubr.f32.mxu0 0.0
  %1033 = vmatmul.mubr.f32.gmra.mrb[0].mxu0 %v884
  %v1034 = vpop.f32.mrb[0].mxu0
  %v1035 = vadd.f32 0.0, %v1034
  %v1036 = vpop.f32.mrb[0].mxu0
  %1037 = vdwg.mxu0
  %1038 = vrot.lane.b32.xlu0 %v959, 2
  %v1039 = vpop.permute.xlu0 %1038
  %1040 = vrot.lane.b32.xlu0 %v961, 2
  %v1041 = vpop.permute.xlu0 %1040
  %1042 = vrot.lane.b32.xlu0 %v1035, 2
  %v1043 = vpop.permute.xlu0 %1042
  %v1044 = vsel %vm847, %v1041, %v1043
  %v1045 = vsel %vm847, %v1039, %v1041
  %v1046 = vsel %vm847, %v1043, %v1039
  %v1047 = vsel %vm857, %v1046, 0.0
  %v1048 = vsel %vm858, %v1045, 0.0
  %v1049 = vsel %vm859, %v1044, 0.0
  %v1050 = vadd.f32 %v953, %v1047
  %v1051 = vadd.f32 %v955, %v1048
  %v1052 = vadd.f32 %v1030, %v1049
  %v1053 = vld [vmem:[%s7 + $0x68] sm:$0xff]
  %1055 = vset.pattern.permute.xlu0 0
  %1056 = vperm.xlu0 %1055, %v1053
  %v1057 = vpop.permute.xlu0 %1056
  %v1059 = vadd.f32 %v1050, %v1057
  %v1060 = vadd.f32 %v1051, %v1057
  %v1061 = vadd.f32 %v1052, %v1057
  %v1062 = vmax.f32 %v1059, 0.0
  %v1063 = vmax.f32 %v1060, 0.0
  %v1064 = vmax.f32 %v1061, 0.0
  %v1065 = vadd.f32 %v1062, %v678
  %v1066 = vadd.f32 %v1063, %v679
  %v1067 = vadd.f32 %v1064, %v680
  %v1068 = vmax.f32 %v1065, 0.0
  %v1069 = vmax.f32 %v1066, 0.0
  %v1070 = vmax.f32 %v1067, 0.0
  %v1071 = vlaneseq
  %v1072 = vshrl.u32 %v1071, 7
  %v1073 = vadd.s32 %v1072, 8
  %v1074 = vmul.u32 %v1072, 32
  %v1075 = vmul.u32 %v1073, 32
  %v1076 = vadd.s32 %v1074, 31
  %v1077 = vadd.s32 %v1075, 31
  %vm1078 = vcmp.eq.s32.totalorder %v82, %v1076
  %vm1079 = vcmp.eq.s32.totalorder %v83, %v1076
  %vm1080 = vcmp.eq.s32.totalorder %v84, %v1076
  %vm1081 = vcmp.eq.s32.totalorder %v82, %v1077
  %vm1082 = vcmp.eq.s32.totalorder %v83, %v1077
  %vm1083 = vcmp.eq.s32.totalorder %v84, %v1077
  %v1084 = vsel %vm1078, 1, 0
  %v1085 = vsel %vm1079, 1, 0
  %v1086 = vsel %vm1080, 1, 0
  %v1087 = vsel %vm1081, 1, 0
  %v1088 = vsel %vm1082, 1, 0
  %v1089 = vsel %vm1083, 1, 0
  %v1090 = vcvt.s32.f32 %v1084
  %v1091 = vcvt.s32.f32 %v1085
  %v1092 = vcvt.s32.f32 %v1086
  %v1093 = vcvt.s32.f32 %v1087
  %v1094 = vcvt.s32.f32 %v1088
  %v1095 = vcvt.s32.f32 %v1089
  %1096 = vmatprep.subr.mxu0 %v1069
  %1097 = vmatpush1.xpose.msra.mxu0 %v1068
  %1098 = vmatprep.subr.mxu0 0.0
  %1099 = vmatpush1.xpose.msra.mxu0 0.0
  %1100 = vmatprep.subr.mxu0 0.0
  %1101 = vmatpush1.xpose.msra.mxu0 0.0
  %1102 = vmatprep.subr.mxu0 0.0
  %1103 = vmatpush1.xpose.msra.mxu0 0.0
  %1104 = vmatprep.subr.mxu0 0.0
  %1105 = vmatpush1.xpose.msra.mxu0 0.0
  %1106 = vmatprep.subr.mxu0 0.0
  %1107 = vmatpush1.xpose.msra.mxu0 0.0
  %1108 = vmatprep.subr.mxu0 0.0
  %1109 = vmatpush1.xpose.msra.mxu0 0.0
  %1110 = vmatprep.subr.mxu0 0.0
  %1111 = vmatpush1.xpose.msra.mxu0 0.0
  %1112 = vmatprep.subr.mxu0 0.0
  %1113 = vmatpush1.xpose.msra.mxu0 0.0
  %1114 = vmatprep.subr.mxu0 0.0
  %1115 = vmatpush1.xpose.msra.mxu0 0.0
  %1116 = vmatprep.subr.mxu0 0.0
  %1117 = vmatpush1.xpose.msra.mxu0 0.0
  %1118 = vmatprep.subr.mxu0 0.0
  %1119 = vmatpush1.xpose.msra.mxu0 0.0
  %1120 = vmatprep.subr.mxu0 0.0
  %1121 = vmatpush1.xpose.msra.mxu0 0.0
  %1122 = vmatprep.subr.mxu0 0.0
  %1123 = vmatpush1.xpose.msra.mxu0 0.0
  %1124 = vmatprep.subr.mxu0 0.0
  %1125 = vmatpush1.xpose.msra.mxu0 0.0
  %1126 = vmatprep.subr.mxu0 0.0
  %1127 = vmatpush1.xpose.msra.mxu0 0.0
  %1128 = vmatprep.subr.mxu0 0.0
  %1129 = vmatpush1.xpose.msra.mxu0 0.0
  %1130 = vmatprep.subr.mxu0 0.0
  %1131 = vmatpush1.xpose.msra.mxu0 0.0
  %1132 = vmatprep.subr.mxu0 0.0
  %1133 = vmatpush1.xpose.msra.mxu0 0.0
  %1134 = vmatprep.subr.mxu0 0.0
  %1135 = vmatpush1.xpose.msra.mxu0 0.0
  %1136 = vmatprep.subr.mxu0 0.0
  %1137 = vmatpush1.xpose.msra.mxu0 0.0
  %1138 = vmatprep.subr.mxu0 0.0
  %1139 = vmatpush1.xpose.msra.mxu0 0.0
  %1140 = vmatprep.subr.mxu0 0.0
  %1141 = vmatpush1.xpose.msra.mxu0 0.0
  %1142 = vmatprep.subr.mxu0 0.0
  %1143 = vmatpush1.xpose.msra.mxu0 0.0
  %1144 = vmatprep.subr.mxu0 0.0
  %1145 = vmatpush1.xpose.msra.mxu0 0.0
  %1146 = vmatprep.subr.mxu0 0.0
  %1147 = vmatpush1.xpose.msra.mxu0 0.0
  %1148 = vmatprep.subr.mxu0 0.0
  %1149 = vmatpush1.xpose.msra.mxu0 0.0
  %1150 = vmatprep.subr.mxu0 0.0
  %1151 = vmatpush1.xpose.msra.mxu0 0.0
  %1152 = vmatprep.subr.mxu0 0.0
  %1153 = vmatpush1.xpose.msra.mxu0 0.0
  %1154 = vmatprep.subr.mxu0 0.0
  %1155 = vmatpush1.xpose.msra.mxu0 0.0
  %1156 = vmatprep.subr.mxu0 0.0
  %1157 = vmatpush1.xpose.msra.mxu0 0.0
  %1158 = vmatprep.subr.mxu0 0.0
  %1159 = vmatpush1.xpose.msra.mxu0 0.0
  %1160 = vmatprep.mubr.f32.mxu0 %v1091
  %1161 = vmatmul.mubr.f32.gmra.mrb[0].mxu0 %v1090
  %v1162 = vpop.f32.mrb[0].mxu0
  %v1163 = vadd.f32 0.0, %v1162
  %v1164 = vpop.f32.mrb[0].mxu0
  %1165 = vmatprep.mubr.f32.mxu0 %v1094
  %1166 = vmatmul.mubr.f32.gmra.mrb[0].mxu0 %v1093
  %v1167 = vpop.f32.mrb[0].mxu0
  %v1168 = vadd.f32 0.0, %v1167
  %v1169 = vpop.f32.mrb[0].mxu0
  %1170 = vdwg.mxu0
  %1171 = vmatprep.subr.mxu0 0.0
  %1172 = vmatpush1.xpose.msra.mxu0 %v1070
  %1173 = vmatprep.subr.mxu0 0.0
  %1174 = vmatpush1.xpose.msra.mxu0 0.0
  %1175 = vmatprep.subr.mxu0 0.0
  %1176 = vmatpush1.xpose.msra.mxu0 0.0
  %1177 = vmatprep.subr.mxu0 0.0
  %1178 = vmatpush1.xpose.msra.mxu0 0.0
  %1179 = vmatprep.subr.mxu0 0.0
  %1180 = vmatpush1.xpose.msra.mxu0 0.0
  %1181 = vmatprep.subr.mxu0 0.0
  %1182 = vmatpush1.xpose.msra.mxu0 0.0
  %1183 = vmatprep.subr.mxu0 0.0
  %1184 = vmatpush1.xpose.msra.mxu0 0.0
  %1185 = vmatprep.subr.mxu0 0.0
  %1186 = vmatpush1.xpose.msra.mxu0 0.0
  %1187 = vmatprep.subr.mxu0 0.0
  %1188 = vmatpush1.xpose.msra.mxu0 0.0
  %1189 = vmatprep.subr.mxu0 0.0
  %1190 = vmatpush1.xpose.msra.mxu0 0.0
  %1191 = vmatprep.subr.mxu0 0.0
  %1192 = vmatpush1.xpose.msra.mxu0 0.0
  %1193 = vmatprep.subr.mxu0 0.0
  %1194 = vmatpush1.xpose.msra.mxu0 0.0
  %1195 = vmatprep.subr.mxu0 0.0
  %1196 = vmatpush1.xpose.msra.mxu0 0.0
  %1197 = vmatprep.subr.mxu0 0.0
  %1198 = vmatpush1.xpose.msra.mxu0 0.0
  %1199 = vmatprep.subr.mxu0 0.0
  %1200 = vmatpush1.xpose.msra.mxu0 0.0
  %1201 = vmatprep.subr.mxu0 0.0
  %1202 = vmatpush1.xpose.msra.mxu0 0.0
  %1203 = vmatprep.subr.mxu0 0.0
  %1204 = vmatpush1.xpose.msra.mxu0 0.0
  %1205 = vmatprep.subr.mxu0 0.0
  %1206 = vmatpush1.xpose.msra.mxu0 0.0
  %1207 = vmatprep.subr.mxu0 0.0
  %1208 = vmatpush1.xpose.msra.mxu0 0.0
  %1209 = vmatprep.subr.mxu0 0.0
  %1210 = vmatpush1.xpose.msra.mxu0 0.0
  %1211 = vmatprep.subr.mxu0 0.0
  %1212 = vmatpush1.xpose.msra.mxu0 0.0
  %1213 = vmatprep.subr.mxu0 0.0
  %1214 = vmatpush1.xpose.msra.mxu0 0.0
  %1215 = vmatprep.subr.mxu0 0.0
  %1216 = vmatpush1.xpose.msra.mxu0 0.0
  %1217 = vmatprep.subr.mxu0 0.0
  %1218 = vmatpush1.xpose.msra.mxu0 0.0
  %1219 = vmatprep.subr.mxu0 0.0
  %1220 = vmatpush1.xpose.msra.mxu0 0.0
  %1221 = vmatprep.subr.mxu0 0.0
  %1222 = vmatpush1.xpose.msra.mxu0 0.0
  %1223 = vmatprep.subr.mxu0 0.0
  %1224 = vmatpush1.xpose.msra.mxu0 0.0
  %1225 = vmatprep.subr.mxu0 0.0
  %1226 = vmatpush1.xpose.msra.mxu0 0.0
  %1227 = vmatprep.subr.mxu0 0.0
  %1228 = vmatpush1.xpose.msra.mxu0 0.0
  %1229 = vmatprep.subr.mxu0 0.0
  %1230 = vmatpush1.xpose.msra.mxu0 0.0
  %1231 = vmatprep.subr.mxu0 0.0
  %1232 = vmatpush1.xpose.msra.mxu0 0.0
  %1233 = vmatprep.subr.mxu0 0.0
  %1234 = vmatpush1.xpose.msra.mxu0 0.0
  %1235 = vmatprep.mubr.f32.mxu0 0.0
  %1236 = vmatmul.mubr.f32.gmra.mrb[0].mxu0 %v1092
  %v1237 = vpop.f32.mrb[0].mxu0
  %v1238 = vadd.f32 %v1163, %v1237
  %v1239 = vpop.f32.mrb[0].mxu0
  %1240 = vmatprep.mubr.f32.mxu0 0.0
  %1241 = vmatmul.mubr.f32.gmra.mrb[0].mxu0 %v1095
  %v1242 = vpop.f32.mrb[0].mxu0
  %v1243 = vadd.f32 %v1168, %v1242
  %v1244 = vpop.f32.mrb[0].mxu0
  %1245 = vdwg.mxu0
  %v1246 = vmul.f32 %v1238, %v1238
  %v1247 = vmul.f32 %v1243, %v1243
  %v1248 = vsel %vm480, %v1246, 0.0
  %1249 = vadd.xlane.f32.xlu0 %v1248
  %v1250 = vpop.xlane.xlu0 %1249
  %vm1251 = vcmask 60416
  %v1252 = vsel %vm1251, %v1247, 0.0
  %1253 = vadd.xlane.f32.xlu0 %v1252
  %v1254 = vpop.xlane.xlu0 %1253
  %v1255 = vmax.f32 %v1250, 1e-24
  %v1256 = vmax.f32 %v1254, 1e-24
  %v1257 = vrsqrt.pop %v1255
  %v1258 = vrsqrt.pop %v1256
  %v1259 = vmul.f32 %v1238, %v1257
  %v1260 = vmul.f32 %v1243, %v1258
  %1261 = vst.msk [vmem:[%s8] sm:$0xff] %vm480, %v1259
  %1262 = vst.msk [vmem:[%s8 + $0x8] sm:$0xf] %vm1251, %v1260
  %v1263 = vld [vmem:[%s7 + $0x70] sm:$0xff]
  %v1264 = vld [vmem:[%s7 + $0x78] sm:$0x1]
  %v1265 = vlaneseq
  %v1266 = vshrl.u32 %v1265, 7
  %v1267 = vsub.s32 0, %v1266
  %v1268 = vrot.slane %v1264, %v1267
  %v1270 = vsel %vm480, %v1259, 0
  %v1273 = vsel %vm480, %v1260, 0
  %1275 = vmatprep.subr.mxu0 0.0
  %1276 = vmatpush1.msra.mxu0 %v1263
  %1277 = vmatprep.subr.mxu0 0.0
  %1278 = vmatpush1.msra.mxu0 0.0
  %1279 = vmatprep.subr.mxu0 0.0
  %1280 = vmatpush1.msra.mxu0 0.0
  %1281 = vmatprep.subr.mxu0 0.0
  %1282 = vmatpush1.msra.mxu0 0.0
  %1283 = vmatprep.subr.mxu0 0.0
  %1284 = vmatpush1.msra.mxu0 0.0
  %1285 = vmatprep.subr.mxu0 0.0
  %1286 = vmatpush1.msra.mxu0 0.0
  %1287 = vmatprep.subr.mxu0 0.0
  %1288 = vmatpush1.msra.mxu0 0.0
  %1289 = vmatprep.subr.mxu0 0.0
  %1290 = vmatpush1.msra.mxu0 0.0
  %1291 = vmatprep.subr.mxu0 0.0
  %1292 = vmatpush1.msra.mxu0 0.0
  %1293 = vmatprep.subr.mxu0 0.0
  %1294 = vmatpush1.msra.mxu0 0.0
  %1295 = vmatprep.subr.mxu0 0.0
  %1296 = vmatpush1.msra.mxu0 0.0
  %1297 = vmatprep.subr.mxu0 0.0
  %1298 = vmatpush1.msra.mxu0 0.0
  %1299 = vmatprep.subr.mxu0 0.0
  %1300 = vmatpush1.msra.mxu0 0.0
  %1301 = vmatprep.subr.mxu0 0.0
  %1302 = vmatpush1.msra.mxu0 0.0
  %1303 = vmatprep.subr.mxu0 0.0
  %1304 = vmatpush1.msra.mxu0 0.0
  %1305 = vmatprep.subr.mxu0 0.0
  %1306 = vmatpush1.msra.mxu0 0.0
  %1307 = vmatprep.subr.mxu0 0.0
  %1308 = vmatpush1.msra.mxu0 0.0
  %1309 = vmatprep.subr.mxu0 0.0
  %1310 = vmatpush1.msra.mxu0 0.0
  %1311 = vmatprep.subr.mxu0 0.0
  %1312 = vmatpush1.msra.mxu0 0.0
  %1313 = vmatprep.subr.mxu0 0.0
  %1314 = vmatpush1.msra.mxu0 0.0
  %1315 = vmatprep.subr.mxu0 0.0
  %1316 = vmatpush1.msra.mxu0 0.0
  %1317 = vmatprep.subr.mxu0 0.0
  %1318 = vmatpush1.msra.mxu0 0.0
  %1319 = vmatprep.subr.mxu0 0.0
  %1320 = vmatpush1.msra.mxu0 0.0
  %1321 = vmatprep.subr.mxu0 0.0
  %1322 = vmatpush1.msra.mxu0 0.0
  %1323 = vmatprep.subr.mxu0 0.0
  %1324 = vmatpush1.msra.mxu0 0.0
  %1325 = vmatprep.subr.mxu0 0.0
  %1326 = vmatpush1.msra.mxu0 0.0
  %1327 = vmatprep.subr.mxu0 0.0
  %1328 = vmatpush1.msra.mxu0 0.0
  %1329 = vmatprep.subr.mxu0 0.0
  %1330 = vmatpush1.msra.mxu0 0.0
  %1331 = vmatprep.subr.mxu0 0.0
  %1332 = vmatpush1.msra.mxu0 0.0
  %1333 = vmatprep.subr.mxu0 0.0
  %1334 = vmatpush1.msra.mxu0 0.0
  %1335 = vmatprep.subr.mxu0 0.0
  %1336 = vmatpush1.msra.mxu0 0.0
  %1337 = vmatprep.subr.mxu0 0.0
  %1338 = vmatpush1.msra.mxu0 0.0
  %1339 = vmatprep.mubr.f32.mxu0 0.0
  %1340 = vmatmul.mubr.f32.gmra.mrb[0].mxu0 %v1270
  %v1341 = vpop.f32.mrb[0].mxu0
  %v1342 = vadd.f32 %v1268, %v1341
  %v1343 = vpop.f32.mrb[0].mxu0
  %1344 = vmatprep.mubr.f32.mxu0 0.0
  %1345 = vmatmul.mubr.f32.gmra.mrb[0].mxu0 %v1273
  %v1346 = vpop.f32.mrb[0].mxu0
  %v1347 = vadd.f32 %v1268, %v1346
  %v1348 = vpop.f32.mrb[0].mxu0
  %1349 = vdwg.mxu0
  %v1350 = vmul.f32 %v1342, 0.999995
  %v1351 = vmul.f32 %v1347, 0.999995
  %v1352 = vmax.f32 %v1350, 0.0
  %v1353 = vmax.f32 %v1351, 0.0
  %v1354 = vld [vmem:[%s7 + $0x80] sm:$0xff]
  %v1355 = vld [vmem:[%s7 + $0x88] sm:$0xff]
  %v1356 = vld [vmem:[%s7 + $0x90] sm:$0xff]
  %v1357 = vld [vmem:[%s7 + $0x98] sm:$0xff]
  %v1358 = vld [vmem:[%s7 + $0xa0] sm:$0x1]
  %v1359 = vlaneseq
  %v1360 = vshrl.u32 %v1359, 7
  %v1361 = vsub.s32 0, %v1360
  %v1362 = vrot.slane %v1358, %v1361
  %vm1363 = vcmask 261120
  %v1365 = vsel %vm1363, %v1352, 0
  %v1368 = vsel %vm1363, %v1353, 0
  %1370 = vmatprep.subr.mxu0 0.0
  %1371 = vmatpush1.msra.mxu0 %v1354
  %1372 = vmatprep.subr.mxu0 0.0
  %1373 = vmatpush1.msra.mxu0 %v1355
  %1374 = vmatprep.subr.mxu0 0.0
  %1375 = vmatpush1.msra.mxu0 %v1356
  %1376 = vmatprep.subr.mxu0 0.0
  %1377 = vmatpush1.msra.mxu0 %v1357
  %1378 = vmatprep.subr.mxu0 0.0
  %1379 = vmatpush1.msra.mxu0 0.0
  %1380 = vmatprep.subr.mxu0 0.0
  %1381 = vmatpush1.msra.mxu0 0.0
  %1382 = vmatprep.subr.mxu0 0.0
  %1383 = vmatpush1.msra.mxu0 0.0
  %1384 = vmatprep.subr.mxu0 0.0
  %1385 = vmatpush1.msra.mxu0 0.0
  %1386 = vmatprep.subr.mxu0 0.0
  %1387 = vmatpush1.msra.mxu0 0.0
  %1388 = vmatprep.subr.mxu0 0.0
  %1389 = vmatpush1.msra.mxu0 0.0
  %1390 = vmatprep.subr.mxu0 0.0
  %1391 = vmatpush1.msra.mxu0 0.0
  %1392 = vmatprep.subr.mxu0 0.0
  %1393 = vmatpush1.msra.mxu0 0.0
  %1394 = vmatprep.subr.mxu0 0.0
  %1395 = vmatpush1.msra.mxu0 0.0
  %1396 = vmatprep.subr.mxu0 0.0
  %1397 = vmatpush1.msra.mxu0 0.0
  %1398 = vmatprep.subr.mxu0 0.0
  %1399 = vmatpush1.msra.mxu0 0.0
  %1400 = vmatprep.subr.mxu0 0.0
  %1401 = vmatpush1.msra.mxu0 0.0
  %1402 = vmatprep.subr.mxu0 0.0
  %1403 = vmatpush1.msra.mxu0 0.0
  %1404 = vmatprep.subr.mxu0 0.0
  %1405 = vmatpush1.msra.mxu0 0.0
  %1406 = vmatprep.subr.mxu0 0.0
  %1407 = vmatpush1.msra.mxu0 0.0
  %1408 = vmatprep.subr.mxu0 0.0
  %1409 = vmatpush1.msra.mxu0 0.0
  %1410 = vmatprep.subr.mxu0 0.0
  %1411 = vmatpush1.msra.mxu0 0.0
  %1412 = vmatprep.subr.mxu0 0.0
  %1413 = vmatpush1.msra.mxu0 0.0
  %1414 = vmatprep.subr.mxu0 0.0
  %1415 = vmatpush1.msra.mxu0 0.0
  %1416 = vmatprep.subr.mxu0 0.0
  %1417 = vmatpush1.msra.mxu0 0.0
  %1418 = vmatprep.subr.mxu0 0.0
  %1419 = vmatpush1.msra.mxu0 0.0
  %1420 = vmatprep.subr.mxu0 0.0
  %1421 = vmatpush1.msra.mxu0 0.0
  %1422 = vmatprep.subr.mxu0 0.0
  %1423 = vmatpush1.msra.mxu0 0.0
  %1424 = vmatprep.subr.mxu0 0.0
  %1425 = vmatpush1.msra.mxu0 0.0
  %1426 = vmatprep.subr.mxu0 0.0
  %1427 = vmatpush1.msra.mxu0 0.0
  %1428 = vmatprep.subr.mxu0 0.0
  %1429 = vmatpush1.msra.mxu0 0.0
  %1430 = vmatprep.subr.mxu0 0.0
  %1431 = vmatpush1.msra.mxu0 0.0
  %1432 = vmatprep.subr.mxu0 0.0
  %1433 = vmatpush1.msra.mxu0 0.0
  %1434 = vmatprep.mubr.f32.mxu0 0.0
  %1435 = vmatmul.mubr.f32.gmra.mrb[0].mxu0 %v1365
  %v1436 = vpop.f32.mrb[0].mxu0
  %v1437 = vadd.f32 %v1362, %v1436
  %v1438 = vpop.f32.mrb[0].mxu0
  %1439 = vmatprep.mubr.f32.mxu0 0.0
  %1440 = vmatmul.mubr.f32.gmra.mrb[0].mxu0 %v1368
  %v1441 = vpop.f32.mrb[0].mxu0
  %v1442 = vadd.f32 %v1362, %v1441
  %v1443 = vpop.f32.mrb[0].mxu0
  %1444 = vdwg.mxu0
  %v1445 = vmul.f32 %v1437, %v1437
  %v1446 = vmul.f32 %v1442, %v1442
  %v1447 = vsel %vm480, %v1445, 0.0
  %1448 = vadd.xlane.f32.xlu0 %v1447
  %v1449 = vpop.xlane.xlu0 %1448
  %v1450 = vsel %vm1251, %v1446, 0.0
  %1451 = vadd.xlane.f32.xlu0 %v1450
  %v1452 = vpop.xlane.xlu0 %1451
  %v1453 = vmax.f32 %v1449, 1e-24
  %v1454 = vmax.f32 %v1452, 1e-24
  %v1455 = vrsqrt.pop %v1453
  %v1456 = vrsqrt.pop %v1454
  %v1457 = vmul.f32 %v1437, %v1455
  %v1458 = vmul.f32 %v1442, %v1456
  %1459 = vst.msk [vmem:[%s9] sm:$0xff] %vm480, %v1457
  %1460 = vst.msk [vmem:[%s9 + $0x8] sm:$0xf] %vm1251, %v1458
  %v1461 = vld [vmem:[%s7 + $0xa8] sm:$0xff]
  %v1462 = vld [vmem:[%s7 + $0xb0] sm:$0x1]
  %v1463 = vlaneseq
  %v1464 = vshrl.u32 %v1463, 7
  %v1465 = vsub.s32 0, %v1464
  %v1466 = vrot.slane %v1462, %v1465
  %1467 = vmatprep.subr.mxu0 0.0
  %1468 = vmatpush1.msra.mxu0 %v1461
  %1469 = vmatprep.subr.mxu0 0.0
  %1470 = vmatpush1.msra.mxu0 0.0
  %1471 = vmatprep.subr.mxu0 0.0
  %1472 = vmatpush1.msra.mxu0 0.0
  %1473 = vmatprep.subr.mxu0 0.0
  %1474 = vmatpush1.msra.mxu0 0.0
  %1475 = vmatprep.subr.mxu0 0.0
  %1476 = vmatpush1.msra.mxu0 0.0
  %1477 = vmatprep.subr.mxu0 0.0
  %1478 = vmatpush1.msra.mxu0 0.0
  %1479 = vmatprep.subr.mxu0 0.0
  %1480 = vmatpush1.msra.mxu0 0.0
  %1481 = vmatprep.subr.mxu0 0.0
  %1482 = vmatpush1.msra.mxu0 0.0
  %1483 = vmatprep.subr.mxu0 0.0
  %1484 = vmatpush1.msra.mxu0 0.0
  %1485 = vmatprep.subr.mxu0 0.0
  %1486 = vmatpush1.msra.mxu0 0.0
  %1487 = vmatprep.subr.mxu0 0.0
  %1488 = vmatpush1.msra.mxu0 0.0
  %1489 = vmatprep.subr.mxu0 0.0
  %1490 = vmatpush1.msra.mxu0 0.0
  %1491 = vmatprep.subr.mxu0 0.0
  %1492 = vmatpush1.msra.mxu0 0.0
  %1493 = vmatprep.subr.mxu0 0.0
  %1494 = vmatpush1.msra.mxu0 0.0
  %1495 = vmatprep.subr.mxu0 0.0
  %1496 = vmatpush1.msra.mxu0 0.0
  %1497 = vmatprep.subr.mxu0 0.0
  %1498 = vmatpush1.msra.mxu0 0.0
  %1499 = vmatprep.subr.mxu0 0.0
  %1500 = vmatpush1.msra.mxu0 0.0
  %1501 = vmatprep.subr.mxu0 0.0
  %1502 = vmatpush1.msra.mxu0 0.0
  %1503 = vmatprep.subr.mxu0 0.0
  %1504 = vmatpush1.msra.mxu0 0.0
  %1505 = vmatprep.subr.mxu0 0.0
  %1506 = vmatpush1.msra.mxu0 0.0
  %1507 = vmatprep.subr.mxu0 0.0
  %1508 = vmatpush1.msra.mxu0 0.0
  %1509 = vmatprep.subr.mxu0 0.0
  %1510 = vmatpush1.msra.mxu0 0.0
  %1511 = vmatprep.subr.mxu0 0.0
  %1512 = vmatpush1.msra.mxu0 0.0
  %1513 = vmatprep.subr.mxu0 0.0
  %1514 = vmatpush1.msra.mxu0 0.0
  %1515 = vmatprep.subr.mxu0 0.0
  %1516 = vmatpush1.msra.mxu0 0.0
  %1517 = vmatprep.subr.mxu0 0.0
  %1518 = vmatpush1.msra.mxu0 0.0
  %1519 = vmatprep.subr.mxu0 0.0
  %1520 = vmatpush1.msra.mxu0 0.0
  %1521 = vmatprep.subr.mxu0 0.0
  %1522 = vmatpush1.msra.mxu0 0.0
  %1523 = vmatprep.subr.mxu0 0.0
  %1524 = vmatpush1.msra.mxu0 0.0
  %1525 = vmatprep.subr.mxu0 0.0
  %1526 = vmatpush1.msra.mxu0 0.0
  %1527 = vmatprep.subr.mxu0 0.0
  %1528 = vmatpush1.msra.mxu0 0.0
  %1529 = vmatprep.subr.mxu0 0.0
  %1530 = vmatpush1.msra.mxu0 0.0
  %1531 = vmatprep.mubr.f32.mxu0 0.0
  %1532 = vmatmul.mubr.f32.gmra.mrb[0].mxu0 %v1270
  %v1533 = vpop.f32.mrb[0].mxu0
  %v1534 = vadd.f32 %v1466, %v1533
  %v1535 = vpop.f32.mrb[0].mxu0
  %1536 = vmatprep.mubr.f32.mxu0 0.0
  %1537 = vmatmul.mubr.f32.gmra.mrb[0].mxu0 %v1273
  %v1538 = vpop.f32.mrb[0].mxu0
  %v1539 = vadd.f32 %v1466, %v1538
  %v1540 = vpop.f32.mrb[0].mxu0
  %1541 = vdwg.mxu0
  %vm1542 = vcmp.ge.f32.partialorder %v1534, 0.0
  %vm1543 = vcmp.ge.f32.partialorder %v1539, 0.0
  %v1544 = vmul.f32 %v1534, 0.2
  %v1545 = vmul.f32 %v1539, 0.2
  %v1546 = vsel %vm1542, %v1534, %v1544
  %v1547 = vsel %vm1543, %v1539, %v1545
  %v1548 = vld [vmem:[%s7 + $0xb8] sm:$0xff]
  %v1549 = vld [vmem:[%s7 + $0xc0] sm:$0xff]
  %v1550 = vld [vmem:[%s7 + $0xc8] sm:$0xff]
  %v1551 = vld [vmem:[%s7 + $0xd0] sm:$0xff]
  %v1552 = vld [vmem:[%s7 + $0xd8] sm:$0x1]
  %v1553 = vlaneseq
  %v1554 = vshrl.u32 %v1553, 7
  %v1555 = vsub.s32 0, %v1554
  %v1556 = vrot.slane %v1552, %v1555
  %v1558 = vsel %vm1363, %v1546, 0
  %v1561 = vsel %vm1363, %v1547, 0
  %1563 = vmatprep.subr.mxu0 0.0
  %1564 = vmatpush1.msra.mxu0 %v1548
  %1565 = vmatprep.subr.mxu0 0.0
  %1566 = vmatpush1.msra.mxu0 %v1549
  %1567 = vmatprep.subr.mxu0 0.0
  %1568 = vmatpush1.msra.mxu0 %v1550
  %1569 = vmatprep.subr.mxu0 0.0
  %1570 = vmatpush1.msra.mxu0 %v1551
  %1571 = vmatprep.subr.mxu0 0.0
  %1572 = vmatpush1.msra.mxu0 0.0
  %1573 = vmatprep.subr.mxu0 0.0
  %1574 = vmatpush1.msra.mxu0 0.0
  %1575 = vmatprep.subr.mxu0 0.0
  %1576 = vmatpush1.msra.mxu0 0.0
  %1577 = vmatprep.subr.mxu0 0.0
  %1578 = vmatpush1.msra.mxu0 0.0
  %1579 = vmatprep.subr.mxu0 0.0
  %1580 = vmatpush1.msra.mxu0 0.0
  %1581 = vmatprep.subr.mxu0 0.0
  %1582 = vmatpush1.msra.mxu0 0.0
  %1583 = vmatprep.subr.mxu0 0.0
  %1584 = vmatpush1.msra.mxu0 0.0
  %1585 = vmatprep.subr.mxu0 0.0
  %1586 = vmatpush1.msra.mxu0 0.0
  %1587 = vmatprep.subr.mxu0 0.0
  %1588 = vmatpush1.msra.mxu0 0.0
  %1589 = vmatprep.subr.mxu0 0.0
  %1590 = vmatpush1.msra.mxu0 0.0
  %1591 = vmatprep.subr.mxu0 0.0
  %1592 = vmatpush1.msra.mxu0 0.0
  %1593 = vmatprep.subr.mxu0 0.0
  %1594 = vmatpush1.msra.mxu0 0.0
  %1595 = vmatprep.subr.mxu0 0.0
  %1596 = vmatpush1.msra.mxu0 0.0
  %1597 = vmatprep.subr.mxu0 0.0
  %1598 = vmatpush1.msra.mxu0 0.0
  %1599 = vmatprep.subr.mxu0 0.0
  %1600 = vmatpush1.msra.mxu0 0.0
  %1601 = vmatprep.subr.mxu0 0.0
  %1602 = vmatpush1.msra.mxu0 0.0
  %1603 = vmatprep.subr.mxu0 0.0
  %1604 = vmatpush1.msra.mxu0 0.0
  %1605 = vmatprep.subr.mxu0 0.0
  %1606 = vmatpush1.msra.mxu0 0.0
  %1607 = vmatprep.subr.mxu0 0.0
  %1608 = vmatpush1.msra.mxu0 0.0
  %1609 = vmatprep.subr.mxu0 0.0
  %1610 = vmatpush1.msra.mxu0 0.0
  %1611 = vmatprep.subr.mxu0 0.0
  %1612 = vmatpush1.msra.mxu0 0.0
  %1613 = vmatprep.subr.mxu0 0.0
  %1614 = vmatpush1.msra.mxu0 0.0
  %1615 = vmatprep.subr.mxu0 0.0
  %1616 = vmatpush1.msra.mxu0 0.0
  %1617 = vmatprep.subr.mxu0 0.0
  %1618 = vmatpush1.msra.mxu0 0.0
  %1619 = vmatprep.subr.mxu0 0.0
  %1620 = vmatpush1.msra.mxu0 0.0
  %1621 = vmatprep.subr.mxu0 0.0
  %1622 = vmatpush1.msra.mxu0 0.0
  %1623 = vmatprep.subr.mxu0 0.0
  %1624 = vmatpush1.msra.mxu0 0.0
  %1625 = vmatprep.subr.mxu0 0.0
  %1626 = vmatpush1.msra.mxu0 0.0
  %1627 = vmatprep.mubr.f32.mxu0 0.0
  %1628 = vmatmul.mubr.f32.gmra.mrb[0].mxu0 %v1558
  %v1629 = vpop.f32.mrb[0].mxu0
  %v1630 = vadd.f32 %v1556, %v1629
  %v1631 = vpop.f32.mrb[0].mxu0
  %1632 = vmatprep.mubr.f32.mxu0 0.0
  %1633 = vmatmul.mubr.f32.gmra.mrb[0].mxu0 %v1561
  %v1634 = vpop.f32.mrb[0].mxu0
  %v1635 = vadd.f32 %v1556, %v1634
  %v1636 = vpop.f32.mrb[0].mxu0
  %1637 = vdwg.mxu0
  %vm1638 = vcmp.ge.f32.partialorder %v1630, 0.0
  %vm1639 = vcmp.ge.f32.partialorder %v1635, 0.0
  %v1640 = vmul.f32 %v1630, 0.2
  %v1641 = vmul.f32 %v1635, 0.2
  %v1642 = vsel %vm1638, %v1630, %v1640
  %v1643 = vsel %vm1639, %v1635, %v1641
  %v1644 = vld [vmem:[%s7 + $0xe0] sm:$0xff]
  %v1645 = vld [vmem:[%s7 + $0xe8] sm:$0xff]
  %v1646 = vld [vmem:[%s7 + $0xf0] sm:$0xff]
  %v1647 = vld [vmem:[%s7 + $0xf8] sm:$0xff]
  %v1648 = vld [vmem:[%s7 + $0x100] sm:$0x1]
  %v1649 = vlaneseq
  %v1650 = vshrl.u32 %v1649, 7
  %v1651 = vsub.s32 0, %v1650
  %v1652 = vrot.slane %v1648, %v1651
  %v1654 = vsel %vm1363, %v1642, 0
  %v1657 = vsel %vm1363, %v1643, 0
  %1659 = vmatprep.subr.mxu0 0.0
  %1660 = vmatpush1.msra.mxu0 %v1644
  %1661 = vmatprep.subr.mxu0 0.0
  %1662 = vmatpush1.msra.mxu0 %v1645
  %1663 = vmatprep.subr.mxu0 0.0
  %1664 = vmatpush1.msra.mxu0 %v1646
  %1665 = vmatprep.subr.mxu0 0.0
  %1666 = vmatpush1.msra.mxu0 %v1647
  %1667 = vmatprep.subr.mxu0 0.0
  %1668 = vmatpush1.msra.mxu0 0.0
  %1669 = vmatprep.subr.mxu0 0.0
  %1670 = vmatpush1.msra.mxu0 0.0
  %1671 = vmatprep.subr.mxu0 0.0
  %1672 = vmatpush1.msra.mxu0 0.0
  %1673 = vmatprep.subr.mxu0 0.0
  %1674 = vmatpush1.msra.mxu0 0.0
  %1675 = vmatprep.subr.mxu0 0.0
  %1676 = vmatpush1.msra.mxu0 0.0
  %1677 = vmatprep.subr.mxu0 0.0
  %1678 = vmatpush1.msra.mxu0 0.0
  %1679 = vmatprep.subr.mxu0 0.0
  %1680 = vmatpush1.msra.mxu0 0.0
  %1681 = vmatprep.subr.mxu0 0.0
  %1682 = vmatpush1.msra.mxu0 0.0
  %1683 = vmatprep.subr.mxu0 0.0
  %1684 = vmatpush1.msra.mxu0 0.0
  %1685 = vmatprep.subr.mxu0 0.0
  %1686 = vmatpush1.msra.mxu0 0.0
  %1687 = vmatprep.subr.mxu0 0.0
  %1688 = vmatpush1.msra.mxu0 0.0
  %1689 = vmatprep.subr.mxu0 0.0
  %1690 = vmatpush1.msra.mxu0 0.0
  %1691 = vmatprep.subr.mxu0 0.0
  %1692 = vmatpush1.msra.mxu0 0.0
  %1693 = vmatprep.subr.mxu0 0.0
  %1694 = vmatpush1.msra.mxu0 0.0
  %1695 = vmatprep.subr.mxu0 0.0
  %1696 = vmatpush1.msra.mxu0 0.0
  %1697 = vmatprep.subr.mxu0 0.0
  %1698 = vmatpush1.msra.mxu0 0.0
  %1699 = vmatprep.subr.mxu0 0.0
  %1700 = vmatpush1.msra.mxu0 0.0
  %1701 = vmatprep.subr.mxu0 0.0
  %1702 = vmatpush1.msra.mxu0 0.0
  %1703 = vmatprep.subr.mxu0 0.0
  %1704 = vmatpush1.msra.mxu0 0.0
  %1705 = vmatprep.subr.mxu0 0.0
  %1706 = vmatpush1.msra.mxu0 0.0
  %1707 = vmatprep.subr.mxu0 0.0
  %1708 = vmatpush1.msra.mxu0 0.0
  %1709 = vmatprep.subr.mxu0 0.0
  %1710 = vmatpush1.msra.mxu0 0.0
  %1711 = vmatprep.subr.mxu0 0.0
  %1712 = vmatpush1.msra.mxu0 0.0
  %1713 = vmatprep.subr.mxu0 0.0
  %1714 = vmatpush1.msra.mxu0 0.0
  %1715 = vmatprep.subr.mxu0 0.0
  %1716 = vmatpush1.msra.mxu0 0.0
  %1717 = vmatprep.subr.mxu0 0.0
  %1718 = vmatpush1.msra.mxu0 0.0
  %1719 = vmatprep.subr.mxu0 0.0
  %1720 = vmatpush1.msra.mxu0 0.0
  %1721 = vmatprep.subr.mxu0 0.0
  %1722 = vmatpush1.msra.mxu0 0.0
  %1723 = vmatprep.mubr.f32.mxu0 0.0
  %1724 = vmatmul.mubr.f32.gmra.mrb[0].mxu0 %v1654
  %v1725 = vpop.f32.mrb[0].mxu0
  %v1726 = vadd.f32 %v1652, %v1725
  %v1727 = vpop.f32.mrb[0].mxu0
  %1728 = vmatprep.mubr.f32.mxu0 0.0
  %1729 = vmatmul.mubr.f32.gmra.mrb[0].mxu0 %v1657
  %v1730 = vpop.f32.mrb[0].mxu0
  %v1731 = vpop.f32.mrb[0].mxu0
  %1732 = vdwg.mxu0
  %v1733 = vxor.u32 %v1726, 2147483648
  %v1734 = vmul.f32 %v1733, 1.442695
  %v1735 = vpow.pop %v1734
  %v1736 = vadd.f32 %v1735, 1.0
  %v1737 = vrcp.pop %v1736
  %v1738 = vmul.f32 1.0, %v1737
  %vm1739 = vcmask 3072
  %1740 = vst.msk [vmem:[%s10] sm:$0xf] %vm1739, %v1738
  %v1741 = vld [vmem:[%s6] sm:$0x3]
  %v1742 = vld [vmem:[%s7 + $0x108] sm:$0xff]
  %v1743 = vld [vmem:[%s7 + $0x110] sm:$0xf]
  %v1745 = vsel %vm124, %v1741, 0
  %vm1747 = vcmask 1043456
  %v1749 = vsel %vm1747, %v1743, 0
  %1751 = vmatprep.subr.mxu0 0.0
  %1752 = vmatpush1.msra.mxu0 %v1749
  %1753 = vmatprep.subr.mxu0 0.0
  %1754 = vmatpush1.msra.mxu0 0.0
  %1755 = vmatprep.subr.mxu0 0.0
  %1756 = vmatpush1.msra.mxu0 0.0
  %1757 = vmatprep.subr.mxu0 0.0
  %1758 = vmatpush1.msra.mxu0 0.0
  %1759 = vmatprep.subr.mxu0 0.0
  %1760 = vmatpush1.msra.mxu0 0.0
  %1761 = vmatprep.subr.mxu0 0.0
  %1762 = vmatpush1.msra.mxu0 0.0
  %1763 = vmatprep.subr.mxu0 0.0
  %1764 = vmatpush1.msra.mxu0 0.0
  %1765 = vmatprep.subr.mxu0 0.0
  %1766 = vmatpush1.msra.mxu0 0.0
  %1767 = vmatprep.subr.mxu0 0.0
  %1768 = vmatpush1.msra.mxu0 0.0
  %1769 = vmatprep.subr.mxu0 0.0
  %1770 = vmatpush1.msra.mxu0 0.0
  %1771 = vmatprep.subr.mxu0 0.0
  %1772 = vmatpush1.msra.mxu0 0.0
  %1773 = vmatprep.subr.mxu0 0.0
  %1774 = vmatpush1.msra.mxu0 0.0
  %1775 = vmatprep.subr.mxu0 0.0
  %1776 = vmatpush1.msra.mxu0 0.0
  %1777 = vmatprep.subr.mxu0 0.0
  %1778 = vmatpush1.msra.mxu0 0.0
  %1779 = vmatprep.subr.mxu0 0.0
  %1780 = vmatpush1.msra.mxu0 0.0
  %1781 = vmatprep.subr.mxu0 0.0
  %1782 = vmatpush1.msra.mxu0 0.0
  %1783 = vmatprep.subr.mxu0 0.0
  %1784 = vmatpush1.msra.mxu0 0.0
  %1785 = vmatprep.subr.mxu0 0.0
  %1786 = vmatpush1.msra.mxu0 0.0
  %1787 = vmatprep.subr.mxu0 0.0
  %1788 = vmatpush1.msra.mxu0 0.0
  %1789 = vmatprep.subr.mxu0 0.0
  %1790 = vmatpush1.msra.mxu0 0.0
  %1791 = vmatprep.subr.mxu0 0.0
  %1792 = vmatpush1.msra.mxu0 0.0
  %1793 = vmatprep.subr.mxu0 0.0
  %1794 = vmatpush1.msra.mxu0 0.0
  %1795 = vmatprep.subr.mxu0 0.0
  %1796 = vmatpush1.msra.mxu0 0.0
  %1797 = vmatprep.subr.mxu0 0.0
  %1798 = vmatpush1.msra.mxu0 0.0
  %1799 = vmatprep.subr.mxu0 0.0
  %1800 = vmatpush1.msra.mxu0 0.0
  %1801 = vmatprep.subr.mxu0 0.0
  %1802 = vmatpush1.msra.mxu0 0.0
  %1803 = vmatprep.subr.mxu0 0.0
  %1804 = vmatpush1.msra.mxu0 0.0
  %1805 = vmatprep.subr.mxu0 0.0
  %1806 = vmatpush1.msra.mxu0 0.0
  %1807 = vmatprep.subr.mxu0 0.0
  %1808 = vmatpush1.msra.mxu0 0.0
  %1809 = vmatprep.subr.mxu0 0.0
  %1810 = vmatpush1.msra.mxu0 0.0
  %1811 = vmatprep.subr.mxu0 0.0
  %1812 = vmatpush1.msra.mxu0 0.0
  %1813 = vmatprep.subr.mxu0 0.0
  %1814 = vmatpush1.msra.mxu0 0.0
  %1815 = vmatprep.mubr.f32.mxu0 0.0
  %1816 = vmatmul.mubr.f32.gmra.mrb[0].mxu0 %v1745
  %v1817 = vpop.f32.mrb[0].mxu0
  %v1818 = vadd.f32 0.0, %v1817
  %v1819 = vpop.f32.mrb[0].mxu0
  %1820 = vdwg.mxu0
  %1821 = vmatprep.subr.mxu0 0.0
  %1822 = vmatpush1.msra.mxu0 %v1742
  %1823 = vmatprep.subr.mxu0 0.0
  %1824 = vmatpush1.msra.mxu0 0.0
  %1825 = vmatprep.subr.mxu0 0.0
  %1826 = vmatpush1.msra.mxu0 0.0
  %1827 = vmatprep.subr.mxu0 0.0
  %1828 = vmatpush1.msra.mxu0 0.0
  %1829 = vmatprep.subr.mxu0 0.0
  %1830 = vmatpush1.msra.mxu0 0.0
  %1831 = vmatprep.subr.mxu0 0.0
  %1832 = vmatpush1.msra.mxu0 0.0
  %1833 = vmatprep.subr.mxu0 0.0
  %1834 = vmatpush1.msra.mxu0 0.0
  %1835 = vmatprep.subr.mxu0 0.0
  %1836 = vmatpush1.msra.mxu0 0.0
  %1837 = vmatprep.subr.mxu0 0.0
  %1838 = vmatpush1.msra.mxu0 0.0
  %1839 = vmatprep.subr.mxu0 0.0
  %1840 = vmatpush1.msra.mxu0 0.0
  %1841 = vmatprep.subr.mxu0 0.0
  %1842 = vmatpush1.msra.mxu0 0.0
  %1843 = vmatprep.subr.mxu0 0.0
  %1844 = vmatpush1.msra.mxu0 0.0
  %1845 = vmatprep.subr.mxu0 0.0
  %1846 = vmatpush1.msra.mxu0 0.0
  %1847 = vmatprep.subr.mxu0 0.0
  %1848 = vmatpush1.msra.mxu0 0.0
  %1849 = vmatprep.subr.mxu0 0.0
  %1850 = vmatpush1.msra.mxu0 0.0
  %1851 = vmatprep.subr.mxu0 0.0
  %1852 = vmatpush1.msra.mxu0 0.0
  %1853 = vmatprep.subr.mxu0 0.0
  %1854 = vmatpush1.msra.mxu0 0.0
  %1855 = vmatprep.subr.mxu0 0.0
  %1856 = vmatpush1.msra.mxu0 0.0
  %1857 = vmatprep.subr.mxu0 0.0
  %1858 = vmatpush1.msra.mxu0 0.0
  %1859 = vmatprep.subr.mxu0 0.0
  %1860 = vmatpush1.msra.mxu0 0.0
  %1861 = vmatprep.subr.mxu0 0.0
  %1862 = vmatpush1.msra.mxu0 0.0
  %1863 = vmatprep.subr.mxu0 0.0
  %1864 = vmatpush1.msra.mxu0 0.0
  %1865 = vmatprep.subr.mxu0 0.0
  %1866 = vmatpush1.msra.mxu0 0.0
  %1867 = vmatprep.subr.mxu0 0.0
  %1868 = vmatpush1.msra.mxu0 0.0
  %1869 = vmatprep.subr.mxu0 0.0
  %1870 = vmatpush1.msra.mxu0 0.0
  %1871 = vmatprep.subr.mxu0 0.0
  %1872 = vmatpush1.msra.mxu0 0.0
  %1873 = vmatprep.subr.mxu0 0.0
  %1874 = vmatpush1.msra.mxu0 0.0
  %1875 = vmatprep.subr.mxu0 0.0
  %1876 = vmatpush1.msra.mxu0 0.0
  %1877 = vmatprep.subr.mxu0 0.0
  %1878 = vmatpush1.msra.mxu0 0.0
  %1879 = vmatprep.subr.mxu0 0.0
  %1880 = vmatpush1.msra.mxu0 0.0
  %1881 = vmatprep.subr.mxu0 0.0
  %1882 = vmatpush1.msra.mxu0 0.0
  %1883 = vmatprep.subr.mxu0 0.0
  %1884 = vmatpush1.msra.mxu0 0.0
  %1885 = vmatprep.mubr.f32.mxu0 0.0
  %1886 = vmatmul.mubr.f32.gmra.mrb[0].mxu0 %v1270
  %v1887 = vpop.f32.mrb[0].mxu0
  %v1888 = vadd.f32 %v1818, %v1887
  %v1889 = vpop.f32.mrb[0].mxu0
  %1890 = vdwg.mxu0
  %v1891 = vld [vmem:[%s7 + $0x118] sm:$0x1]
  %v1892 = vlaneseq
  %v1893 = vshrl.u32 %v1892, 7
  %v1894 = vsub.s32 0, %v1893
  %v1895 = vrot.slane %v1891, %v1894
  %v1896 = vadd.f32 %v1888, %v1895
  %v1897 = vmul.f32 %v1896, 0.999995
  %v1898 = vmax.f32 %v1897, 0.0
  %v1899 = vld [vmem:[%s7 + $0x120] sm:$0xff]
  %v1900 = vld [vmem:[%s7 + $0x128] sm:$0xff]
  %v1901 = vld [vmem:[%s7 + $0x130] sm:$0xff]
  %v1902 = vld [vmem:[%s7 + $0x138] sm:$0xff]
  %v1903 = vld [vmem:[%s7 + $0x140] sm:$0x1]
  %v1904 = vlaneseq
  %v1905 = vshrl.u32 %v1904, 7
  %v1906 = vsub.s32 0, %v1905
  %v1907 = vrot.slane %v1903, %v1906
  %v1909 = vsel %vm1363, %v1898, 0
  %1911 = vmatprep.subr.mxu0 0.0
  %1912 = vmatpush1.msra.mxu0 %v1899
  %1913 = vmatprep.subr.mxu0 0.0
  %1914 = vmatpush1.msra.mxu0 %v1900
  %1915 = vmatprep.subr.mxu0 0.0
  %1916 = vmatpush1.msra.mxu0 %v1901
  %1917 = vmatprep.subr.mxu0 0.0
  %1918 = vmatpush1.msra.mxu0 %v1902
  %1919 = vmatprep.subr.mxu0 0.0
  %1920 = vmatpush1.msra.mxu0 0.0
  %1921 = vmatprep.subr.mxu0 0.0
  %1922 = vmatpush1.msra.mxu0 0.0
  %1923 = vmatprep.subr.mxu0 0.0
  %1924 = vmatpush1.msra.mxu0 0.0
  %1925 = vmatprep.subr.mxu0 0.0
  %1926 = vmatpush1.msra.mxu0 0.0
  %1927 = vmatprep.subr.mxu0 0.0
  %1928 = vmatpush1.msra.mxu0 0.0
  %1929 = vmatprep.subr.mxu0 0.0
  %1930 = vmatpush1.msra.mxu0 0.0
  %1931 = vmatprep.subr.mxu0 0.0
  %1932 = vmatpush1.msra.mxu0 0.0
  %1933 = vmatprep.subr.mxu0 0.0
  %1934 = vmatpush1.msra.mxu0 0.0
  %1935 = vmatprep.subr.mxu0 0.0
  %1936 = vmatpush1.msra.mxu0 0.0
  %1937 = vmatprep.subr.mxu0 0.0
  %1938 = vmatpush1.msra.mxu0 0.0
  %1939 = vmatprep.subr.mxu0 0.0
  %1940 = vmatpush1.msra.mxu0 0.0
  %1941 = vmatprep.subr.mxu0 0.0
  %1942 = vmatpush1.msra.mxu0 0.0
  %1943 = vmatprep.subr.mxu0 0.0
  %1944 = vmatpush1.msra.mxu0 0.0
  %1945 = vmatprep.subr.mxu0 0.0
  %1946 = vmatpush1.msra.mxu0 0.0
  %1947 = vmatprep.subr.mxu0 0.0
  %1948 = vmatpush1.msra.mxu0 0.0
  %1949 = vmatprep.subr.mxu0 0.0
  %1950 = vmatpush1.msra.mxu0 0.0
  %1951 = vmatprep.subr.mxu0 0.0
  %1952 = vmatpush1.msra.mxu0 0.0
  %1953 = vmatprep.subr.mxu0 0.0
  %1954 = vmatpush1.msra.mxu0 0.0
  %1955 = vmatprep.subr.mxu0 0.0
  %1956 = vmatpush1.msra.mxu0 0.0
  %1957 = vmatprep.subr.mxu0 0.0
  %1958 = vmatpush1.msra.mxu0 0.0
  %1959 = vmatprep.subr.mxu0 0.0
  %1960 = vmatpush1.msra.mxu0 0.0
  %1961 = vmatprep.subr.mxu0 0.0
  %1962 = vmatpush1.msra.mxu0 0.0
  %1963 = vmatprep.subr.mxu0 0.0
  %1964 = vmatpush1.msra.mxu0 0.0
  %1965 = vmatprep.subr.mxu0 0.0
  %1966 = vmatpush1.msra.mxu0 0.0
  %1967 = vmatprep.subr.mxu0 0.0
  %1968 = vmatpush1.msra.mxu0 0.0
  %1969 = vmatprep.subr.mxu0 0.0
  %1970 = vmatpush1.msra.mxu0 0.0
  %1971 = vmatprep.subr.mxu0 0.0
  %1972 = vmatpush1.msra.mxu0 0.0
  %1973 = vmatprep.subr.mxu0 0.0
  %1974 = vmatpush1.msra.mxu0 0.0
  %1975 = vmatprep.mubr.f32.mxu0 0.0
  %1976 = vmatmul.mubr.f32.gmra.mrb[0].mxu0 %v1909
  %v1977 = vpop.f32.mrb[0].mxu0
  %v1978 = vadd.f32 %v1907, %v1977
  %v1979 = vpop.f32.mrb[0].mxu0
  %1980 = vdwg.mxu0
  %v1981 = vld [vmem:[%s7 + $0x148] sm:$0x1]
  %v1982 = vlaneseq
  %v1983 = vshrl.u32 %v1982, 7
  %v1984 = vsub.s32 0, %v1983
  %v1985 = vrot.slane %v1981, %v1984
  %v1986 = vsub.f32 %v1978, %v1985
  %v1987 = vmul.f32 %v1986, %v1986
  %vm1988 = vcmask 91136
  %v1989 = vsel %vm1988, %v1987, 0.0
  %1990 = vadd.xlane.f32.xlu0 %v1989
  %v1991 = vpop.xlane.xlu0 %1990
  %vm1992 = vcmask 1024
  %1993 = vst.msk [vmem:[%s11] sm:$0x3] %vm1992, %v1991
  // Predicated region
  $region34: #{dacad_forward.1} parent=0 // pred_check
    _
  $region35: #{dacad_forward.1} parent=0 // pred_check_branch
    %1995 = sbr.rel (0) target = $region37
  $region36: #{dacad_forward.1} parent=0 // pred_region
    _
  $region37: #{dacad_forward.1} parent=0 // pred_fallthru
    _
  // Predicated region
  $region38: #{dacad_forward.1} parent=0 // pred_check
    _
  $region39: #{dacad_forward.1} parent=0 // pred_check_branch
    %1997 = sbr.rel (0) target = $region41
  $region40: #{dacad_forward.1} parent=0 // pred_region
    _
  $region41: #{dacad_forward.1} parent=0 // pred_fallthru
    _
  // Predicated region
  $region42: #{dacad_forward.1} parent=0 // pred_check
    _
  $region43: #{dacad_forward.1} parent=0 // pred_check_branch
    %1999 = sbr.rel (0) target = $region45
  $region44: #{dacad_forward.1} parent=0 // pred_region
    _
  $region45: #{dacad_forward.1} parent=0 // pred_fallthru
    _
  // Predicated region
  $region46: #{dacad_forward.1} parent=0 // pred_check
    _
  $region47: #{dacad_forward.1} parent=0 // pred_check_branch
    %2001 = sbr.rel (0) target = $region49
  $region48: #{dacad_forward.1} parent=0 // pred_region
    _
  $region49: #{dacad_forward.1} parent=0 // pred_fallthru
    _
  // Predicated region
  $region50: #{dacad_forward.1} parent=0 // pred_check
    _
  $region51: #{dacad_forward.1} parent=0 // pred_check_branch
    %2003 = sbr.rel (0) target = $region53
  $region52: #{dacad_forward.1} parent=0 // pred_region
    _
  $region53: #{dacad_forward.1} parent=0 // pred_fallthru
    _
  // Predicated region
  $region54: #{dacad_forward.1} parent=0 // pred_check
    _
  $region55: #{dacad_forward.1} parent=0 // pred_check_branch
    %2005 = sbr.rel (0) target = $region57
  $region56: #{dacad_forward.1} parent=0 // pred_region
    _
  $region57: #{dacad_forward.1} parent=0 // pred_fallthru
    _
  // Predicated region
  $region58: #{dacad_forward.1} parent=0 // pred_check
    _
  $region59: #{dacad_forward.1} parent=0 // pred_check_branch
    %2007 = sbr.rel (0) target = $region61
  $region60: #{dacad_forward.1} parent=0 // pred_region
    _
  $region61: #{dacad_forward.1} parent=0 // pred_fallthru
    _
  // Predicated region
  $region62: #{dacad_forward.1} parent=0 // pred_check
    _
  $region63: #{dacad_forward.1} parent=0 // pred_check_branch
    %2009 = sbr.rel (0) target = $region65
  $region64: #{dacad_forward.1} parent=0 // pred_region
    _
  $region65: #{dacad_forward.1} parent=0 // pred_fallthru
    _

// kernel: dacad_forward.1
$region0: #{dacad_forward.1}
  #allocation0 [shape = 'u32[]', space=smem, size = 0x4, offset = 0x4, fixed_abs, tag = 'smem constant byte address 0x4 - core index']
  #allocation1 [shape = 'u32[144,128]{1,0:T(1,128)}', space=vmem, size = 0x12000, scoped, tag = 'internal scratch']
  %s0 = inlined_call_operand.vmem [shape: f32[2,32,4], index: 0, kind: input, shape index: {}]
  %s1 = inlined_call_operand.vmem [shape: f32[2,32,4], index: 1, kind: input, shape index: {}]
  %s2 = inlined_call_operand.vmem [shape: f32[2,32,4], index: 2, kind: input, shape index: {}]
  %s3 = inlined_call_operand.vmem [shape: f32[2,32,4], index: 3, kind: input, shape index: {}]
  %s4 = inlined_call_operand.vmem [shape: f32[2,32,4], index: 4, kind: input, shape index: {}]
  %s5 = inlined_call_operand.vmem [shape: f32[2,32,4], index: 5, kind: input, shape index: {}]
  %s6 = inlined_call_operand.vmem [shape: f32[2,4], index: 6, kind: input, shape index: {}]
  %s7 = inlined_call_operand.vmem [shape: f32[336,32], index: 7, kind: input, shape index: {}]
  %s8 = inlined_call_operand.vmem [shape: f32[12,8], index: 8, kind: output, shape index: {0}]
  %s9 = inlined_call_operand.vmem [shape: f32[12,8], index: 9, kind: output, shape index: {1}]
  %s10 = inlined_call_operand.vmem [shape: f32[4,1], index: 10, kind: output, shape index: {2}]
  %s11 = inlined_call_operand.vmem [shape: f32[2,1], index: 11, kind: output, shape index: {3}]
  %12 = xla_tuple %s8, %s9, %s10, %s11
  %s13 = sld [smem:[#allocation0]]
  $region66: #{dacad_forward.1} parent=0
    _
  %s15 = ssub.s32 1, %s13
  %s16 = scalar_select 0, %s15, %s13
  // Predicated region
  $region2: #{dacad_forward.1} parent=0 // pred_check
    _
  $region3: #{dacad_forward.1} parent=0 // pred_check_branch
    %18 = sbr.rel (0) target = $region5
  $region4: #{dacad_forward.1} parent=0 // pred_region
    _
  $region5: #{dacad_forward.1} parent=0 // pred_fallthru
    _
  // Predicated region
  $region6: #{dacad_forward.1} parent=0 // pred_check
    _
  $region7: #{dacad_forward.1} parent=0 // pred_check_branch
    %20 = sbr.rel (0) target = $region9
  $region8: #{dacad_forward.1} parent=0 // pred_region
    _
  $region9: #{dacad_forward.1} parent=0 // pred_fallthru
    _
  // Predicated region
  $region10: #{dacad_forward.1} parent=0 // pred_check
    _
  $region11: #{dacad_forward.1} parent=0 // pred_check_branch
    %22 = sbr.rel (0) target = $region13
  $region12: #{dacad_forward.1} parent=0 // pred_region
    _
  $region13: #{dacad_forward.1} parent=0 // pred_fallthru
    _
  // Predicated region
  $region14: #{dacad_forward.1} parent=0 // pred_check
    _
  $region15: #{dacad_forward.1} parent=0 // pred_check_branch
    %24 = sbr.rel (0) target = $region17
  $region16: #{dacad_forward.1} parent=0 // pred_region
    _
  $region17: #{dacad_forward.1} parent=0 // pred_fallthru
    _
  // Predicated region
  $region18: #{dacad_forward.1} parent=0 // pred_check
    _
  $region19: #{dacad_forward.1} parent=0 // pred_check_branch
    %26 = sbr.rel (0) target = $region21
  $region20: #{dacad_forward.1} parent=0 // pred_region
    _
  $region21: #{dacad_forward.1} parent=0 // pred_fallthru
    _
  // Predicated region
  $region22: #{dacad_forward.1} parent=0 // pred_check
    _
  $region23: #{dacad_forward.1} parent=0 // pred_check_branch
    %28 = sbr.rel (0) target = $region25
  $region24: #{dacad_forward.1} parent=0 // pred_region
    _
  $region25: #{dacad_forward.1} parent=0 // pred_fallthru
    _
  // Predicated region
  $region26: #{dacad_forward.1} parent=0 // pred_check
    _
  $region27: #{dacad_forward.1} parent=0 // pred_check_branch
    %30 = sbr.rel (0) target = $region29
  $region28: #{dacad_forward.1} parent=0 // pred_region
    _
  $region29: #{dacad_forward.1} parent=0 // pred_fallthru
    _
  // Predicated region
  $region30: #{dacad_forward.1} parent=0 // pred_check
    _
  $region31: #{dacad_forward.1} parent=0 // pred_check_branch
    %32 = sbr.rel (0) target = $region33
  $region32: #{dacad_forward.1} parent=0 // pred_region
    _
  $region33: #{dacad_forward.1} parent=0 // pred_fallthru
    _
  %v33 = vld [vmem:[%s0] sm:$0xff]
  %v34 = vld [vmem:[%s0 + $0x8] sm:$0xff]
  %v35 = vld [vmem:[%s0 + $0x10] sm:$0xff]
  %v36 = vld [vmem:[%s0 + $0x18] sm:$0xff]
  %v37 = vld [vmem:[%s0 + $0x20] sm:$0xff]
  %v38 = vld [vmem:[%s0 + $0x28] sm:$0xff]
  %v39 = vld [vmem:[%s0 + $0x30] sm:$0xff]
  %v40 = vld [vmem:[%s0 + $0x38] sm:$0xff]
  %v41 = vld [vmem:[%s1] sm:$0xff]
  %v42 = vld [vmem:[%s1 + $0x8] sm:$0xff]
  %v43 = vld [vmem:[%s1 + $0x10] sm:$0xff]
  %v44 = vld [vmem:[%s1 + $0x18] sm:$0xff]
  %v45 = vld [vmem:[%s1 + $0x20] sm:$0xff]
  %v46 = vld [vmem:[%s1 + $0x28] sm:$0xff]
  %v47 = vld [vmem:[%s1 + $0x30] sm:$0xff]
  %v48 = vld [vmem:[%s1 + $0x38] sm:$0xff]
  %v49 = vld [vmem:[%s2] sm:$0xff]
  %v50 = vld [vmem:[%s2 + $0x8] sm:$0xff]
  %v51 = vld [vmem:[%s2 + $0x10] sm:$0xff]
  %v52 = vld [vmem:[%s2 + $0x18] sm:$0xff]
  %v53 = vld [vmem:[%s2 + $0x20] sm:$0xff]
  %v54 = vld [vmem:[%s2 + $0x28] sm:$0xff]
  %v55 = vld [vmem:[%s2 + $0x30] sm:$0xff]
  %v56 = vld [vmem:[%s2 + $0x38] sm:$0xff]
  %v57 = vld [vmem:[%s3] sm:$0xff]
  %v58 = vld [vmem:[%s3 + $0x8] sm:$0xff]
  %v59 = vld [vmem:[%s3 + $0x10] sm:$0xff]
  %v60 = vld [vmem:[%s3 + $0x18] sm:$0xff]
  %v61 = vld [vmem:[%s3 + $0x20] sm:$0xff]
  %v62 = vld [vmem:[%s3 + $0x28] sm:$0xff]
  %v63 = vld [vmem:[%s3 + $0x30] sm:$0xff]
  %v64 = vld [vmem:[%s3 + $0x38] sm:$0xff]
  %v65 = vld [vmem:[%s4] sm:$0xff]
  %v66 = vld [vmem:[%s4 + $0x8] sm:$0xff]
  %v67 = vld [vmem:[%s4 + $0x10] sm:$0xff]
  %v68 = vld [vmem:[%s4 + $0x18] sm:$0xff]
  %v69 = vld [vmem:[%s4 + $0x20] sm:$0xff]
  %v70 = vld [vmem:[%s4 + $0x28] sm:$0xff]
  %v71 = vld [vmem:[%s4 + $0x30] sm:$0xff]
  %v72 = vld [vmem:[%s4 + $0x38] sm:$0xff]
  %v73 = vld [vmem:[%s5] sm:$0xff]
  %v74 = vld [vmem:[%s5 + $0x8] sm:$0xff]
  %v75 = vld [vmem:[%s5 + $0x10] sm:$0xff]
  %v76 = vld [vmem:[%s5 + $0x18] sm:$0xff]
  %v77 = vld [vmem:[%s5 + $0x20] sm:$0xff]
  %v78 = vld [vmem:[%s5 + $0x28] sm:$0xff]
  %v79 = vld [vmem:[%s5 + $0x30] sm:$0xff]
  %v80 = vld [vmem:[%s5 + $0x38] sm:$0xff]
  %v81 = vlaneseq
  %v82 = vand.u32 %v81, 127
  %v83 = vadd.s32 %v82, 128
  %v84 = vadd.s32 %v82, 256
  %vm85 = vcmp.lt.s32.totalorder %v82, 0
  %v86 = vsub.s32 0, %v82
  %v87 = vsel %vm85, %v86, %v82
  %v88 = vshrl.u32 %v87, 5
  %v89 = vand.u32 %v87, 31
  %v90 = vsub.s32 0, %v89
  %v91 = vsel %vm85, %v90, %v89
  %vm92 = vcmp.lt.s32.totalorder %v83, 0
  %v93 = vsub.s32 0, %v83
  %v94 = vsel %vm92, %v93, %v83
  %v95 = vshrl.u32 %v94, 5
  %v96 = vand.u32 %v94, 31
  %v97 = vsub.s32 0, %v96
  %v98 = vsel %vm92, %v97, %v96
  %vm99 = vcmp.lt.s32.totalorder %v84, 0
  %v100 = vsub.s32 0, %v84
  %v101 = vsel %vm99, %v100, %v84
  %v102 = vshrl.u32 %v101, 5
  %v103 = vand.u32 %v101, 31
  %v104 = vsub.s32 0, %v103
  %v105 = vsel %vm99, %v104, %v103
  %vm106 = vcmp.ne.s32.totalorder %v91, 0
  %vm107 = vcmp.ne.s32.totalorder %v98, 0
  %vm108 = vcmp.ne.s32.totalorder %v105, 0
  %vm109 = vcmp.lt.s32.totalorder %v91, 0
  %vm110 = vcmp.lt.s32.totalorder %v98, 0
  %vm111 = vcmp.lt.s32.totalorder %v105, 0
  %vm112 = vmand %vm109, %vm106
  %vm113 = vmand %vm110, %vm107
  %vm114 = vmand %vm111, %vm108
  %v115 = vadd.s32 %v91, 32
  %v116 = vadd.s32 %v98, 32
  %v117 = vadd.s32 %v105, 32
  %v118 = vsel %vm112, %v115, %v91
  %v119 = vsel %vm113, %v116, %v98
  %v120 = vsel %vm114, %v117, %v105
  %v121 = vld [vmem:[%s7] sm:$0xff]
  %v122 = vld [vmem:[%s7 + $0x8] sm:$0xff]
  %v123 = vld [vmem:[%s7 + $0x10] sm:$0xff]
  %vm124 = vcmask 31744
  %v126 = vsel %vm124, %v121, 0
  %v129 = vsel %vm124, %v122, 0
  %v132 = vsel %vm124, %v123, 0
  %v135 = vsel %vm124, %v33, 0
  %v138 = vsel %vm124, %v34, 0
  %v141 = vsel %vm124, %v35, 0
  %v144 = vsel %vm124, %v36, 0
  %v147 = vsel %vm124, %v37, 0
  %v150 = vsel %vm124, %v38, 0
  %v153 = vsel %vm124, %v39, 0
  %v156 = vsel %vm124, %v40, 0
  %v159 = vsel %vm124, %v41, 0
  %v162 = vsel %vm124, %v42, 0
  %v165 = vsel %vm124, %v43, 0
  %v168 = vsel %vm124, %v44, 0
  %v171 = vsel %vm124, %v45, 0
  %v174 = vsel %vm124, %v46, 0
  %v177 = vsel %vm124, %v47, 0
  %v180 = vsel %vm124, %v48, 0
  %v183 = vsel %vm124, %v49, 0
  %v186 = vsel %vm124, %v50, 0
  %v189 = vsel %vm124, %v51, 0
  %v192 = vsel %vm124, %v52, 0
  %v195 = vsel %vm124, %v53, 0
  %v198 = vsel %vm124, %v54, 0
  %v201 = vsel %vm124, %v55, 0
  %v204 = vsel %vm124, %v56, 0
  %v207 = vsel %vm124, %v57, 0
  %v210 = vsel %vm124, %v58, 0
  %v213 = vsel %vm124, %v59, 0
  %v216 = vsel %vm124, %v60, 0
  %v219 = vsel %vm124, %v61, 0
  %v222 = vsel %vm124, %v62, 0
  %v225 = vsel %vm124, %v63, 0
  %v228 = vsel %vm124, %v64, 0
  %v231 = vsel %vm124, %v65, 0
  %v234 = vsel %vm124, %v66, 0
  %v237 = vsel %vm124, %v67, 0
  %v240 = vsel %vm124, %v68, 0
  %v243 = vsel %vm124, %v69, 0
  %v246 = vsel %vm124, %v70, 0
  %v249 = vsel %vm124, %v71, 0
  %v252 = vsel %vm124, %v72, 0
  %v255 = vsel %vm124, %v73, 0
  %v258 = vsel %vm124, %v74, 0
  %v261 = vsel %vm124, %v75, 0
  %v264 = vsel %vm124, %v76, 0
  %v267 = vsel %vm124, %v77, 0
  %v270 = vsel %vm124, %v78, 0
  %v273 = vsel %vm124, %v79, 0
  %v276 = vsel %vm124, %v80, 0
  %278 = vmatprep.subr.mxu0 0.0
  %279 = vmatpush1.xpose.msra.mxu0 %v135
  %280 = vmatprep.subr.mxu0 0.0
  %281 = vmatpush1.xpose.msra.mxu0 %v138
  %282 = vmatprep.subr.mxu0 0.0
  %283 = vmatpush1.xpose.msra.mxu0 %v141
  %284 = vmatprep.subr.mxu0 0.0
  %285 = vmatpush1.xpose.msra.mxu0 %v144
  %286 = vmatprep.subr.mxu0 0.0
  %287 = vmatpush1.xpose.msra.mxu0 %v147
  %288 = vmatprep.subr.mxu0 0.0
  %289 = vmatpush1.xpose.msra.mxu0 %v150
  %290 = vmatprep.subr.mxu0 0.0
  %291 = vmatpush1.xpose.msra.mxu0 %v153
  %292 = vmatprep.subr.mxu0 0.0
  %293 = vmatpush1.xpose.msra.mxu0 %v156
  %294 = vmatprep.subr.mxu0 0.0
  %295 = vmatpush1.xpose.msra.mxu0 %v159
  %296 = vmatprep.subr.mxu0 0.0
  %297 = vmatpush1.xpose.msra.mxu0 %v162
  %298 = vmatprep.subr.mxu0 0.0
  %299 = vmatpush1.xpose.msra.mxu0 %v165
  %300 = vmatprep.subr.mxu0 0.0
  %301 = vmatpush1.xpose.msra.mxu0 %v168
  %302 = vmatprep.subr.mxu0 0.0
  %303 = vmatpush1.xpose.msra.mxu0 %v171
  %304 = vmatprep.subr.mxu0 0.0
  %305 = vmatpush1.xpose.msra.mxu0 %v174
  %306 = vmatprep.subr.mxu0 0.0
  %307 = vmatpush1.xpose.msra.mxu0 %v177
  %308 = vmatprep.subr.mxu0 0.0
  %309 = vmatpush1.xpose.msra.mxu0 %v180
  %310 = vmatprep.subr.mxu0 0.0
  %311 = vmatpush1.xpose.msra.mxu0 %v183
  %312 = vmatprep.subr.mxu0 0.0
  %313 = vmatpush1.xpose.msra.mxu0 %v186
  %314 = vmatprep.subr.mxu0 0.0
  %315 = vmatpush1.xpose.msra.mxu0 %v189
  %316 = vmatprep.subr.mxu0 0.0
  %317 = vmatpush1.xpose.msra.mxu0 %v192
  %318 = vmatprep.subr.mxu0 0.0
  %319 = vmatpush1.xpose.msra.mxu0 %v195
  %320 = vmatprep.subr.mxu0 0.0
  %321 = vmatpush1.xpose.msra.mxu0 %v198
  %322 = vmatprep.subr.mxu0 0.0
  %323 = vmatpush1.xpose.msra.mxu0 %v201
  %324 = vmatprep.subr.mxu0 0.0
  %325 = vmatpush1.xpose.msra.mxu0 %v204
  %326 = vmatprep.subr.mxu0 0.0
  %327 = vmatpush1.xpose.msra.mxu0 %v207
  %328 = vmatprep.subr.mxu0 0.0
  %329 = vmatpush1.xpose.msra.mxu0 %v210
  %330 = vmatprep.subr.mxu0 0.0
  %331 = vmatpush1.xpose.msra.mxu0 %v213
  %332 = vmatprep.subr.mxu0 0.0
  %333 = vmatpush1.xpose.msra.mxu0 %v216
  %334 = vmatprep.subr.mxu0 0.0
  %335 = vmatpush1.xpose.msra.mxu0 %v219
  %336 = vmatprep.subr.mxu0 0.0
  %337 = vmatpush1.xpose.msra.mxu0 %v222
  %338 = vmatprep.subr.mxu0 0.0
  %339 = vmatpush1.xpose.msra.mxu0 %v225
  %340 = vmatprep.subr.mxu0 0.0
  %341 = vmatpush1.xpose.msra.mxu0 %v228
  %342 = vmatprep.mubr.f32.mxu0 0.0
  %343 = vmatmul.mubr.f32.gmra.mrb[0].mxu0 %v126
  %v344 = vpop.f32.mrb[0].mxu0
  %v345 = vadd.f32 0.0, %v344
  %v346 = vpop.f32.mrb[0].mxu0
  %v347 = vadd.f32 0.0, %v346
  %348 = vmatprep.mubr.f32.mxu0 0.0
  %349 = vmatmul.mubr.f32.gmra.mrb[0].mxu0 %v129
  %v350 = vpop.f32.mrb[0].mxu0
  %v351 = vadd.f32 0.0, %v350
  %v352 = vpop.f32.mrb[0].mxu0
  %v353 = vadd.f32 0.0, %v352
  %354 = vmatprep.mubr.f32.mxu0 0.0
  %355 = vmatmul.mubr.f32.gmra.mrb[0].mxu0 %v132
  %v356 = vpop.f32.mrb[0].mxu0
  %v357 = vadd.f32 0.0, %v356
  %v358 = vpop.f32.mrb[0].mxu0
  %v359 = vadd.f32 0.0, %v358
  %360 = vdwg.mxu0
  %361 = vmatprep.subr.mxu0 0.0
  %362 = vmatpush1.xpose.msra.mxu0 %v231
  %363 = vmatprep.subr.mxu0 0.0
  %364 = vmatpush1.xpose.msra.mxu0 %v234
  %365 = vmatprep.subr.mxu0 0.0
  %366 = vmatpush1.xpose.msra.mxu0 %v237
  %367 = vmatprep.subr.mxu0 0.0
  %368 = vmatpush1.xpose.msra.mxu0 %v240
  %369 = vmatprep.subr.mxu0 0.0
  %370 = vmatpush1.xpose.msra.mxu0 %v243
  %371 = vmatprep.subr.mxu0 0.0
  %372 = vmatpush1.xpose.msra.mxu0 %v246
  %373 = vmatprep.subr.mxu0 0.0
  %374 = vmatpush1.xpose.msra.mxu0 %v249
  %375 = vmatprep.subr.mxu0 0.0
  %376 = vmatpush1.xpose.msra.mxu0 %v252
  %377 = vmatprep.subr.mxu0 0.0
  %378 = vmatpush1.xpose.msra.mxu0 %v255
  %379 = vmatprep.subr.mxu0 0.0
  %380 = vmatpush1.xpose.msra.mxu0 %v258
  %381 = vmatprep.subr.mxu0 0.0
  %382 = vmatpush1.xpose.msra.mxu0 %v261
  %383 = vmatprep.subr.mxu0 0.0
  %384 = vmatpush1.xpose.msra.mxu0 %v264
  %385 = vmatprep.subr.mxu0 0.0
  %386 = vmatpush1.xpose.msra.mxu0 %v267
  %387 = vmatprep.subr.mxu0 0.0
  %388 = vmatpush1.xpose.msra.mxu0 %v270
  %389 = vmatprep.subr.mxu0 0.0
  %390 = vmatpush1.xpose.msra.mxu0 %v273
  %391 = vmatprep.subr.mxu0 0.0
  %392 = vmatpush1.xpose.msra.mxu0 %v276
  %393 = vmatprep.subr.mxu0 0.0
  %394 = vmatpush1.xpose.msra.mxu0 0.0
  %395 = vmatprep.subr.mxu0 0.0
  %396 = vmatpush1.xpose.msra.mxu0 0.0
  %397 = vmatprep.subr.mxu0 0.0
  %398 = vmatpush1.xpose.msra.mxu0 0.0
  %399 = vmatprep.subr.mxu0 0.0
  %400 = vmatpush1.xpose.msra.mxu0 0.0
  %401 = vmatprep.subr.mxu0 0.0
  %402 = vmatpush1.xpose.msra.mxu0 0.0
  %403 = vmatprep.subr.mxu0 0.0
  %404 = vmatpush1.xpose.msra.mxu0 0.0
  %405 = vmatprep.subr.mxu0 0.0
  %406 = vmatpush1.xpose.msra.mxu0 0.0
  %407 = vmatprep.subr.mxu0 0.0
  %408 = vmatpush1.xpose.msra.mxu0 0.0
  %409 = vmatprep.subr.mxu0 0.0
  %410 = vmatpush1.xpose.msra.mxu0 0.0
  %411 = vmatprep.subr.mxu0 0.0
  %412 = vmatpush1.xpose.msra.mxu0 0.0
  %413 = vmatprep.subr.mxu0 0.0
  %414 = vmatpush1.xpose.msra.mxu0 0.0
  %415 = vmatprep.subr.mxu0 0.0
  %416 = vmatpush1.xpose.msra.mxu0 0.0
  %417 = vmatprep.subr.mxu0 0.0
  %418 = vmatpush1.xpose.msra.mxu0 0.0
  %419 = vmatprep.subr.mxu0 0.0
  %420 = vmatpush1.xpose.msra.mxu0 0.0
  %421 = vmatprep.subr.mxu0 0.0
  %422 = vmatpush1.xpose.msra.mxu0 0.0
  %423 = vmatprep.subr.mxu0 0.0
  %424 = vmatpush1.xpose.msra.mxu0 0.0
  %425 = vmatprep.mubr.f32.mxu0 0.0
  %426 = vmatmul.mubr.f32.gmra.mrb[0].mxu0 %v126
  %v427 = vpop.f32.mrb[0].mxu0
  %v428 = vadd.f32 0.0, %v427
  %v429 = vpop.f32.mrb[0].mxu0
  %430 = vmatprep.mubr.f32.mxu0 0.0
  %431 = vmatmul.mubr.f32.gmra.mrb[0].mxu0 %v129
  %v432 = vpop.f32.mrb[0].mxu0
  %v433 = vadd.f32 0.0, %v432
  %v434 = vpop.f32.mrb[0].mxu0
  %435 = vmatprep.mubr.f32.mxu0 0.0
  %436 = vmatmul.mubr.f32.gmra.mrb[0].mxu0 %v132
  %v437 = vpop.f32.mrb[0].mxu0
  %v438 = vadd.f32 0.0, %v437
  %v439 = vpop.f32.mrb[0].mxu0
  %440 = vdwg.mxu0
  %442 = vrot.lane.b32.xlu0 %v433, 1
  %v443 = vpop.permute.xlu0 %442
  %447 = vrot.lane.b32.xlu0 %v351, 1
  %v448 = vpop.permute.xlu0 %447
  %449 = vrot.lane.b32.xlu0 %v353, 1
  %v450 = vpop.permute.xlu0 %449
  %vm451 = vcmask 7168
  %v452 = vsel %vm451, %v448, %v450
  %v453 = vsel %vm451, %v450, %v443
  %v457 = vsel %vm451, %v443, %v448
  %vm458 = vcmp.ge.s32.totalorder %v118, 1
  %vm459 = vcmp.ge.s32.totalorder %v119, 1
  %vm460 = vcmp.ge.s32.totalorder %v120, 1
  %v461 = vsel %vm458, 1, 0
  %v462 = vsel %vm459, 1, 0
  %v463 = vsel %vm460, 1, 0
  %vm464 = vcmp.eq.s32.totalorder %v461, 1
  %vm465 = vcmp.eq.s32.totalorder %v462, 1
  %vm466 = vcmp.eq.s32.totalorder %v463, 1
  %v467 = vsel %vm464, %v457, 0.0
  %v468 = vsel %vm465, %v452, 0.0
  %v469 = vsel %vm466, %v453, 0.0
  %v470 = vadd.f32 %v345, %v467
  %v471 = vadd.f32 %v347, %v468
  %v472 = vadd.f32 %v428, %v469
  %v473 = vld [vmem:[%s7 + $0x18] sm:$0xff]
  %475 = vset.pattern.permute.xlu0 0
  %476 = vperm.xlu0 %475, %v473
  %v477 = vpop.permute.xlu0 %476
  %v479 = vadd.f32 %v470, %v477
  %v480 = vadd.f32 %v471, %v477
  %v481 = vadd.f32 %v472, %v477
  %v482 = vmax.f32 %v479, 0.0
  %v483 = vmax.f32 %v480, 0.0
  %v484 = vmax.f32 %v481, 0.0
  %v485 = vld [vmem:[%s7 + $0x20] sm:$0xff]
  %v486 = vld [vmem:[%s7 + $0x28] sm:$0xff]
  %vm487 = vcmask 64512
  %v489 = vsel %vm487, %v485, 0
  %v492 = vsel %vm487, %v486, 0
  %494 = vmatprep.subr.mxu0 %v483
  %495 = vmatpush1.msra.mxu0 %v482
  %496 = vmatprep.subr.mxu0 0.0
  %497 = vmatpush1.msra.mxu0 0.0
  %498 = vmatprep.subr.mxu0 0.0
  %499 = vmatpush1.msra.mxu0 0.0
  %500 = vmatprep.subr.mxu0 0.0
  %501 = vmatpush1.msra.mxu0 0.0
  %502 = vmatprep.subr.mxu0 0.0
  %503 = vmatpush1.msra.mxu0 0.0
  %504 = vmatprep.subr.mxu0 0.0
  %505 = vmatpush1.msra.mxu0 0.0
  %506 = vmatprep.subr.mxu0 0.0
  %507 = vmatpush1.msra.mxu0 0.0
  %508 = vmatprep.subr.mxu0 0.0
  %509 = vmatpush1.msra.mxu0 0.0
  %510 = vmatprep.subr.mxu0 0.0
  %511 = vmatpush1.msra.mxu0 0.0
  %512 = vmatprep.subr.mxu0 0.0
  %513 = vmatpush1.msra.mxu0 0.0
  %514 = vmatprep.subr.mxu0 0.0
  %515 = vmatpush1.msra.mxu0 0.0
  %516 = vmatprep.subr.mxu0 0.0
  %517 = vmatpush1.msra.mxu0 0.0
  %518 = vmatprep.subr.mxu0 0.0
  %519 = vmatpush1.msra.mxu0 0.0
  %520 = vmatprep.subr.mxu0 0.0
  %521 = vmatpush1.msra.mxu0 0.0
  %522 = vmatprep.subr.mxu0 0.0
  %523 = vmatpush1.msra.mxu0 0.0
  %524 = vmatprep.subr.mxu0 0.0
  %525 = vmatpush1.msra.mxu0 0.0
  %526 = vmatprep.subr.mxu0 0.0
  %527 = vmatpush1.msra.mxu0 0.0
  %528 = vmatprep.subr.mxu0 0.0
  %529 = vmatpush1.msra.mxu0 0.0
  %530 = vmatprep.subr.mxu0 0.0
  %531 = vmatpush1.msra.mxu0 0.0
  %532 = vmatprep.subr.mxu0 0.0
  %533 = vmatpush1.msra.mxu0 0.0
  %534 = vmatprep.subr.mxu0 0.0
  %535 = vmatpush1.msra.mxu0 0.0
  %536 = vmatprep.subr.mxu0 0.0
  %537 = vmatpush1.msra.mxu0 0.0
  %538 = vmatprep.subr.mxu0 0.0
  %539 = vmatpush1.msra.mxu0 0.0
  %540 = vmatprep.subr.mxu0 0.0
  %541 = vmatpush1.msra.mxu0 0.0
  %542 = vmatprep.subr.mxu0 0.0
  %543 = vmatpush1.msra.mxu0 0.0
  %544 = vmatprep.subr.mxu0 0.0
  %545 = vmatpush1.msra.mxu0 0.0
  %546 = vmatprep.subr.mxu0 0.0
  %547 = vmatpush1.msra.mxu0 0.0
  %548 = vmatprep.subr.mxu0 0.0
  %549 = vmatpush1.msra.mxu0 0.0
  %550 = vmatprep.subr.mxu0 0.0
  %551 = vmatpush1.msra.mxu0 0.0
  %552 = vmatprep.subr.mxu0 0.0
  %553 = vmatpush1.msra.mxu0 0.0
  %554 = vmatprep.subr.mxu0 0.0
  %555 = vmatpush1.msra.mxu0 0.0
  %556 = vmatprep.subr.mxu0 0.0
  %557 = vmatpush1.msra.mxu0 0.0
  %558 = vmatprep.mubr.f32.mxu0 0.0
  %559 = vmatmul.mubr.f32.gmra.mrb[0].mxu0 %v489
  %v560 = vpop.f32.mrb[0].mxu0
  %v561 = vadd.f32 0.0, %v560
  %v562 = vpop.f32.mrb[0].mxu0
  %v563 = vadd.f32 0.0, %v562
  %564 = vmatprep.mubr.f32.mxu0 0.0
  %565 = vmatmul.mubr.f32.gmra.mrb[0].mxu0 %v492
  %v566 = vpop.f32.mrb[0].mxu0
  %v567 = vadd.f32 0.0, %v566
  %v568 = vpop.f32.mrb[0].mxu0
  %v569 = vadd.f32 0.0, %v568
  %570 = vdwg.mxu0
  %571 = vmatprep.subr.mxu0 0.0
  %572 = vmatpush1.msra.mxu0 %v484
  %573 = vmatprep.subr.mxu0 0.0
  %574 = vmatpush1.msra.mxu0 0.0
  %575 = vmatprep.subr.mxu0 0.0
  %576 = vmatpush1.msra.mxu0 0.0
  %577 = vmatprep.subr.mxu0 0.0
  %578 = vmatpush1.msra.mxu0 0.0
  %579 = vmatprep.subr.mxu0 0.0
  %580 = vmatpush1.msra.mxu0 0.0
  %581 = vmatprep.subr.mxu0 0.0
  %582 = vmatpush1.msra.mxu0 0.0
  %583 = vmatprep.subr.mxu0 0.0
  %584 = vmatpush1.msra.mxu0 0.0
  %585 = vmatprep.subr.mxu0 0.0
  %586 = vmatpush1.msra.mxu0 0.0
  %587 = vmatprep.subr.mxu0 0.0
  %588 = vmatpush1.msra.mxu0 0.0
  %589 = vmatprep.subr.mxu0 0.0
  %590 = vmatpush1.msra.mxu0 0.0
  %591 = vmatprep.subr.mxu0 0.0
  %592 = vmatpush1.msra.mxu0 0.0
  %593 = vmatprep.subr.mxu0 0.0
  %594 = vmatpush1.msra.mxu0 0.0
  %595 = vmatprep.subr.mxu0 0.0
  %596 = vmatpush1.msra.mxu0 0.0
  %597 = vmatprep.subr.mxu0 0.0
  %598 = vmatpush1.msra.mxu0 0.0
  %599 = vmatprep.subr.mxu0 0.0
  %600 = vmatpush1.msra.mxu0 0.0
  %601 = vmatprep.subr.mxu0 0.0
  %602 = vmatpush1.msra.mxu0 0.0
  %603 = vmatprep.subr.mxu0 0.0
  %604 = vmatpush1.msra.mxu0 0.0
  %605 = vmatprep.subr.mxu0 0.0
  %606 = vmatpush1.msra.mxu0 0.0
  %607 = vmatprep.subr.mxu0 0.0
  %608 = vmatpush1.msra.mxu0 0.0
  %609 = vmatprep.subr.mxu0 0.0
  %610 = vmatpush1.msra.mxu0 0.0
  %611 = vmatprep.subr.mxu0 0.0
  %612 = vmatpush1.msra.mxu0 0.0
  %613 = vmatprep.subr.mxu0 0.0
  %614 = vmatpush1.msra.mxu0 0.0
  %615 = vmatprep.subr.mxu0 0.0
  %616 = vmatpush1.msra.mxu0 0.0
  %617 = vmatprep.subr.mxu0 0.0
  %618 = vmatpush1.msra.mxu0 0.0
  %619 = vmatprep.subr.mxu0 0.0
  %620 = vmatpush1.msra.mxu0 0.0
  %621 = vmatprep.subr.mxu0 0.0
  %622 = vmatpush1.msra.mxu0 0.0
  %623 = vmatprep.subr.mxu0 0.0
  %624 = vmatpush1.msra.mxu0 0.0
  %625 = vmatprep.subr.mxu0 0.0
  %626 = vmatpush1.msra.mxu0 0.0
  %627 = vmatprep.subr.mxu0 0.0
  %628 = vmatpush1.msra.mxu0 0.0
  %629 = vmatprep.subr.mxu0 0.0
  %630 = vmatpush1.msra.mxu0 0.0
  %631 = vmatprep.subr.mxu0 0.0
  %632 = vmatpush1.msra.mxu0 0.0
  %633 = vmatprep.subr.mxu0 0.0
  %634 = vmatpush1.msra.mxu0 0.0
  %635 = vmatprep.mubr.f32.mxu0 0.0
  %636 = vmatmul.mubr.f32.gmra.mrb[0].mxu0 %v489
  %v637 = vpop.f32.mrb[0].mxu0
  %v638 = vadd.f32 0.0, %v637
  %v639 = vpop.f32.mrb[0].mxu0
  %640 = vmatprep.mubr.f32.mxu0 0.0
  %641 = vmatmul.mubr.f32.gmra.mrb[0].mxu0 %v492
  %v642 = vpop.f32.mrb[0].mxu0
  %v643 = vadd.f32 0.0, %v642
  %v644 = vpop.f32.mrb[0].mxu0
  %645 = vdwg.mxu0
  %647 = vrot.lane.b32.xlu0 %v643, 1
  %v648 = vpop.permute.xlu0 %647
  %652 = vrot.lane.b32.xlu0 %v567, 1
  %v653 = vpop.permute.xlu0 %652
  %654 = vrot.lane.b32.xlu0 %v569, 1
  %v655 = vpop.permute.xlu0 %654
  %v656 = vsel %vm451, %v653, %v655
  %v657 = vsel %vm451, %v655, %v648
  %v661 = vsel %vm451, %v648, %v653
  %v662 = vsel %vm464, %v661, 0.0
  %v663 = vsel %vm465, %v656, 0.0
  %v664 = vsel %vm466, %v657, 0.0
  %v665 = vadd.f32 %v561, %v662
  %v666 = vadd.f32 %v563, %v663
  %v667 = vadd.f32 %v638, %v664
  %v668 = vld [vmem:[%s7 + $0x30] sm:$0xff]
  %670 = vset.pattern.permute.xlu0 0
  %671 = vperm.xlu0 %670, %v668
  %v672 = vpop.permute.xlu0 %671
  %v674 = vadd.f32 %v665, %v672
  %v675 = vadd.f32 %v666, %v672
  %v676 = vadd.f32 %v667, %v672
  %v677 = vmax.f32 %v674, 0.0
  %v678 = vmax.f32 %v675, 0.0
  %v679 = vmax.f32 %v676, 0.0
  %v680 = vld [vmem:[%s7 + $0x38] sm:$0xff]
  %682 = vset.pattern.permute.xlu0 0
  %683 = vperm.xlu0 %682, %v680
  %v684 = vpop.permute.xlu0 %683
  %v686 = vadd.f32 %v357, %v684
  %v687 = vadd.f32 %v359, %v684
  %v688 = vadd.f32 %v438, %v684
  %v689 = vadd.f32 %v677, %v686
  %v690 = vadd.f32 %v678, %v687
  %v691 = vadd.f32 %v679, %v688
  %v692 = vmax.f32 %v689, 0.0
  %v693 = vmax.f32 %v690, 0.0
  %v694 = vmax.f32 %v691, 0.0
  %v695 = vld [vmem:[%s7 + $0x40] sm:$0xff]
  %v696 = vld [vmem:[%s7 + $0x48] sm:$0xff]
  %v698 = vsel %vm487, %v695, 0
  %v701 = vsel %vm487, %v696, 0
  %703 = vmatprep.subr.mxu0 %v693
  %704 = vmatpush1.msra.mxu0 %v692
  %705 = vmatprep.subr.mxu0 0.0
  %706 = vmatpush1.msra.mxu0 0.0
  %707 = vmatprep.subr.mxu0 0.0
  %708 = vmatpush1.msra.mxu0 0.0
  %709 = vmatprep.subr.mxu0 0.0
  %710 = vmatpush1.msra.mxu0 0.0
  %711 = vmatprep.subr.mxu0 0.0
  %712 = vmatpush1.msra.mxu0 0.0
  %713 = vmatprep.subr.mxu0 0.0
  %714 = vmatpush1.msra.mxu0 0.0
  %715 = vmatprep.subr.mxu0 0.0
  %716 = vmatpush1.msra.mxu0 0.0
  %717 = vmatprep.subr.mxu0 0.0
  %718 = vmatpush1.msra.mxu0 0.0
  %719 = vmatprep.subr.mxu0 0.0
  %720 = vmatpush1.msra.mxu0 0.0
  %721 = vmatprep.subr.mxu0 0.0
  %722 = vmatpush1.msra.mxu0 0.0
  %723 = vmatprep.subr.mxu0 0.0
  %724 = vmatpush1.msra.mxu0 0.0
  %725 = vmatprep.subr.mxu0 0.0
  %726 = vmatpush1.msra.mxu0 0.0
  %727 = vmatprep.subr.mxu0 0.0
  %728 = vmatpush1.msra.mxu0 0.0
  %729 = vmatprep.subr.mxu0 0.0
  %730 = vmatpush1.msra.mxu0 0.0
  %731 = vmatprep.subr.mxu0 0.0
  %732 = vmatpush1.msra.mxu0 0.0
  %733 = vmatprep.subr.mxu0 0.0
  %734 = vmatpush1.msra.mxu0 0.0
  %735 = vmatprep.subr.mxu0 0.0
  %736 = vmatpush1.msra.mxu0 0.0
  %737 = vmatprep.subr.mxu0 0.0
  %738 = vmatpush1.msra.mxu0 0.0
  %739 = vmatprep.subr.mxu0 0.0
  %740 = vmatpush1.msra.mxu0 0.0
  %741 = vmatprep.subr.mxu0 0.0
  %742 = vmatpush1.msra.mxu0 0.0
  %743 = vmatprep.subr.mxu0 0.0
  %744 = vmatpush1.msra.mxu0 0.0
  %745 = vmatprep.subr.mxu0 0.0
  %746 = vmatpush1.msra.mxu0 0.0
  %747 = vmatprep.subr.mxu0 0.0
  %748 = vmatpush1.msra.mxu0 0.0
  %749 = vmatprep.subr.mxu0 0.0
  %750 = vmatpush1.msra.mxu0 0.0
  %751 = vmatprep.subr.mxu0 0.0
  %752 = vmatpush1.msra.mxu0 0.0
  %753 = vmatprep.subr.mxu0 0.0
  %754 = vmatpush1.msra.mxu0 0.0
  %755 = vmatprep.subr.mxu0 0.0
  %756 = vmatpush1.msra.mxu0 0.0
  %757 = vmatprep.subr.mxu0 0.0
  %758 = vmatpush1.msra.mxu0 0.0
  %759 = vmatprep.subr.mxu0 0.0
  %760 = vmatpush1.msra.mxu0 0.0
  %761 = vmatprep.subr.mxu0 0.0
  %762 = vmatpush1.msra.mxu0 0.0
  %763 = vmatprep.subr.mxu0 0.0
  %764 = vmatpush1.msra.mxu0 0.0
  %765 = vmatprep.subr.mxu0 0.0
  %766 = vmatpush1.msra.mxu0 0.0
  %767 = vmatprep.mubr.f32.mxu0 0.0
  %768 = vmatmul.mubr.f32.gmra.mrb[0].mxu0 %v698
  %v769 = vpop.f32.mrb[0].mxu0
  %v770 = vadd.f32 0.0, %v769
  %v771 = vpop.f32.mrb[0].mxu0
  %v772 = vadd.f32 0.0, %v771
  %773 = vmatprep.mubr.f32.mxu0 0.0
  %774 = vmatmul.mubr.f32.gmra.mrb[0].mxu0 %v701
  %v775 = vpop.f32.mrb[0].mxu0
  %v776 = vadd.f32 0.0, %v775
  %v777 = vpop.f32.mrb[0].mxu0
  %v778 = vadd.f32 0.0, %v777
  %779 = vdwg.mxu0
  %780 = vmatprep.subr.mxu0 0.0
  %781 = vmatpush1.msra.mxu0 %v694
  %782 = vmatprep.subr.mxu0 0.0
  %783 = vmatpush1.msra.mxu0 0.0
  %784 = vmatprep.subr.mxu0 0.0
  %785 = vmatpush1.msra.mxu0 0.0
  %786 = vmatprep.subr.mxu0 0.0
  %787 = vmatpush1.msra.mxu0 0.0
  %788 = vmatprep.subr.mxu0 0.0
  %789 = vmatpush1.msra.mxu0 0.0
  %790 = vmatprep.subr.mxu0 0.0
  %791 = vmatpush1.msra.mxu0 0.0
  %792 = vmatprep.subr.mxu0 0.0
  %793 = vmatpush1.msra.mxu0 0.0
  %794 = vmatprep.subr.mxu0 0.0
  %795 = vmatpush1.msra.mxu0 0.0
  %796 = vmatprep.subr.mxu0 0.0
  %797 = vmatpush1.msra.mxu0 0.0
  %798 = vmatprep.subr.mxu0 0.0
  %799 = vmatpush1.msra.mxu0 0.0
  %800 = vmatprep.subr.mxu0 0.0
  %801 = vmatpush1.msra.mxu0 0.0
  %802 = vmatprep.subr.mxu0 0.0
  %803 = vmatpush1.msra.mxu0 0.0
  %804 = vmatprep.subr.mxu0 0.0
  %805 = vmatpush1.msra.mxu0 0.0
  %806 = vmatprep.subr.mxu0 0.0
  %807 = vmatpush1.msra.mxu0 0.0
  %808 = vmatprep.subr.mxu0 0.0
  %809 = vmatpush1.msra.mxu0 0.0
  %810 = vmatprep.subr.mxu0 0.0
  %811 = vmatpush1.msra.mxu0 0.0
  %812 = vmatprep.subr.mxu0 0.0
  %813 = vmatpush1.msra.mxu0 0.0
  %814 = vmatprep.subr.mxu0 0.0
  %815 = vmatpush1.msra.mxu0 0.0
  %816 = vmatprep.subr.mxu0 0.0
  %817 = vmatpush1.msra.mxu0 0.0
  %818 = vmatprep.subr.mxu0 0.0
  %819 = vmatpush1.msra.mxu0 0.0
  %820 = vmatprep.subr.mxu0 0.0
  %821 = vmatpush1.msra.mxu0 0.0
  %822 = vmatprep.subr.mxu0 0.0
  %823 = vmatpush1.msra.mxu0 0.0
  %824 = vmatprep.subr.mxu0 0.0
  %825 = vmatpush1.msra.mxu0 0.0
  %826 = vmatprep.subr.mxu0 0.0
  %827 = vmatpush1.msra.mxu0 0.0
  %828 = vmatprep.subr.mxu0 0.0
  %829 = vmatpush1.msra.mxu0 0.0
  %830 = vmatprep.subr.mxu0 0.0
  %831 = vmatpush1.msra.mxu0 0.0
  %832 = vmatprep.subr.mxu0 0.0
  %833 = vmatpush1.msra.mxu0 0.0
  %834 = vmatprep.subr.mxu0 0.0
  %835 = vmatpush1.msra.mxu0 0.0
  %836 = vmatprep.subr.mxu0 0.0
  %837 = vmatpush1.msra.mxu0 0.0
  %838 = vmatprep.subr.mxu0 0.0
  %839 = vmatpush1.msra.mxu0 0.0
  %840 = vmatprep.subr.mxu0 0.0
  %841 = vmatpush1.msra.mxu0 0.0
  %842 = vmatprep.subr.mxu0 0.0
  %843 = vmatpush1.msra.mxu0 0.0
  %844 = vmatprep.mubr.f32.mxu0 0.0
  %845 = vmatmul.mubr.f32.gmra.mrb[0].mxu0 %v698
  %v846 = vpop.f32.mrb[0].mxu0
  %v847 = vadd.f32 0.0, %v846
  %v848 = vpop.f32.mrb[0].mxu0
  %849 = vmatprep.mubr.f32.mxu0 0.0
  %850 = vmatmul.mubr.f32.gmra.mrb[0].mxu0 %v701
  %v851 = vpop.f32.mrb[0].mxu0
  %v852 = vadd.f32 0.0, %v851
  %v853 = vpop.f32.mrb[0].mxu0
  %854 = vdwg.mxu0
  %856 = vrot.lane.b32.xlu0 %v852, 2
  %v857 = vpop.permute.xlu0 %856
  %861 = vrot.lane.b32.xlu0 %v776, 2
  %v862 = vpop.permute.xlu0 %861
  %863 = vrot.lane.b32.xlu0 %v778, 2
  %v864 = vpop.permute.xlu0 %863
  %vm865 = vcmask 15360
  %v866 = vsel %vm865, %v862, %v864
  %v867 = vsel %vm865, %v864, %v857
  %v871 = vsel %vm865, %v857, %v862
  %vm872 = vcmp.ge.s32.totalorder %v118, 2
  %vm873 = vcmp.ge.s32.totalorder %v119, 2
  %vm874 = vcmp.ge.s32.totalorder %v120, 2
  %v875 = vsel %vm872, 1, 0
  %v876 = vsel %vm873, 1, 0
  %v877 = vsel %vm874, 1, 0
  %vm878 = vcmp.eq.s32.totalorder %v875, 1
  %vm879 = vcmp.eq.s32.totalorder %v876, 1
  %vm880 = vcmp.eq.s32.totalorder %v877, 1
  %v881 = vsel %vm878, %v871, 0.0
  %v882 = vsel %vm879, %v866, 0.0
  %v883 = vsel %vm880, %v867, 0.0
  %v884 = vadd.f32 %v770, %v881
  %v885 = vadd.f32 %v772, %v882
  %v886 = vadd.f32 %v847, %v883
  %v887 = vld [vmem:[%s7 + $0x50] sm:$0xff]
  %889 = vset.pattern.permute.xlu0 0
  %890 = vperm.xlu0 %889, %v887
  %v891 = vpop.permute.xlu0 %890
  %v893 = vadd.f32 %v884, %v891
  %v894 = vadd.f32 %v885, %v891
  %v895 = vadd.f32 %v886, %v891
  %v896 = vmax.f32 %v893, 0.0
  %v897 = vmax.f32 %v894, 0.0
  %v898 = vmax.f32 %v895, 0.0
  %v899 = vld [vmem:[%s7 + $0x58] sm:$0xff]
  %v900 = vld [vmem:[%s7 + $0x60] sm:$0xff]
  %v902 = vsel %vm487, %v899, 0
  %v905 = vsel %vm487, %v900, 0
  %907 = vmatprep.subr.mxu0 %v897
  %908 = vmatpush1.msra.mxu0 %v896
  %909 = vmatprep.subr.mxu0 0.0
  %910 = vmatpush1.msra.mxu0 0.0
  %911 = vmatprep.subr.mxu0 0.0
  %912 = vmatpush1.msra.mxu0 0.0
  %913 = vmatprep.subr.mxu0 0.0
  %914 = vmatpush1.msra.mxu0 0.0
  %915 = vmatprep.subr.mxu0 0.0
  %916 = vmatpush1.msra.mxu0 0.0
  %917 = vmatprep.subr.mxu0 0.0
  %918 = vmatpush1.msra.mxu0 0.0
  %919 = vmatprep.subr.mxu0 0.0
  %920 = vmatpush1.msra.mxu0 0.0
  %921 = vmatprep.subr.mxu0 0.0
  %922 = vmatpush1.msra.mxu0 0.0
  %923 = vmatprep.subr.mxu0 0.0
  %924 = vmatpush1.msra.mxu0 0.0
  %925 = vmatprep.subr.mxu0 0.0
  %926 = vmatpush1.msra.mxu0 0.0
  %927 = vmatprep.subr.mxu0 0.0
  %928 = vmatpush1.msra.mxu0 0.0
  %929 = vmatprep.subr.mxu0 0.0
  %930 = vmatpush1.msra.mxu0 0.0
  %931 = vmatprep.subr.mxu0 0.0
  %932 = vmatpush1.msra.mxu0 0.0
  %933 = vmatprep.subr.mxu0 0.0
  %934 = vmatpush1.msra.mxu0 0.0
  %935 = vmatprep.subr.mxu0 0.0
  %936 = vmatpush1.msra.mxu0 0.0
  %937 = vmatprep.subr.mxu0 0.0
  %938 = vmatpush1.msra.mxu0 0.0
  %939 = vmatprep.subr.mxu0 0.0
  %940 = vmatpush1.msra.mxu0 0.0
  %941 = vmatprep.subr.mxu0 0.0
  %942 = vmatpush1.msra.mxu0 0.0
  %943 = vmatprep.subr.mxu0 0.0
  %944 = vmatpush1.msra.mxu0 0.0
  %945 = vmatprep.subr.mxu0 0.0
  %946 = vmatpush1.msra.mxu0 0.0
  %947 = vmatprep.subr.mxu0 0.0
  %948 = vmatpush1.msra.mxu0 0.0
  %949 = vmatprep.subr.mxu0 0.0
  %950 = vmatpush1.msra.mxu0 0.0
  %951 = vmatprep.subr.mxu0 0.0
  %952 = vmatpush1.msra.mxu0 0.0
  %953 = vmatprep.subr.mxu0 0.0
  %954 = vmatpush1.msra.mxu0 0.0
  %955 = vmatprep.subr.mxu0 0.0
  %956 = vmatpush1.msra.mxu0 0.0
  %957 = vmatprep.subr.mxu0 0.0
  %958 = vmatpush1.msra.mxu0 0.0
  %959 = vmatprep.subr.mxu0 0.0
  %960 = vmatpush1.msra.mxu0 0.0
  %961 = vmatprep.subr.mxu0 0.0
  %962 = vmatpush1.msra.mxu0 0.0
  %963 = vmatprep.subr.mxu0 0.0
  %964 = vmatpush1.msra.mxu0 0.0
  %965 = vmatprep.subr.mxu0 0.0
  %966 = vmatpush1.msra.mxu0 0.0
  %967 = vmatprep.subr.mxu0 0.0
  %968 = vmatpush1.msra.mxu0 0.0
  %969 = vmatprep.subr.mxu0 0.0
  %970 = vmatpush1.msra.mxu0 0.0
  %971 = vmatprep.mubr.f32.mxu0 0.0
  %972 = vmatmul.mubr.f32.gmra.mrb[0].mxu0 %v902
  %v973 = vpop.f32.mrb[0].mxu0
  %v974 = vadd.f32 0.0, %v973
  %v975 = vpop.f32.mrb[0].mxu0
  %v976 = vadd.f32 0.0, %v975
  %977 = vmatprep.mubr.f32.mxu0 0.0
  %978 = vmatmul.mubr.f32.gmra.mrb[0].mxu0 %v905
  %v979 = vpop.f32.mrb[0].mxu0
  %v980 = vadd.f32 0.0, %v979
  %v981 = vpop.f32.mrb[0].mxu0
  %v982 = vadd.f32 0.0, %v981
  %983 = vdwg.mxu0
  %984 = vmatprep.subr.mxu0 0.0
  %985 = vmatpush1.msra.mxu0 %v898
  %986 = vmatprep.subr.mxu0 0.0
  %987 = vmatpush1.msra.mxu0 0.0
  %988 = vmatprep.subr.mxu0 0.0
  %989 = vmatpush1.msra.mxu0 0.0
  %990 = vmatprep.subr.mxu0 0.0
  %991 = vmatpush1.msra.mxu0 0.0
  %992 = vmatprep.subr.mxu0 0.0
  %993 = vmatpush1.msra.mxu0 0.0
  %994 = vmatprep.subr.mxu0 0.0
  %995 = vmatpush1.msra.mxu0 0.0
  %996 = vmatprep.subr.mxu0 0.0
  %997 = vmatpush1.msra.mxu0 0.0
  %998 = vmatprep.subr.mxu0 0.0
  %999 = vmatpush1.msra.mxu0 0.0
  %1000 = vmatprep.subr.mxu0 0.0
  %1001 = vmatpush1.msra.mxu0 0.0
  %1002 = vmatprep.subr.mxu0 0.0
  %1003 = vmatpush1.msra.mxu0 0.0
  %1004 = vmatprep.subr.mxu0 0.0
  %1005 = vmatpush1.msra.mxu0 0.0
  %1006 = vmatprep.subr.mxu0 0.0
  %1007 = vmatpush1.msra.mxu0 0.0
  %1008 = vmatprep.subr.mxu0 0.0
  %1009 = vmatpush1.msra.mxu0 0.0
  %1010 = vmatprep.subr.mxu0 0.0
  %1011 = vmatpush1.msra.mxu0 0.0
  %1012 = vmatprep.subr.mxu0 0.0
  %1013 = vmatpush1.msra.mxu0 0.0
  %1014 = vmatprep.subr.mxu0 0.0
  %1015 = vmatpush1.msra.mxu0 0.0
  %1016 = vmatprep.subr.mxu0 0.0
  %1017 = vmatpush1.msra.mxu0 0.0
  %1018 = vmatprep.subr.mxu0 0.0
  %1019 = vmatpush1.msra.mxu0 0.0
  %1020 = vmatprep.subr.mxu0 0.0
  %1021 = vmatpush1.msra.mxu0 0.0
  %1022 = vmatprep.subr.mxu0 0.0
  %1023 = vmatpush1.msra.mxu0 0.0
  %1024 = vmatprep.subr.mxu0 0.0
  %1025 = vmatpush1.msra.mxu0 0.0
  %1026 = vmatprep.subr.mxu0 0.0
  %1027 = vmatpush1.msra.mxu0 0.0
  %1028 = vmatprep.subr.mxu0 0.0
  %1029 = vmatpush1.msra.mxu0 0.0
  %1030 = vmatprep.subr.mxu0 0.0
  %1031 = vmatpush1.msra.mxu0 0.0
  %1032 = vmatprep.subr.mxu0 0.0
  %1033 = vmatpush1.msra.mxu0 0.0
  %1034 = vmatprep.subr.mxu0 0.0
  %1035 = vmatpush1.msra.mxu0 0.0
  %1036 = vmatprep.subr.mxu0 0.0
  %1037 = vmatpush1.msra.mxu0 0.0
  %1038 = vmatprep.subr.mxu0 0.0
  %1039 = vmatpush1.msra.mxu0 0.0
  %1040 = vmatprep.subr.mxu0 0.0
  %1041 = vmatpush1.msra.mxu0 0.0
  %1042 = vmatprep.subr.mxu0 0.0
  %1043 = vmatpush1.msra.mxu0 0.0
  %1044 = vmatprep.subr.mxu0 0.0
  %1045 = vmatpush1.msra.mxu0 0.0
  %1046 = vmatprep.subr.mxu0 0.0
  %1047 = vmatpush1.msra.mxu0 0.0
  %1048 = vmatprep.mubr.f32.mxu0 0.0
  %1049 = vmatmul.mubr.f32.gmra.mrb[0].mxu0 %v902
  %v1050 = vpop.f32.mrb[0].mxu0
  %v1051 = vadd.f32 0.0, %v1050
  %v1052 = vpop.f32.mrb[0].mxu0
  %1053 = vmatprep.mubr.f32.mxu0 0.0
  %1054 = vmatmul.mubr.f32.gmra.mrb[0].mxu0 %v905
  %v1055 = vpop.f32.mrb[0].mxu0
  %v1056 = vadd.f32 0.0, %v1055
  %v1057 = vpop.f32.mrb[0].mxu0
  %1058 = vdwg.mxu0
  %1060 = vrot.lane.b32.xlu0 %v1056, 2
  %v1061 = vpop.permute.xlu0 %1060
  %1065 = vrot.lane.b32.xlu0 %v980, 2
  %v1066 = vpop.permute.xlu0 %1065
  %1067 = vrot.lane.b32.xlu0 %v982, 2
  %v1068 = vpop.permute.xlu0 %1067
  %v1069 = vsel %vm865, %v1066, %v1068
  %v1070 = vsel %vm865, %v1068, %v1061
  %v1074 = vsel %vm865, %v1061, %v1066
  %v1075 = vsel %vm878, %v1074, 0.0
  %v1076 = vsel %vm879, %v1069, 0.0
  %v1077 = vsel %vm880, %v1070, 0.0
  %v1078 = vadd.f32 %v974, %v1075
  %v1079 = vadd.f32 %v976, %v1076
  %v1080 = vadd.f32 %v1051, %v1077
  %v1081 = vld [vmem:[%s7 + $0x68] sm:$0xff]
  %1083 = vset.pattern.permute.xlu0 0
  %1084 = vperm.xlu0 %1083, %v1081
  %v1085 = vpop.permute.xlu0 %1084
  %v1087 = vadd.f32 %v1078, %v1085
  %v1088 = vadd.f32 %v1079, %v1085
  %v1089 = vadd.f32 %v1080, %v1085
  %v1090 = vmax.f32 %v1087, 0.0
  %v1091 = vmax.f32 %v1088, 0.0
  %v1092 = vmax.f32 %v1089, 0.0
  %v1093 = vadd.f32 %v1090, %v692
  %v1094 = vadd.f32 %v1091, %v693
  %v1095 = vadd.f32 %v1092, %v694
  %v1096 = vmax.f32 %v1093, 0.0
  %v1097 = vmax.f32 %v1094, 0.0
  %v1098 = vmax.f32 %v1095, 0.0
  %v1099 = vlaneseq
  %v1100 = vshrl.u32 %v1099, 7
  %v1101 = vadd.s32 %v1100, 8
  %v1102 = vmul.u32 %v1100, 32
  %v1103 = vmul.u32 %v1101, 32
  %v1104 = vadd.s32 %v1102, 31
  %v1105 = vadd.s32 %v1103, 31
  %vm1106 = vcmp.eq.s32.totalorder %v82, %v1104
  %vm1107 = vcmp.eq.s32.totalorder %v83, %v1104
  %vm1108 = vcmp.eq.s32.totalorder %v84, %v1104
  %vm1109 = vcmp.eq.s32.totalorder %v82, %v1105
  %vm1110 = vcmp.eq.s32.totalorder %v83, %v1105
  %vm1111 = vcmp.eq.s32.totalorder %v84, %v1105
  %v1112 = vsel %vm1106, 1, 0
  %v1113 = vsel %vm1107, 1, 0
  %v1114 = vsel %vm1108, 1, 0
  %v1115 = vsel %vm1109, 1, 0
  %v1116 = vsel %vm1110, 1, 0
  %v1117 = vsel %vm1111, 1, 0
  %v1118 = vcvt.s32.f32 %v1112
  %v1119 = vcvt.s32.f32 %v1113
  %v1120 = vcvt.s32.f32 %v1114
  %v1121 = vcvt.s32.f32 %v1115
  %v1122 = vcvt.s32.f32 %v1116
  %v1123 = vcvt.s32.f32 %v1117
  %1124 = vmatprep.subr.mxu0 %v1097
  %1125 = vmatpush1.xpose.msra.mxu0 %v1096
  %1126 = vmatprep.subr.mxu0 0.0
  %1127 = vmatpush1.xpose.msra.mxu0 0.0
  %1128 = vmatprep.subr.mxu0 0.0
  %1129 = vmatpush1.xpose.msra.mxu0 0.0
  %1130 = vmatprep.subr.mxu0 0.0
  %1131 = vmatpush1.xpose.msra.mxu0 0.0
  %1132 = vmatprep.subr.mxu0 0.0
  %1133 = vmatpush1.xpose.msra.mxu0 0.0
  %1134 = vmatprep.subr.mxu0 0.0
  %1135 = vmatpush1.xpose.msra.mxu0 0.0
  %1136 = vmatprep.subr.mxu0 0.0
  %1137 = vmatpush1.xpose.msra.mxu0 0.0
  %1138 = vmatprep.subr.mxu0 0.0
  %1139 = vmatpush1.xpose.msra.mxu0 0.0
  %1140 = vmatprep.subr.mxu0 0.0
  %1141 = vmatpush1.xpose.msra.mxu0 0.0
  %1142 = vmatprep.subr.mxu0 0.0
  %1143 = vmatpush1.xpose.msra.mxu0 0.0
  %1144 = vmatprep.subr.mxu0 0.0
  %1145 = vmatpush1.xpose.msra.mxu0 0.0
  %1146 = vmatprep.subr.mxu0 0.0
  %1147 = vmatpush1.xpose.msra.mxu0 0.0
  %1148 = vmatprep.subr.mxu0 0.0
  %1149 = vmatpush1.xpose.msra.mxu0 0.0
  %1150 = vmatprep.subr.mxu0 0.0
  %1151 = vmatpush1.xpose.msra.mxu0 0.0
  %1152 = vmatprep.subr.mxu0 0.0
  %1153 = vmatpush1.xpose.msra.mxu0 0.0
  %1154 = vmatprep.subr.mxu0 0.0
  %1155 = vmatpush1.xpose.msra.mxu0 0.0
  %1156 = vmatprep.subr.mxu0 0.0
  %1157 = vmatpush1.xpose.msra.mxu0 0.0
  %1158 = vmatprep.subr.mxu0 0.0
  %1159 = vmatpush1.xpose.msra.mxu0 0.0
  %1160 = vmatprep.subr.mxu0 0.0
  %1161 = vmatpush1.xpose.msra.mxu0 0.0
  %1162 = vmatprep.subr.mxu0 0.0
  %1163 = vmatpush1.xpose.msra.mxu0 0.0
  %1164 = vmatprep.subr.mxu0 0.0
  %1165 = vmatpush1.xpose.msra.mxu0 0.0
  %1166 = vmatprep.subr.mxu0 0.0
  %1167 = vmatpush1.xpose.msra.mxu0 0.0
  %1168 = vmatprep.subr.mxu0 0.0
  %1169 = vmatpush1.xpose.msra.mxu0 0.0
  %1170 = vmatprep.subr.mxu0 0.0
  %1171 = vmatpush1.xpose.msra.mxu0 0.0
  %1172 = vmatprep.subr.mxu0 0.0
  %1173 = vmatpush1.xpose.msra.mxu0 0.0
  %1174 = vmatprep.subr.mxu0 0.0
  %1175 = vmatpush1.xpose.msra.mxu0 0.0
  %1176 = vmatprep.subr.mxu0 0.0
  %1177 = vmatpush1.xpose.msra.mxu0 0.0
  %1178 = vmatprep.subr.mxu0 0.0
  %1179 = vmatpush1.xpose.msra.mxu0 0.0
  %1180 = vmatprep.subr.mxu0 0.0
  %1181 = vmatpush1.xpose.msra.mxu0 0.0
  %1182 = vmatprep.subr.mxu0 0.0
  %1183 = vmatpush1.xpose.msra.mxu0 0.0
  %1184 = vmatprep.subr.mxu0 0.0
  %1185 = vmatpush1.xpose.msra.mxu0 0.0
  %1186 = vmatprep.subr.mxu0 0.0
  %1187 = vmatpush1.xpose.msra.mxu0 0.0
  %1188 = vmatprep.mubr.f32.mxu0 %v1119
  %1189 = vmatmul.mubr.f32.gmra.mrb[0].mxu0 %v1118
  %v1190 = vpop.f32.mrb[0].mxu0
  %v1191 = vadd.f32 0.0, %v1190
  %v1192 = vpop.f32.mrb[0].mxu0
  %1193 = vmatprep.mubr.f32.mxu0 %v1122
  %1194 = vmatmul.mubr.f32.gmra.mrb[0].mxu0 %v1121
  %v1195 = vpop.f32.mrb[0].mxu0
  %v1196 = vadd.f32 0.0, %v1195
  %v1197 = vpop.f32.mrb[0].mxu0
  %1198 = vdwg.mxu0
  %1199 = vmatprep.subr.mxu0 0.0
  %1200 = vmatpush1.xpose.msra.mxu0 %v1098
  %1201 = vmatprep.subr.mxu0 0.0
  %1202 = vmatpush1.xpose.msra.mxu0 0.0
  %1203 = vmatprep.subr.mxu0 0.0
  %1204 = vmatpush1.xpose.msra.mxu0 0.0
  %1205 = vmatprep.subr.mxu0 0.0
  %1206 = vmatpush1.xpose.msra.mxu0 0.0
  %1207 = vmatprep.subr.mxu0 0.0
  %1208 = vmatpush1.xpose.msra.mxu0 0.0
  %1209 = vmatprep.subr.mxu0 0.0
  %1210 = vmatpush1.xpose.msra.mxu0 0.0
  %1211 = vmatprep.subr.mxu0 0.0
  %1212 = vmatpush1.xpose.msra.mxu0 0.0
  %1213 = vmatprep.subr.mxu0 0.0
  %1214 = vmatpush1.xpose.msra.mxu0 0.0
  %1215 = vmatprep.subr.mxu0 0.0
  %1216 = vmatpush1.xpose.msra.mxu0 0.0
  %1217 = vmatprep.subr.mxu0 0.0
  %1218 = vmatpush1.xpose.msra.mxu0 0.0
  %1219 = vmatprep.subr.mxu0 0.0
  %1220 = vmatpush1.xpose.msra.mxu0 0.0
  %1221 = vmatprep.subr.mxu0 0.0
  %1222 = vmatpush1.xpose.msra.mxu0 0.0
  %1223 = vmatprep.subr.mxu0 0.0
  %1224 = vmatpush1.xpose.msra.mxu0 0.0
  %1225 = vmatprep.subr.mxu0 0.0
  %1226 = vmatpush1.xpose.msra.mxu0 0.0
  %1227 = vmatprep.subr.mxu0 0.0
  %1228 = vmatpush1.xpose.msra.mxu0 0.0
  %1229 = vmatprep.subr.mxu0 0.0
  %1230 = vmatpush1.xpose.msra.mxu0 0.0
  %1231 = vmatprep.subr.mxu0 0.0
  %1232 = vmatpush1.xpose.msra.mxu0 0.0
  %1233 = vmatprep.subr.mxu0 0.0
  %1234 = vmatpush1.xpose.msra.mxu0 0.0
  %1235 = vmatprep.subr.mxu0 0.0
  %1236 = vmatpush1.xpose.msra.mxu0 0.0
  %1237 = vmatprep.subr.mxu0 0.0
  %1238 = vmatpush1.xpose.msra.mxu0 0.0
  %1239 = vmatprep.subr.mxu0 0.0
  %1240 = vmatpush1.xpose.msra.mxu0 0.0
  %1241 = vmatprep.subr.mxu0 0.0
  %1242 = vmatpush1.xpose.msra.mxu0 0.0
  %1243 = vmatprep.subr.mxu0 0.0
  %1244 = vmatpush1.xpose.msra.mxu0 0.0
  %1245 = vmatprep.subr.mxu0 0.0
  %1246 = vmatpush1.xpose.msra.mxu0 0.0
  %1247 = vmatprep.subr.mxu0 0.0
  %1248 = vmatpush1.xpose.msra.mxu0 0.0
  %1249 = vmatprep.subr.mxu0 0.0
  %1250 = vmatpush1.xpose.msra.mxu0 0.0
  %1251 = vmatprep.subr.mxu0 0.0
  %1252 = vmatpush1.xpose.msra.mxu0 0.0
  %1253 = vmatprep.subr.mxu0 0.0
  %1254 = vmatpush1.xpose.msra.mxu0 0.0
  %1255 = vmatprep.subr.mxu0 0.0
  %1256 = vmatpush1.xpose.msra.mxu0 0.0
  %1257 = vmatprep.subr.mxu0 0.0
  %1258 = vmatpush1.xpose.msra.mxu0 0.0
  %1259 = vmatprep.subr.mxu0 0.0
  %1260 = vmatpush1.xpose.msra.mxu0 0.0
  %1261 = vmatprep.subr.mxu0 0.0
  %1262 = vmatpush1.xpose.msra.mxu0 0.0
  %1263 = vmatprep.mubr.f32.mxu0 0.0
  %1264 = vmatmul.mubr.f32.gmra.mrb[0].mxu0 %v1120
  %v1265 = vpop.f32.mrb[0].mxu0
  %v1266 = vadd.f32 %v1191, %v1265
  %v1267 = vpop.f32.mrb[0].mxu0
  %1268 = vmatprep.mubr.f32.mxu0 0.0
  %1269 = vmatmul.mubr.f32.gmra.mrb[0].mxu0 %v1123
  %v1270 = vpop.f32.mrb[0].mxu0
  %v1271 = vadd.f32 %v1196, %v1270
  %v1272 = vpop.f32.mrb[0].mxu0
  %1273 = vdwg.mxu0
  %v1274 = vmul.f32 %v1266, %v1266
  %v1275 = vmul.f32 %v1271, %v1271
  %v1276 = vsel %vm487, %v1274, 0.0
  %1277 = vadd.xlane.f32.xlu0 %v1276
  %v1278 = vpop.xlane.xlu0 %1277
  %vm1279 = vcmask 60416
  %v1280 = vsel %vm1279, %v1275, 0.0
  %1281 = vadd.xlane.f32.xlu0 %v1280
  %v1282 = vpop.xlane.xlu0 %1281
  %v1283 = vmax.f32 %v1278, 1e-24
  %v1284 = vmax.f32 %v1282, 1e-24
  %v1285 = vrsqrt.pop %v1283
  %v1286 = vrsqrt.pop %v1284
  %v1287 = vmul.f32 %v1266, %v1285
  %v1288 = vmul.f32 %v1271, %v1286
  %1289 = vst.msk [vmem:[%s8] sm:$0xff] %vm487, %v1287
  %1290 = vst.msk [vmem:[%s8 + $0x8] sm:$0xf] %vm1279, %v1288
  %v1291 = vld [vmem:[%s7 + $0x70] sm:$0xff]
  %v1292 = vld [vmem:[%s7 + $0x78] sm:$0x1]
  %v1293 = vlaneseq
  %v1294 = vshrl.u32 %v1293, 7
  %v1295 = vsub.s32 0, %v1294
  %v1296 = vrot.slane %v1292, %v1295
  %v1298 = vsel %vm487, %v1287, 0
  %v1301 = vsel %vm487, %v1288, 0
  %1303 = vmatprep.subr.mxu0 0.0
  %1304 = vmatpush1.msra.mxu0 %v1291
  %1305 = vmatprep.subr.mxu0 0.0
  %1306 = vmatpush1.msra.mxu0 0.0
  %1307 = vmatprep.subr.mxu0 0.0
  %1308 = vmatpush1.msra.mxu0 0.0
  %1309 = vmatprep.subr.mxu0 0.0
  %1310 = vmatpush1.msra.mxu0 0.0
  %1311 = vmatprep.subr.mxu0 0.0
  %1312 = vmatpush1.msra.mxu0 0.0
  %1313 = vmatprep.subr.mxu0 0.0
  %1314 = vmatpush1.msra.mxu0 0.0
  %1315 = vmatprep.subr.mxu0 0.0
  %1316 = vmatpush1.msra.mxu0 0.0
  %1317 = vmatprep.subr.mxu0 0.0
  %1318 = vmatpush1.msra.mxu0 0.0
  %1319 = vmatprep.subr.mxu0 0.0
  %1320 = vmatpush1.msra.mxu0 0.0
  %1321 = vmatprep.subr.mxu0 0.0
  %1322 = vmatpush1.msra.mxu0 0.0
  %1323 = vmatprep.subr.mxu0 0.0
  %1324 = vmatpush1.msra.mxu0 0.0
  %1325 = vmatprep.subr.mxu0 0.0
  %1326 = vmatpush1.msra.mxu0 0.0
  %1327 = vmatprep.subr.mxu0 0.0
  %1328 = vmatpush1.msra.mxu0 0.0
  %1329 = vmatprep.subr.mxu0 0.0
  %1330 = vmatpush1.msra.mxu0 0.0
  %1331 = vmatprep.subr.mxu0 0.0
  %1332 = vmatpush1.msra.mxu0 0.0
  %1333 = vmatprep.subr.mxu0 0.0
  %1334 = vmatpush1.msra.mxu0 0.0
  %1335 = vmatprep.subr.mxu0 0.0
  %1336 = vmatpush1.msra.mxu0 0.0
  %1337 = vmatprep.subr.mxu0 0.0
  %1338 = vmatpush1.msra.mxu0 0.0
  %1339 = vmatprep.subr.mxu0 0.0
  %1340 = vmatpush1.msra.mxu0 0.0
  %1341 = vmatprep.subr.mxu0 0.0
  %1342 = vmatpush1.msra.mxu0 0.0
  %1343 = vmatprep.subr.mxu0 0.0
  %1344 = vmatpush1.msra.mxu0 0.0
  %1345 = vmatprep.subr.mxu0 0.0
  %1346 = vmatpush1.msra.mxu0 0.0
  %1347 = vmatprep.subr.mxu0 0.0
  %1348 = vmatpush1.msra.mxu0 0.0
  %1349 = vmatprep.subr.mxu0 0.0
  %1350 = vmatpush1.msra.mxu0 0.0
  %1351 = vmatprep.subr.mxu0 0.0
  %1352 = vmatpush1.msra.mxu0 0.0
  %1353 = vmatprep.subr.mxu0 0.0
  %1354 = vmatpush1.msra.mxu0 0.0
  %1355 = vmatprep.subr.mxu0 0.0
  %1356 = vmatpush1.msra.mxu0 0.0
  %1357 = vmatprep.subr.mxu0 0.0
  %1358 = vmatpush1.msra.mxu0 0.0
  %1359 = vmatprep.subr.mxu0 0.0
  %1360 = vmatpush1.msra.mxu0 0.0
  %1361 = vmatprep.subr.mxu0 0.0
  %1362 = vmatpush1.msra.mxu0 0.0
  %1363 = vmatprep.subr.mxu0 0.0
  %1364 = vmatpush1.msra.mxu0 0.0
  %1365 = vmatprep.subr.mxu0 0.0
  %1366 = vmatpush1.msra.mxu0 0.0
  %1367 = vmatprep.mubr.f32.mxu0 0.0
  %1368 = vmatmul.mubr.f32.gmra.mrb[0].mxu0 %v1298
  %v1369 = vpop.f32.mrb[0].mxu0
  %v1370 = vadd.f32 %v1296, %v1369
  %v1371 = vpop.f32.mrb[0].mxu0
  %1372 = vmatprep.mubr.f32.mxu0 0.0
  %1373 = vmatmul.mubr.f32.gmra.mrb[0].mxu0 %v1301
  %v1374 = vpop.f32.mrb[0].mxu0
  %v1375 = vadd.f32 %v1296, %v1374
  %v1376 = vpop.f32.mrb[0].mxu0
  %1377 = vdwg.mxu0
  %v1378 = vmul.f32 %v1370, 0.999995
  %v1379 = vmul.f32 %v1375, 0.999995
  %v1380 = vmax.f32 %v1378, 0.0
  %v1381 = vmax.f32 %v1379, 0.0
  %v1382 = vld [vmem:[%s7 + $0x80] sm:$0xff]
  %v1383 = vld [vmem:[%s7 + $0x88] sm:$0xff]
  %v1384 = vld [vmem:[%s7 + $0x90] sm:$0xff]
  %v1385 = vld [vmem:[%s7 + $0x98] sm:$0xff]
  %v1386 = vld [vmem:[%s7 + $0xa0] sm:$0x1]
  %v1387 = vlaneseq
  %v1388 = vshrl.u32 %v1387, 7
  %v1389 = vsub.s32 0, %v1388
  %v1390 = vrot.slane %v1386, %v1389
  %vm1391 = vcmask 261120
  %v1393 = vsel %vm1391, %v1380, 0
  %v1396 = vsel %vm1391, %v1381, 0
  %1398 = vmatprep.subr.mxu0 0.0
  %1399 = vmatpush1.msra.mxu0 %v1382
  %1400 = vmatprep.subr.mxu0 0.0
  %1401 = vmatpush1.msra.mxu0 %v1383
  %1402 = vmatprep.subr.mxu0 0.0
  %1403 = vmatpush1.msra.mxu0 %v1384
  %1404 = vmatprep.subr.mxu0 0.0
  %1405 = vmatpush1.msra.mxu0 %v1385
  %1406 = vmatprep.subr.mxu0 0.0
  %1407 = vmatpush1.msra.mxu0 0.0
  %1408 = vmatprep.subr.mxu0 0.0
  %1409 = vmatpush1.msra.mxu0 0.0
  %1410 = vmatprep.subr.mxu0 0.0
  %1411 = vmatpush1.msra.mxu0 0.0
  %1412 = vmatprep.subr.mxu0 0.0
  %1413 = vmatpush1.msra.mxu0 0.0
  %1414 = vmatprep.subr.mxu0 0.0
  %1415 = vmatpush1.msra.mxu0 0.0
  %1416 = vmatprep.subr.mxu0 0.0
  %1417 = vmatpush1.msra.mxu0 0.0
  %1418 = vmatprep.subr.mxu0 0.0
  %1419 = vmatpush1.msra.mxu0 0.0
  %1420 = vmatprep.subr.mxu0 0.0
  %1421 = vmatpush1.msra.mxu0 0.0
  %1422 = vmatprep.subr.mxu0 0.0
  %1423 = vmatpush1.msra.mxu0 0.0
  %1424 = vmatprep.subr.mxu0 0.0
  %1425 = vmatpush1.msra.mxu0 0.0
  %1426 = vmatprep.subr.mxu0 0.0
  %1427 = vmatpush1.msra.mxu0 0.0
  %1428 = vmatprep.subr.mxu0 0.0
  %1429 = vmatpush1.msra.mxu0 0.0
  %1430 = vmatprep.subr.mxu0 0.0
  %1431 = vmatpush1.msra.mxu0 0.0
  %1432 = vmatprep.subr.mxu0 0.0
  %1433 = vmatpush1.msra.mxu0 0.0
  %1434 = vmatprep.subr.mxu0 0.0
  %1435 = vmatpush1.msra.mxu0 0.0
  %1436 = vmatprep.subr.mxu0 0.0
  %1437 = vmatpush1.msra.mxu0 0.0
  %1438 = vmatprep.subr.mxu0 0.0
  %1439 = vmatpush1.msra.mxu0 0.0
  %1440 = vmatprep.subr.mxu0 0.0
  %1441 = vmatpush1.msra.mxu0 0.0
  %1442 = vmatprep.subr.mxu0 0.0
  %1443 = vmatpush1.msra.mxu0 0.0
  %1444 = vmatprep.subr.mxu0 0.0
  %1445 = vmatpush1.msra.mxu0 0.0
  %1446 = vmatprep.subr.mxu0 0.0
  %1447 = vmatpush1.msra.mxu0 0.0
  %1448 = vmatprep.subr.mxu0 0.0
  %1449 = vmatpush1.msra.mxu0 0.0
  %1450 = vmatprep.subr.mxu0 0.0
  %1451 = vmatpush1.msra.mxu0 0.0
  %1452 = vmatprep.subr.mxu0 0.0
  %1453 = vmatpush1.msra.mxu0 0.0
  %1454 = vmatprep.subr.mxu0 0.0
  %1455 = vmatpush1.msra.mxu0 0.0
  %1456 = vmatprep.subr.mxu0 0.0
  %1457 = vmatpush1.msra.mxu0 0.0
  %1458 = vmatprep.subr.mxu0 0.0
  %1459 = vmatpush1.msra.mxu0 0.0
  %1460 = vmatprep.subr.mxu0 0.0
  %1461 = vmatpush1.msra.mxu0 0.0
  %1462 = vmatprep.mubr.f32.mxu0 0.0
  %1463 = vmatmul.mubr.f32.gmra.mrb[0].mxu0 %v1393
  %v1464 = vpop.f32.mrb[0].mxu0
  %v1465 = vadd.f32 %v1390, %v1464
  %v1466 = vpop.f32.mrb[0].mxu0
  %1467 = vmatprep.mubr.f32.mxu0 0.0
  %1468 = vmatmul.mubr.f32.gmra.mrb[0].mxu0 %v1396
  %v1469 = vpop.f32.mrb[0].mxu0
  %v1470 = vadd.f32 %v1390, %v1469
  %v1471 = vpop.f32.mrb[0].mxu0
  %1472 = vdwg.mxu0
  %v1473 = vmul.f32 %v1465, %v1465
  %v1474 = vmul.f32 %v1470, %v1470
  %v1475 = vsel %vm487, %v1473, 0.0
  %1476 = vadd.xlane.f32.xlu0 %v1475
  %v1477 = vpop.xlane.xlu0 %1476
  %v1478 = vsel %vm1279, %v1474, 0.0
  %1479 = vadd.xlane.f32.xlu0 %v1478
  %v1480 = vpop.xlane.xlu0 %1479
  %v1481 = vmax.f32 %v1477, 1e-24
  %v1482 = vmax.f32 %v1480, 1e-24
  %v1483 = vrsqrt.pop %v1481
  %v1484 = vrsqrt.pop %v1482
  %v1485 = vmul.f32 %v1465, %v1483
  %v1486 = vmul.f32 %v1470, %v1484
  %1487 = vst.msk [vmem:[%s9] sm:$0xff] %vm487, %v1485
  %1488 = vst.msk [vmem:[%s9 + $0x8] sm:$0xf] %vm1279, %v1486
  %v1489 = vld [vmem:[%s7 + $0xa8] sm:$0xff]
  %v1490 = vld [vmem:[%s7 + $0xb0] sm:$0x1]
  %v1491 = vlaneseq
  %v1492 = vshrl.u32 %v1491, 7
  %v1493 = vsub.s32 0, %v1492
  %v1494 = vrot.slane %v1490, %v1493
  %1495 = vmatprep.subr.mxu0 0.0
  %1496 = vmatpush1.msra.mxu0 %v1489
  %1497 = vmatprep.subr.mxu0 0.0
  %1498 = vmatpush1.msra.mxu0 0.0
  %1499 = vmatprep.subr.mxu0 0.0
  %1500 = vmatpush1.msra.mxu0 0.0
  %1501 = vmatprep.subr.mxu0 0.0
  %1502 = vmatpush1.msra.mxu0 0.0
  %1503 = vmatprep.subr.mxu0 0.0
  %1504 = vmatpush1.msra.mxu0 0.0
  %1505 = vmatprep.subr.mxu0 0.0
  %1506 = vmatpush1.msra.mxu0 0.0
  %1507 = vmatprep.subr.mxu0 0.0
  %1508 = vmatpush1.msra.mxu0 0.0
  %1509 = vmatprep.subr.mxu0 0.0
  %1510 = vmatpush1.msra.mxu0 0.0
  %1511 = vmatprep.subr.mxu0 0.0
  %1512 = vmatpush1.msra.mxu0 0.0
  %1513 = vmatprep.subr.mxu0 0.0
  %1514 = vmatpush1.msra.mxu0 0.0
  %1515 = vmatprep.subr.mxu0 0.0
  %1516 = vmatpush1.msra.mxu0 0.0
  %1517 = vmatprep.subr.mxu0 0.0
  %1518 = vmatpush1.msra.mxu0 0.0
  %1519 = vmatprep.subr.mxu0 0.0
  %1520 = vmatpush1.msra.mxu0 0.0
  %1521 = vmatprep.subr.mxu0 0.0
  %1522 = vmatpush1.msra.mxu0 0.0
  %1523 = vmatprep.subr.mxu0 0.0
  %1524 = vmatpush1.msra.mxu0 0.0
  %1525 = vmatprep.subr.mxu0 0.0
  %1526 = vmatpush1.msra.mxu0 0.0
  %1527 = vmatprep.subr.mxu0 0.0
  %1528 = vmatpush1.msra.mxu0 0.0
  %1529 = vmatprep.subr.mxu0 0.0
  %1530 = vmatpush1.msra.mxu0 0.0
  %1531 = vmatprep.subr.mxu0 0.0
  %1532 = vmatpush1.msra.mxu0 0.0
  %1533 = vmatprep.subr.mxu0 0.0
  %1534 = vmatpush1.msra.mxu0 0.0
  %1535 = vmatprep.subr.mxu0 0.0
  %1536 = vmatpush1.msra.mxu0 0.0
  %1537 = vmatprep.subr.mxu0 0.0
  %1538 = vmatpush1.msra.mxu0 0.0
  %1539 = vmatprep.subr.mxu0 0.0
  %1540 = vmatpush1.msra.mxu0 0.0
  %1541 = vmatprep.subr.mxu0 0.0
  %1542 = vmatpush1.msra.mxu0 0.0
  %1543 = vmatprep.subr.mxu0 0.0
  %1544 = vmatpush1.msra.mxu0 0.0
  %1545 = vmatprep.subr.mxu0 0.0
  %1546 = vmatpush1.msra.mxu0 0.0
  %1547 = vmatprep.subr.mxu0 0.0
  %1548 = vmatpush1.msra.mxu0 0.0
  %1549 = vmatprep.subr.mxu0 0.0
  %1550 = vmatpush1.msra.mxu0 0.0
  %1551 = vmatprep.subr.mxu0 0.0
  %1552 = vmatpush1.msra.mxu0 0.0
  %1553 = vmatprep.subr.mxu0 0.0
  %1554 = vmatpush1.msra.mxu0 0.0
  %1555 = vmatprep.subr.mxu0 0.0
  %1556 = vmatpush1.msra.mxu0 0.0
  %1557 = vmatprep.subr.mxu0 0.0
  %1558 = vmatpush1.msra.mxu0 0.0
  %1559 = vmatprep.mubr.f32.mxu0 0.0
  %1560 = vmatmul.mubr.f32.gmra.mrb[0].mxu0 %v1298
  %v1561 = vpop.f32.mrb[0].mxu0
  %v1562 = vadd.f32 %v1494, %v1561
  %v1563 = vpop.f32.mrb[0].mxu0
  %1564 = vmatprep.mubr.f32.mxu0 0.0
  %1565 = vmatmul.mubr.f32.gmra.mrb[0].mxu0 %v1301
  %v1566 = vpop.f32.mrb[0].mxu0
  %v1567 = vadd.f32 %v1494, %v1566
  %v1568 = vpop.f32.mrb[0].mxu0
  %1569 = vdwg.mxu0
  %vm1570 = vcmp.ge.f32.partialorder %v1562, 0.0
  %vm1571 = vcmp.ge.f32.partialorder %v1567, 0.0
  %v1572 = vmul.f32 %v1562, 0.2
  %v1573 = vmul.f32 %v1567, 0.2
  %v1574 = vsel %vm1570, %v1562, %v1572
  %v1575 = vsel %vm1571, %v1567, %v1573
  %v1576 = vld [vmem:[%s7 + $0xb8] sm:$0xff]
  %v1577 = vld [vmem:[%s7 + $0xc0] sm:$0xff]
  %v1578 = vld [vmem:[%s7 + $0xc8] sm:$0xff]
  %v1579 = vld [vmem:[%s7 + $0xd0] sm:$0xff]
  %v1580 = vld [vmem:[%s7 + $0xd8] sm:$0x1]
  %v1581 = vlaneseq
  %v1582 = vshrl.u32 %v1581, 7
  %v1583 = vsub.s32 0, %v1582
  %v1584 = vrot.slane %v1580, %v1583
  %v1586 = vsel %vm1391, %v1574, 0
  %v1589 = vsel %vm1391, %v1575, 0
  %1591 = vmatprep.subr.mxu0 0.0
  %1592 = vmatpush1.msra.mxu0 %v1576
  %1593 = vmatprep.subr.mxu0 0.0
  %1594 = vmatpush1.msra.mxu0 %v1577
  %1595 = vmatprep.subr.mxu0 0.0
  %1596 = vmatpush1.msra.mxu0 %v1578
  %1597 = vmatprep.subr.mxu0 0.0
  %1598 = vmatpush1.msra.mxu0 %v1579
  %1599 = vmatprep.subr.mxu0 0.0
  %1600 = vmatpush1.msra.mxu0 0.0
  %1601 = vmatprep.subr.mxu0 0.0
  %1602 = vmatpush1.msra.mxu0 0.0
  %1603 = vmatprep.subr.mxu0 0.0
  %1604 = vmatpush1.msra.mxu0 0.0
  %1605 = vmatprep.subr.mxu0 0.0
  %1606 = vmatpush1.msra.mxu0 0.0
  %1607 = vmatprep.subr.mxu0 0.0
  %1608 = vmatpush1.msra.mxu0 0.0
  %1609 = vmatprep.subr.mxu0 0.0
  %1610 = vmatpush1.msra.mxu0 0.0
  %1611 = vmatprep.subr.mxu0 0.0
  %1612 = vmatpush1.msra.mxu0 0.0
  %1613 = vmatprep.subr.mxu0 0.0
  %1614 = vmatpush1.msra.mxu0 0.0
  %1615 = vmatprep.subr.mxu0 0.0
  %1616 = vmatpush1.msra.mxu0 0.0
  %1617 = vmatprep.subr.mxu0 0.0
  %1618 = vmatpush1.msra.mxu0 0.0
  %1619 = vmatprep.subr.mxu0 0.0
  %1620 = vmatpush1.msra.mxu0 0.0
  %1621 = vmatprep.subr.mxu0 0.0
  %1622 = vmatpush1.msra.mxu0 0.0
  %1623 = vmatprep.subr.mxu0 0.0
  %1624 = vmatpush1.msra.mxu0 0.0
  %1625 = vmatprep.subr.mxu0 0.0
  %1626 = vmatpush1.msra.mxu0 0.0
  %1627 = vmatprep.subr.mxu0 0.0
  %1628 = vmatpush1.msra.mxu0 0.0
  %1629 = vmatprep.subr.mxu0 0.0
  %1630 = vmatpush1.msra.mxu0 0.0
  %1631 = vmatprep.subr.mxu0 0.0
  %1632 = vmatpush1.msra.mxu0 0.0
  %1633 = vmatprep.subr.mxu0 0.0
  %1634 = vmatpush1.msra.mxu0 0.0
  %1635 = vmatprep.subr.mxu0 0.0
  %1636 = vmatpush1.msra.mxu0 0.0
  %1637 = vmatprep.subr.mxu0 0.0
  %1638 = vmatpush1.msra.mxu0 0.0
  %1639 = vmatprep.subr.mxu0 0.0
  %1640 = vmatpush1.msra.mxu0 0.0
  %1641 = vmatprep.subr.mxu0 0.0
  %1642 = vmatpush1.msra.mxu0 0.0
  %1643 = vmatprep.subr.mxu0 0.0
  %1644 = vmatpush1.msra.mxu0 0.0
  %1645 = vmatprep.subr.mxu0 0.0
  %1646 = vmatpush1.msra.mxu0 0.0
  %1647 = vmatprep.subr.mxu0 0.0
  %1648 = vmatpush1.msra.mxu0 0.0
  %1649 = vmatprep.subr.mxu0 0.0
  %1650 = vmatpush1.msra.mxu0 0.0
  %1651 = vmatprep.subr.mxu0 0.0
  %1652 = vmatpush1.msra.mxu0 0.0
  %1653 = vmatprep.subr.mxu0 0.0
  %1654 = vmatpush1.msra.mxu0 0.0
  %1655 = vmatprep.mubr.f32.mxu0 0.0
  %1656 = vmatmul.mubr.f32.gmra.mrb[0].mxu0 %v1586
  %v1657 = vpop.f32.mrb[0].mxu0
  %v1658 = vadd.f32 %v1584, %v1657
  %v1659 = vpop.f32.mrb[0].mxu0
  %1660 = vmatprep.mubr.f32.mxu0 0.0
  %1661 = vmatmul.mubr.f32.gmra.mrb[0].mxu0 %v1589
  %v1662 = vpop.f32.mrb[0].mxu0
  %v1663 = vadd.f32 %v1584, %v1662
  %v1664 = vpop.f32.mrb[0].mxu0
  %1665 = vdwg.mxu0
  %vm1666 = vcmp.ge.f32.partialorder %v1658, 0.0
  %vm1667 = vcmp.ge.f32.partialorder %v1663, 0.0
  %v1668 = vmul.f32 %v1658, 0.2
  %v1669 = vmul.f32 %v1663, 0.2
  %v1670 = vsel %vm1666, %v1658, %v1668
  %v1671 = vsel %vm1667, %v1663, %v1669
  %v1672 = vld [vmem:[%s7 + $0xe0] sm:$0xff]
  %v1673 = vld [vmem:[%s7 + $0xe8] sm:$0xff]
  %v1674 = vld [vmem:[%s7 + $0xf0] sm:$0xff]
  %v1675 = vld [vmem:[%s7 + $0xf8] sm:$0xff]
  %v1676 = vld [vmem:[%s7 + $0x100] sm:$0x1]
  %v1677 = vlaneseq
  %v1678 = vshrl.u32 %v1677, 7
  %v1679 = vsub.s32 0, %v1678
  %v1680 = vrot.slane %v1676, %v1679
  %v1682 = vsel %vm1391, %v1670, 0
  %v1685 = vsel %vm1391, %v1671, 0
  %1687 = vmatprep.subr.mxu0 0.0
  %1688 = vmatpush1.msra.mxu0 %v1672
  %1689 = vmatprep.subr.mxu0 0.0
  %1690 = vmatpush1.msra.mxu0 %v1673
  %1691 = vmatprep.subr.mxu0 0.0
  %1692 = vmatpush1.msra.mxu0 %v1674
  %1693 = vmatprep.subr.mxu0 0.0
  %1694 = vmatpush1.msra.mxu0 %v1675
  %1695 = vmatprep.subr.mxu0 0.0
  %1696 = vmatpush1.msra.mxu0 0.0
  %1697 = vmatprep.subr.mxu0 0.0
  %1698 = vmatpush1.msra.mxu0 0.0
  %1699 = vmatprep.subr.mxu0 0.0
  %1700 = vmatpush1.msra.mxu0 0.0
  %1701 = vmatprep.subr.mxu0 0.0
  %1702 = vmatpush1.msra.mxu0 0.0
  %1703 = vmatprep.subr.mxu0 0.0
  %1704 = vmatpush1.msra.mxu0 0.0
  %1705 = vmatprep.subr.mxu0 0.0
  %1706 = vmatpush1.msra.mxu0 0.0
  %1707 = vmatprep.subr.mxu0 0.0
  %1708 = vmatpush1.msra.mxu0 0.0
  %1709 = vmatprep.subr.mxu0 0.0
  %1710 = vmatpush1.msra.mxu0 0.0
  %1711 = vmatprep.subr.mxu0 0.0
  %1712 = vmatpush1.msra.mxu0 0.0
  %1713 = vmatprep.subr.mxu0 0.0
  %1714 = vmatpush1.msra.mxu0 0.0
  %1715 = vmatprep.subr.mxu0 0.0
  %1716 = vmatpush1.msra.mxu0 0.0
  %1717 = vmatprep.subr.mxu0 0.0
  %1718 = vmatpush1.msra.mxu0 0.0
  %1719 = vmatprep.subr.mxu0 0.0
  %1720 = vmatpush1.msra.mxu0 0.0
  %1721 = vmatprep.subr.mxu0 0.0
  %1722 = vmatpush1.msra.mxu0 0.0
  %1723 = vmatprep.subr.mxu0 0.0
  %1724 = vmatpush1.msra.mxu0 0.0
  %1725 = vmatprep.subr.mxu0 0.0
  %1726 = vmatpush1.msra.mxu0 0.0
  %1727 = vmatprep.subr.mxu0 0.0
  %1728 = vmatpush1.msra.mxu0 0.0
  %1729 = vmatprep.subr.mxu0 0.0
  %1730 = vmatpush1.msra.mxu0 0.0
  %1731 = vmatprep.subr.mxu0 0.0
  %1732 = vmatpush1.msra.mxu0 0.0
  %1733 = vmatprep.subr.mxu0 0.0
  %1734 = vmatpush1.msra.mxu0 0.0
  %1735 = vmatprep.subr.mxu0 0.0
  %1736 = vmatpush1.msra.mxu0 0.0
  %1737 = vmatprep.subr.mxu0 0.0
  %1738 = vmatpush1.msra.mxu0 0.0
  %1739 = vmatprep.subr.mxu0 0.0
  %1740 = vmatpush1.msra.mxu0 0.0
  %1741 = vmatprep.subr.mxu0 0.0
  %1742 = vmatpush1.msra.mxu0 0.0
  %1743 = vmatprep.subr.mxu0 0.0
  %1744 = vmatpush1.msra.mxu0 0.0
  %1745 = vmatprep.subr.mxu0 0.0
  %1746 = vmatpush1.msra.mxu0 0.0
  %1747 = vmatprep.subr.mxu0 0.0
  %1748 = vmatpush1.msra.mxu0 0.0
  %1749 = vmatprep.subr.mxu0 0.0
  %1750 = vmatpush1.msra.mxu0 0.0
  %1751 = vmatprep.mubr.f32.mxu0 0.0
  %1752 = vmatmul.mubr.f32.gmra.mrb[0].mxu0 %v1682
  %v1753 = vpop.f32.mrb[0].mxu0
  %v1754 = vadd.f32 %v1680, %v1753
  %v1755 = vpop.f32.mrb[0].mxu0
  %1756 = vmatprep.mubr.f32.mxu0 0.0
  %1757 = vmatmul.mubr.f32.gmra.mrb[0].mxu0 %v1685
  %v1758 = vpop.f32.mrb[0].mxu0
  %v1759 = vpop.f32.mrb[0].mxu0
  %1760 = vdwg.mxu0
  %v1761 = vxor.u32 %v1754, 2147483648
  %v1762 = vmul.f32 %v1761, 1.442695
  %v1763 = vpow.pop %v1762
  %v1764 = vadd.f32 %v1763, 1.0
  %v1765 = vrcp.pop %v1764
  %v1766 = vmul.f32 1.0, %v1765
  %vm1767 = vcmask 3072
  %1768 = vst.msk [vmem:[%s10] sm:$0xf] %vm1767, %v1766
  %v1769 = vld [vmem:[%s6] sm:$0x3]
  %v1770 = vld [vmem:[%s7 + $0x108] sm:$0xff]
  %v1771 = vld [vmem:[%s7 + $0x110] sm:$0xf]
  %v1773 = vsel %vm124, %v1769, 0
  %vm1775 = vcmask 1043456
  %v1777 = vsel %vm1775, %v1771, 0
  %1779 = vmatprep.subr.mxu0 0.0
  %1780 = vmatpush1.msra.mxu0 %v1777
  %1781 = vmatprep.subr.mxu0 0.0
  %1782 = vmatpush1.msra.mxu0 0.0
  %1783 = vmatprep.subr.mxu0 0.0
  %1784 = vmatpush1.msra.mxu0 0.0
  %1785 = vmatprep.subr.mxu0 0.0
  %1786 = vmatpush1.msra.mxu0 0.0
  %1787 = vmatprep.subr.mxu0 0.0
  %1788 = vmatpush1.msra.mxu0 0.0
  %1789 = vmatprep.subr.mxu0 0.0
  %1790 = vmatpush1.msra.mxu0 0.0
  %1791 = vmatprep.subr.mxu0 0.0
  %1792 = vmatpush1.msra.mxu0 0.0
  %1793 = vmatprep.subr.mxu0 0.0
  %1794 = vmatpush1.msra.mxu0 0.0
  %1795 = vmatprep.subr.mxu0 0.0
  %1796 = vmatpush1.msra.mxu0 0.0
  %1797 = vmatprep.subr.mxu0 0.0
  %1798 = vmatpush1.msra.mxu0 0.0
  %1799 = vmatprep.subr.mxu0 0.0
  %1800 = vmatpush1.msra.mxu0 0.0
  %1801 = vmatprep.subr.mxu0 0.0
  %1802 = vmatpush1.msra.mxu0 0.0
  %1803 = vmatprep.subr.mxu0 0.0
  %1804 = vmatpush1.msra.mxu0 0.0
  %1805 = vmatprep.subr.mxu0 0.0
  %1806 = vmatpush1.msra.mxu0 0.0
  %1807 = vmatprep.subr.mxu0 0.0
  %1808 = vmatpush1.msra.mxu0 0.0
  %1809 = vmatprep.subr.mxu0 0.0
  %1810 = vmatpush1.msra.mxu0 0.0
  %1811 = vmatprep.subr.mxu0 0.0
  %1812 = vmatpush1.msra.mxu0 0.0
  %1813 = vmatprep.subr.mxu0 0.0
  %1814 = vmatpush1.msra.mxu0 0.0
  %1815 = vmatprep.subr.mxu0 0.0
  %1816 = vmatpush1.msra.mxu0 0.0
  %1817 = vmatprep.subr.mxu0 0.0
  %1818 = vmatpush1.msra.mxu0 0.0
  %1819 = vmatprep.subr.mxu0 0.0
  %1820 = vmatpush1.msra.mxu0 0.0
  %1821 = vmatprep.subr.mxu0 0.0
  %1822 = vmatpush1.msra.mxu0 0.0
  %1823 = vmatprep.subr.mxu0 0.0
  %1824 = vmatpush1.msra.mxu0 0.0
  %1825 = vmatprep.subr.mxu0 0.0
  %1826 = vmatpush1.msra.mxu0 0.0
  %1827 = vmatprep.subr.mxu0 0.0
  %1828 = vmatpush1.msra.mxu0 0.0
  %1829 = vmatprep.subr.mxu0 0.0
  %1830 = vmatpush1.msra.mxu0 0.0
  %1831 = vmatprep.subr.mxu0 0.0
  %1832 = vmatpush1.msra.mxu0 0.0
  %1833 = vmatprep.subr.mxu0 0.0
  %1834 = vmatpush1.msra.mxu0 0.0
  %1835 = vmatprep.subr.mxu0 0.0
  %1836 = vmatpush1.msra.mxu0 0.0
  %1837 = vmatprep.subr.mxu0 0.0
  %1838 = vmatpush1.msra.mxu0 0.0
  %1839 = vmatprep.subr.mxu0 0.0
  %1840 = vmatpush1.msra.mxu0 0.0
  %1841 = vmatprep.subr.mxu0 0.0
  %1842 = vmatpush1.msra.mxu0 0.0
  %1843 = vmatprep.mubr.f32.mxu0 0.0
  %1844 = vmatmul.mubr.f32.gmra.mrb[0].mxu0 %v1773
  %v1845 = vpop.f32.mrb[0].mxu0
  %v1846 = vadd.f32 0.0, %v1845
  %v1847 = vpop.f32.mrb[0].mxu0
  %1848 = vdwg.mxu0
  %1849 = vmatprep.subr.mxu0 0.0
  %1850 = vmatpush1.msra.mxu0 %v1770
  %1851 = vmatprep.subr.mxu0 0.0
  %1852 = vmatpush1.msra.mxu0 0.0
  %1853 = vmatprep.subr.mxu0 0.0
  %1854 = vmatpush1.msra.mxu0 0.0
  %1855 = vmatprep.subr.mxu0 0.0
  %1856 = vmatpush1.msra.mxu0 0.0
  %1857 = vmatprep.subr.mxu0 0.0
  %1858 = vmatpush1.msra.mxu0 0.0
  %1859 = vmatprep.subr.mxu0 0.0
  %1860 = vmatpush1.msra.mxu0 0.0
  %1861 = vmatprep.subr.mxu0 0.0
  %1862 = vmatpush1.msra.mxu0 0.0
  %1863 = vmatprep.subr.mxu0 0.0
  %1864 = vmatpush1.msra.mxu0 0.0
  %1865 = vmatprep.subr.mxu0 0.0
  %1866 = vmatpush1.msra.mxu0 0.0
  %1867 = vmatprep.subr.mxu0 0.0
  %1868 = vmatpush1.msra.mxu0 0.0
  %1869 = vmatprep.subr.mxu0 0.0
  %1870 = vmatpush1.msra.mxu0 0.0
  %1871 = vmatprep.subr.mxu0 0.0
  %1872 = vmatpush1.msra.mxu0 0.0
  %1873 = vmatprep.subr.mxu0 0.0
  %1874 = vmatpush1.msra.mxu0 0.0
  %1875 = vmatprep.subr.mxu0 0.0
  %1876 = vmatpush1.msra.mxu0 0.0
  %1877 = vmatprep.subr.mxu0 0.0
  %1878 = vmatpush1.msra.mxu0 0.0
  %1879 = vmatprep.subr.mxu0 0.0
  %1880 = vmatpush1.msra.mxu0 0.0
  %1881 = vmatprep.subr.mxu0 0.0
  %1882 = vmatpush1.msra.mxu0 0.0
  %1883 = vmatprep.subr.mxu0 0.0
  %1884 = vmatpush1.msra.mxu0 0.0
  %1885 = vmatprep.subr.mxu0 0.0
  %1886 = vmatpush1.msra.mxu0 0.0
  %1887 = vmatprep.subr.mxu0 0.0
  %1888 = vmatpush1.msra.mxu0 0.0
  %1889 = vmatprep.subr.mxu0 0.0
  %1890 = vmatpush1.msra.mxu0 0.0
  %1891 = vmatprep.subr.mxu0 0.0
  %1892 = vmatpush1.msra.mxu0 0.0
  %1893 = vmatprep.subr.mxu0 0.0
  %1894 = vmatpush1.msra.mxu0 0.0
  %1895 = vmatprep.subr.mxu0 0.0
  %1896 = vmatpush1.msra.mxu0 0.0
  %1897 = vmatprep.subr.mxu0 0.0
  %1898 = vmatpush1.msra.mxu0 0.0
  %1899 = vmatprep.subr.mxu0 0.0
  %1900 = vmatpush1.msra.mxu0 0.0
  %1901 = vmatprep.subr.mxu0 0.0
  %1902 = vmatpush1.msra.mxu0 0.0
  %1903 = vmatprep.subr.mxu0 0.0
  %1904 = vmatpush1.msra.mxu0 0.0
  %1905 = vmatprep.subr.mxu0 0.0
  %1906 = vmatpush1.msra.mxu0 0.0
  %1907 = vmatprep.subr.mxu0 0.0
  %1908 = vmatpush1.msra.mxu0 0.0
  %1909 = vmatprep.subr.mxu0 0.0
  %1910 = vmatpush1.msra.mxu0 0.0
  %1911 = vmatprep.subr.mxu0 0.0
  %1912 = vmatpush1.msra.mxu0 0.0
  %1913 = vmatprep.mubr.f32.mxu0 0.0
  %1914 = vmatmul.mubr.f32.gmra.mrb[0].mxu0 %v1298
  %v1915 = vpop.f32.mrb[0].mxu0
  %v1916 = vadd.f32 %v1846, %v1915
  %v1917 = vpop.f32.mrb[0].mxu0
  %1918 = vdwg.mxu0
  %v1919 = vld [vmem:[%s7 + $0x118] sm:$0x1]
  %v1920 = vlaneseq
  %v1921 = vshrl.u32 %v1920, 7
  %v1922 = vsub.s32 0, %v1921
  %v1923 = vrot.slane %v1919, %v1922
  %v1924 = vadd.f32 %v1916, %v1923
  %v1925 = vmul.f32 %v1924, 0.999995
  %v1926 = vmax.f32 %v1925, 0.0
  %v1927 = vld [vmem:[%s7 + $0x120] sm:$0xff]
  %v1928 = vld [vmem:[%s7 + $0x128] sm:$0xff]
  %v1929 = vld [vmem:[%s7 + $0x130] sm:$0xff]
  %v1930 = vld [vmem:[%s7 + $0x138] sm:$0xff]
  %v1931 = vld [vmem:[%s7 + $0x140] sm:$0x1]
  %v1932 = vlaneseq
  %v1933 = vshrl.u32 %v1932, 7
  %v1934 = vsub.s32 0, %v1933
  %v1935 = vrot.slane %v1931, %v1934
  %v1937 = vsel %vm1391, %v1926, 0
  %1939 = vmatprep.subr.mxu0 0.0
  %1940 = vmatpush1.msra.mxu0 %v1927
  %1941 = vmatprep.subr.mxu0 0.0
  %1942 = vmatpush1.msra.mxu0 %v1928
  %1943 = vmatprep.subr.mxu0 0.0
  %1944 = vmatpush1.msra.mxu0 %v1929
  %1945 = vmatprep.subr.mxu0 0.0
  %1946 = vmatpush1.msra.mxu0 %v1930
  %1947 = vmatprep.subr.mxu0 0.0
  %1948 = vmatpush1.msra.mxu0 0.0
  %1949 = vmatprep.subr.mxu0 0.0
  %1950 = vmatpush1.msra.mxu0 0.0
  %1951 = vmatprep.subr.mxu0 0.0
  %1952 = vmatpush1.msra.mxu0 0.0
  %1953 = vmatprep.subr.mxu0 0.0
  %1954 = vmatpush1.msra.mxu0 0.0
  %1955 = vmatprep.subr.mxu0 0.0
  %1956 = vmatpush1.msra.mxu0 0.0
  %1957 = vmatprep.subr.mxu0 0.0
  %1958 = vmatpush1.msra.mxu0 0.0
  %1959 = vmatprep.subr.mxu0 0.0
  %1960 = vmatpush1.msra.mxu0 0.0
  %1961 = vmatprep.subr.mxu0 0.0
  %1962 = vmatpush1.msra.mxu0 0.0
  %1963 = vmatprep.subr.mxu0 0.0
  %1964 = vmatpush1.msra.mxu0 0.0
  %1965 = vmatprep.subr.mxu0 0.0
  %1966 = vmatpush1.msra.mxu0 0.0
  %1967 = vmatprep.subr.mxu0 0.0
  %1968 = vmatpush1.msra.mxu0 0.0
  %1969 = vmatprep.subr.mxu0 0.0
  %1970 = vmatpush1.msra.mxu0 0.0
  %1971 = vmatprep.subr.mxu0 0.0
  %1972 = vmatpush1.msra.mxu0 0.0
  %1973 = vmatprep.subr.mxu0 0.0
  %1974 = vmatpush1.msra.mxu0 0.0
  %1975 = vmatprep.subr.mxu0 0.0
  %1976 = vmatpush1.msra.mxu0 0.0
  %1977 = vmatprep.subr.mxu0 0.0
  %1978 = vmatpush1.msra.mxu0 0.0
  %1979 = vmatprep.subr.mxu0 0.0
  %1980 = vmatpush1.msra.mxu0 0.0
  %1981 = vmatprep.subr.mxu0 0.0
  %1982 = vmatpush1.msra.mxu0 0.0
  %1983 = vmatprep.subr.mxu0 0.0
  %1984 = vmatpush1.msra.mxu0 0.0
  %1985 = vmatprep.subr.mxu0 0.0
  %1986 = vmatpush1.msra.mxu0 0.0
  %1987 = vmatprep.subr.mxu0 0.0
  %1988 = vmatpush1.msra.mxu0 0.0
  %1989 = vmatprep.subr.mxu0 0.0
  %1990 = vmatpush1.msra.mxu0 0.0
  %1991 = vmatprep.subr.mxu0 0.0
  %1992 = vmatpush1.msra.mxu0 0.0
  %1993 = vmatprep.subr.mxu0 0.0
  %1994 = vmatpush1.msra.mxu0 0.0
  %1995 = vmatprep.subr.mxu0 0.0
  %1996 = vmatpush1.msra.mxu0 0.0
  %1997 = vmatprep.subr.mxu0 0.0
  %1998 = vmatpush1.msra.mxu0 0.0
  %1999 = vmatprep.subr.mxu0 0.0
  %2000 = vmatpush1.msra.mxu0 0.0
  %2001 = vmatprep.subr.mxu0 0.0
  %2002 = vmatpush1.msra.mxu0 0.0
  %2003 = vmatprep.mubr.f32.mxu0 0.0
  %2004 = vmatmul.mubr.f32.gmra.mrb[0].mxu0 %v1937
  %v2005 = vpop.f32.mrb[0].mxu0
  %v2006 = vadd.f32 %v1935, %v2005
  %v2007 = vpop.f32.mrb[0].mxu0
  %2008 = vdwg.mxu0
  %v2009 = vld [vmem:[%s7 + $0x148] sm:$0x1]
  %v2010 = vlaneseq
  %v2011 = vshrl.u32 %v2010, 7
  %v2012 = vsub.s32 0, %v2011
  %v2013 = vrot.slane %v2009, %v2012
  %v2014 = vsub.f32 %v2006, %v2013
  %v2015 = vmul.f32 %v2014, %v2014
  %vm2016 = vcmask 91136
  %v2017 = vsel %vm2016, %v2015, 0.0
  %2018 = vadd.xlane.f32.xlu0 %v2017
  %v2019 = vpop.xlane.xlu0 %2018
  %vm2020 = vcmask 1024
  %2021 = vst.msk [vmem:[%s11] sm:$0x3] %vm2020, %v2019
  // Predicated region
  $region34: #{dacad_forward.1} parent=0 // pred_check
    _
  $region35: #{dacad_forward.1} parent=0 // pred_check_branch
    %2023 = sbr.rel (0) target = $region37
  $region36: #{dacad_forward.1} parent=0 // pred_region
    _
  $region37: #{dacad_forward.1} parent=0 // pred_fallthru
    _
  // Predicated region
  $region38: #{dacad_forward.1} parent=0 // pred_check
    _
  $region39: #{dacad_forward.1} parent=0 // pred_check_branch
    %2025 = sbr.rel (0) target = $region41
  $region40: #{dacad_forward.1} parent=0 // pred_region
    _
  $region41: #{dacad_forward.1} parent=0 // pred_fallthru
    _
  // Predicated region
  $region42: #{dacad_forward.1} parent=0 // pred_check
    _
  $region43: #{dacad_forward.1} parent=0 // pred_check_branch
    %2027 = sbr.rel (0) target = $region45
  $region44: #{dacad_forward.1} parent=0 // pred_region
    _
  $region45: #{dacad_forward.1} parent=0 // pred_fallthru
    _
  // Predicated region
  $region46: #{dacad_forward.1} parent=0 // pred_check
    _
  $region47: #{dacad_forward.1} parent=0 // pred_check_branch
    %2029 = sbr.rel (0) target = $region49
  $region48: #{dacad_forward.1} parent=0 // pred_region
    _
  $region49: #{dacad_forward.1} parent=0 // pred_fallthru
    _
  // Predicated region
  $region50: #{dacad_forward.1} parent=0 // pred_check
    _
  $region51: #{dacad_forward.1} parent=0 // pred_check_branch
    %2031 = sbr.rel (0) target = $region53
  $region52: #{dacad_forward.1} parent=0 // pred_region
    _
  $region53: #{dacad_forward.1} parent=0 // pred_fallthru
    _
  // Predicated region
  $region54: #{dacad_forward.1} parent=0 // pred_check
    _
  $region55: #{dacad_forward.1} parent=0 // pred_check_branch
    %2033 = sbr.rel (0) target = $region57
  $region56: #{dacad_forward.1} parent=0 // pred_region
    _
  $region57: #{dacad_forward.1} parent=0 // pred_fallthru
    _
  // Predicated region
  $region58: #{dacad_forward.1} parent=0 // pred_check
    _
  $region59: #{dacad_forward.1} parent=0 // pred_check_branch
    %2035 = sbr.rel (0) target = $region61
  $region60: #{dacad_forward.1} parent=0 // pred_region
    _
  $region61: #{dacad_forward.1} parent=0 // pred_fallthru
    _
  // Predicated region
  $region62: #{dacad_forward.1} parent=0 // pred_check
    _
  $region63: #{dacad_forward.1} parent=0 // pred_check_branch
    %2037 = sbr.rel (0) target = $region65
  $region64: #{dacad_forward.1} parent=0 // pred_region
    _
  $region65: #{dacad_forward.1} parent=0 // pred_fallthru
    _

</llo_original>
